<compile_context>
chip_gen: v5e
topology: v5e:2x2
jax: 0.10.0
libtpu: 0.0.40
codegen_flags: <defaults>
</compile_context>

<pallas_src>
import math
import jax
import jax.numpy as jnp
from jax.experimental import pallas as pl
from jax.experimental.pallas import tpu as pltpu

# ----- model config (small, synthetic BERT) -----
B, S, H = 2, 8, 128          # batch, sequence length, hidden size
NH, DH = 2, 64               # heads, head dim
FFN = 256                    # FFN intermediate size
VOCAB = 128                  # vocabulary size
N_LAYERS = 2                 # encoder layers
NEG_SLOPE = 0.2              # LeakyReLU slope
N_CLASSES = 20               # classifier output dim
HPAD = 128                   # per-head / classifier dims padded to full lane width
QKV_W = 3 * NH * HPAD        # fused, head-padded QKV width (768)
WO_IN = NH * HPAD            # merged Wo input width (256)


# ---------------- in-kernel helpers (f32) ----------------
def _layer_norm(x, gamma, beta, eps=1e-12):
    mu = jnp.mean(x, axis=-1, keepdims=True)
    var = jnp.mean((x - mu) ** 2, axis=-1, keepdims=True)
    return (x - mu) * jax.lax.rsqrt(var + eps) * gamma + beta


def _gelu(x):
    # TODO(synk): tanh approximation; torch nn.GELU defaults to exact erf form.
    c = math.sqrt(2.0 / math.pi)
    return 0.5 * x * (1.0 + jnp.tanh(c * (x + 0.044715 * x * x * x)))


def _leaky_relu(x):
    return jnp.where(x > 0, x, NEG_SLOPE * x)


# ---------------- single fused Pallas kernel ----------------
def fused_forward_kernel(ids_ref, am_ref, tok_ref, pos_ref, eg_ref, ebe_ref,
                         wqkv_ref, bqkv_ref, wo_ref, bo_ref,
                         g1_ref, be1_ref, w1_ref, b1_ref,
                         w2_ref, b2_ref, g2_ref, be2_ref,
                         hw1_ref, hb1_ref, hw2_ref, hb2_ref, hw3_ref, hb3_ref,
                         out_ref):
    """Embedding (one-hot MXU lookup) + LN + N_LAYERS encoder layers + MLP head."""
    scale = 1.0 / math.sqrt(DH)

    # ---- in-kernel token embedding: one-hot (B*S,VOCAB) @ (VOCAB,H) ----
    ids = ids_ref[...]                                               # (B*S, 1) int32
    vocab_iota = jax.lax.broadcasted_iota(jnp.int32, (B * S, VOCAB), 1)
    onehot = (vocab_iota == ids).astype(jnp.float32)                 # exact lookup
    x_emb = jnp.dot(onehot, tok_ref[...], preferred_element_type=jnp.float32)
    x_emb = x_emb + jnp.concatenate([pos_ref[...]] * B, axis=0)      # add positions (B*S, H)
    xf = _layer_norm(x_emb, eg_ref[...], ebe_ref[...])               # (B*S, H) f32

    # ---- in-kernel additive attention mask, shared by all layers/heads ----
    maskf = am_ref[...].astype(jnp.float32)                          # (B, S)
    mask_b = (maskf - 1.0) * 10000.0                                 # 0 keep / -1e4 masked
    mask3 = jnp.concatenate([mask_b.reshape(B, 1, S)] * NH, axis=0)  # (NH*B, 1, S), head-major

    def split_heads(mat, base):
        # mat: (B*S, QKV_W) f32 -> (NH*B, S, HPAD) bf16, lane-aligned 128-wide head blocks
        parts = [mat[:, (base + h) * HPAD:(base + h + 1) * HPAD].reshape(B, S, HPAD)
                 for h in range(NH)]
        return jnp.concatenate(parts, axis=0).astype(jnp.bfloat16)

    for l in range(N_LAYERS):                                        # static unroll (2 layers)
        # hoisted per-layer weight reads (bf16 matmul weights, f32 everything else)
        wqkv, bqkv = wqkv_ref[l], bqkv_ref[l]                        # (H, 768), (1, 768)
        wo, bo = wo_ref[l], bo_ref[l]                                # (256, H), (1, H)
        g1, be1 = g1_ref[l], be1_ref[l]
        w1, b1 = w1_ref[l], b1_ref[l]                                # (H, FFN), (1, FFN)
        w2, b2 = w2_ref[l], b2_ref[l]                                # (FFN, H), (1, H)
        g2, be2 = g2_ref[l], be2_ref[l]

        # fused, head-padded QKV projection: one (B*S,H)@(H,768) MXU push
        qkv = jnp.dot(xf.astype(jnp.bfloat16), wqkv,
                      preferred_element_type=jnp.float32) + bqkv     # (B*S, 768) f32

        # all heads stacked along the batch axis (lane-aligned slices, no XLU churn)
        q_hb = split_heads(qkv, 0)                                   # (NH*B, S, 128)
        k_hb = split_heads(qkv, NH)
        v_hb = split_heads(qkv, 2 * NH)

        # one batched score matmul + ONE softmax slab over all heads and batches
        s = jnp.einsum('bqd,bkd->bqk', q_hb, k_hb,
                       preferred_element_type=jnp.float32) * scale   # (NH*B, S, S) f32
        s = s + mask3
        s = s - jnp.max(s, axis=-1, keepdims=True)
        p = jnp.exp(s)
        p = p * pl.reciprocal(jnp.sum(p, axis=-1, keepdims=True), approx=True)

        ctx = jnp.einsum('bqk,bkd->bqd', p.astype(jnp.bfloat16), v_hb,
                         preferred_element_type=jnp.float32)          # (NH*B, S, 128) f32

        # merged output projection: lane-concat heads -> single K=256 dot
        ctx_cat = jnp.concatenate(
            [ctx[h * B:(h + 1) * B].reshape(B * S, HPAD) for h in range(NH)],
            axis=1)                                                   # (B*S, 256)
        attn = jnp.dot(ctx_cat.astype(jnp.bfloat16), wo,
                       preferred_element_type=jnp.float32) + bo       # (B*S, H)

        # post-LN + GELU FFN (wide (B*S, ·) matmuls)
        h1 = _layer_norm(xf + attn, g1, be1)                                      # (B*S, H)
        f = jnp.dot(h1.astype(jnp.bfloat16), w1,
                    preferred_element_type=jnp.float32) + b1                      # (B*S, FFN)
        f = _gelu(f)
        f = jnp.dot(f.astype(jnp.bfloat16), w2,
                    preferred_element_type=jnp.float32) + b2                      # (B*S, H)
        xf = _layer_norm(h1 + f, g2, be2)

    # classification head on CLS tokens (row 0 of each sequence), lane-padded weights
    cls = xf.reshape(B, S, H)[:, 0, :]                                            # (B, H)
    hh = jnp.dot(cls.astype(jnp.bfloat16), hw1_ref[...],
                 preferred_element_type=jnp.float32) + hb1_ref[...]               # (B, 128) [:64 live]
    hh = _leaky_relu(hh)
    # TODO(synk): nn.Dropout(0.3) treated as identity (eval-mode semantics).
    hh = jnp.dot(hh.astype(jnp.bfloat16), hw2_ref[...],
                 preferred_element_type=jnp.float32) + hb2_ref[...]               # (B, 128) [:32 live]
    hh = _leaky_relu(hh)
    logits = jnp.dot(hh.astype(jnp.bfloat16), hw3_ref[...],
                     preferred_element_type=jnp.float32) + hb3_ref[...]           # (B, 128) [:20 live]
    out_ref[...] = jax.nn.sigmoid(logits)                                          # padded lanes -> 0.5, sliced off


# ---------------- wrapper ----------------
def bert_finetuner_forward(input_ids, attention_mask, params):
    ep, sp, hp = params['emb'], params['stk'], params['head']
    # only trivial re-layout in XLA: gather, positions, mask math all happen in-kernel
    ids = input_ids.astype(jnp.int32).reshape(B * S, 1)
    am = attention_mask.astype(jnp.int32)

    args = (ids, am, ep['tok'], ep['pos'], ep['g'], ep['be'],
            sp['wqkv'], sp['bqkv'], sp['wo'], sp['bo'],
            sp['g1'], sp['be1'], sp['w1'], sp['b1'],
            sp['w2'], sp['b2'], sp['g2'], sp['be2'],
            hp['w1'], hp['b1'], hp['w2'], hp['b2'], hp['w3'], hp['b3'])

    out_padded = pl.pallas_call(
        fused_forward_kernel,
        out_shape=jax.ShapeDtypeStruct((B, HPAD), jnp.float32),
        in_specs=[pl.BlockSpec(memory_space=pltpu.MemorySpace.VMEM)] * len(args),
        out_specs=pl.BlockSpec(memory_space=pltpu.MemorySpace.VMEM),
    )(*args)
    return out_padded[:, :N_CLASSES]


# ---------------- deterministic parameter init ----------------
def make_params(key):
    def nrm(k, shape, scale=0.02):
        return (scale * jax.random.normal(k, shape)).astype(jnp.float32)

    def pad2(a, rows, cols):
        out = jnp.zeros((rows, cols), jnp.float32)
        return out.at[:a.shape[0], :a.shape[1]].set(a)

    def pad_head_cols(w):
        # (H, NH*DH) -> (H, NH*HPAD): each head's DH output columns land at a
        # 128-lane-aligned block; pad lanes stay exactly zero.
        blocks = []
        for h in range(NH):
            blk = jnp.zeros((H, HPAD), jnp.float32)
            blk = blk.at[:, :DH].set(w[:, h * DH:(h + 1) * DH])
            blocks.append(blk)
        return jnp.concatenate(blocks, axis=1)

    def pad_wo_rows(w):
        # (NH*DH, H) -> (NH*HPAD, H): rows for pad lanes are zero.
        out = jnp.zeros((WO_IN, H), jnp.float32)
        for h in range(NH):
            out = out.at[h * HPAD:h * HPAD + DH, :].set(w[h * DH:(h + 1) * DH, :])
        return out

    keys = iter(jax.random.split(key, 64))
    emb = dict(
        tok=nrm(next(keys), (VOCAB, H)),
        pos=nrm(next(keys), (S, H)),
        g=jnp.ones((1, H), jnp.float32),
        be=jnp.zeros((1, H), jnp.float32),
    )

    wqkv_l, wo_l, w1_l, w2_l = [], [], [], []
    for _ in range(N_LAYERS):
        wq = nrm(next(keys), (H, H))
        wk = nrm(next(keys), (H, H))
        wv = nrm(next(keys), (H, H))
        wqkv_l.append(jnp.concatenate(
            [pad_head_cols(wq), pad_head_cols(wk), pad_head_cols(wv)], axis=1))  # (H, 768)
        wo_l.append(pad_wo_rows(nrm(next(keys), (H, H))))                        # (256, H)
        w1_l.append(nrm(next(keys), (H, FFN)))
        w2_l.append(nrm(next(keys), (FFN, H)))

    stk = dict(
        wqkv=jnp.stack(wqkv_l).astype(jnp.bfloat16),
        bqkv=jnp.zeros((N_LAYERS, 1, QKV_W), jnp.float32),
        wo=jnp.stack(wo_l).astype(jnp.bfloat16),
        bo=jnp.zeros((N_LAYERS, 1, H), jnp.float32),
        g1=jnp.ones((N_LAYERS, 1, H), jnp.float32),
        be1=jnp.zeros((N_LAYERS, 1, H), jnp.float32),
        w1=jnp.stack(w1_l).astype(jnp.bfloat16),
        b1=jnp.zeros((N_LAYERS, 1, FFN), jnp.float32),
        w2=jnp.stack(w2_l).astype(jnp.bfloat16),
        b2=jnp.zeros((N_LAYERS, 1, H), jnp.float32),
        g2=jnp.ones((N_LAYERS, 1, H), jnp.float32),
        be2=jnp.zeros((N_LAYERS, 1, H), jnp.float32),
    )

    # head weights zero-padded to 128 output lanes (LeakyReLU(0)=0 keeps padded lanes zero)
    hw1 = nrm(next(keys), (H, 64), 0.1)
    hw2 = nrm(next(keys), (64, 32), 0.1)
    hw3 = nrm(next(keys), (32, N_CLASSES), 0.1)
    head = dict(
        w1=pad2(hw1, H, HPAD).astype(jnp.bfloat16),    b1=jnp.zeros((1, HPAD), jnp.float32),
        w2=pad2(hw2, HPAD, HPAD).astype(jnp.bfloat16), b2=jnp.zeros((1, HPAD), jnp.float32),
        w3=pad2(hw3, HPAD, HPAD).astype(jnp.bfloat16), b3=jnp.zeros((1, HPAD), jnp.float32),
    )
    return dict(emb=emb, stk=stk, head=head)


if __name__ == "__main__":
    root = jax.random.PRNGKey(0)
    k_params, k_ids = jax.random.split(root)
    params = make_params(k_params)

    input_ids = jax.random.randint(k_ids, (B, S), 0, VOCAB, dtype=jnp.int32)
    attention_mask = jnp.array([[1, 1, 1, 1, 1, 1, 1, 1],
                                [1, 1, 1, 1, 1, 0, 0, 0]], dtype=jnp.int32)

    preds = jax.jit(bert_finetuner_forward)(input_ids, attention_mask, params)
    preds = jax.block_until_ready(preds)

    assert preds.shape == (B, N_CLASSES)
    assert bool(jnp.all(jnp.isfinite(preds)))
    assert bool(jnp.all((preds >= 0.0) & (preds <= 1.0)))
    print("KERNEL_OK")
</pallas_src>

<mosaic_0001>
module attributes {stable_mosaic.version = 11 : i64} {
  func.func @fused_forward_kernel(%arg0: memref<16x1xi32, #tpu.memory_space<vmem>>, %arg1: memref<2x8xi32, #tpu.memory_space<vmem>>, %arg2: memref<128x128xf32, #tpu.memory_space<vmem>>, %arg3: memref<8x128xf32, #tpu.memory_space<vmem>>, %arg4: memref<1x128xf32, #tpu.memory_space<vmem>>, %arg5: memref<1x128xf32, #tpu.memory_space<vmem>>, %arg6: memref<2x128x768xbf16, #tpu.memory_space<vmem>>, %arg7: memref<2x1x768xf32, #tpu.memory_space<vmem>>, %arg8: memref<2x256x128xbf16, #tpu.memory_space<vmem>>, %arg9: memref<2x1x128xf32, #tpu.memory_space<vmem>>, %arg10: memref<2x1x128xf32, #tpu.memory_space<vmem>>, %arg11: memref<2x1x128xf32, #tpu.memory_space<vmem>>, %arg12: memref<2x128x256xbf16, #tpu.memory_space<vmem>>, %arg13: memref<2x1x256xf32, #tpu.memory_space<vmem>>, %arg14: memref<2x256x128xbf16, #tpu.memory_space<vmem>>, %arg15: memref<2x1x128xf32, #tpu.memory_space<vmem>>, %arg16: memref<2x1x128xf32, #tpu.memory_space<vmem>>, %arg17: memref<2x1x128xf32, #tpu.memory_space<vmem>>, %arg18: memref<128x128xbf16, #tpu.memory_space<vmem>>, %arg19: memref<1x128xf32, #tpu.memory_space<vmem>>, %arg20: memref<128x128xbf16, #tpu.memory_space<vmem>>, %arg21: memref<1x128xf32, #tpu.memory_space<vmem>>, %arg22: memref<128x128xbf16, #tpu.memory_space<vmem>>, %arg23: memref<1x128xf32, #tpu.memory_space<vmem>>, %arg24: memref<2x128xf32, #tpu.memory_space<vmem>>) attributes {dimension_semantics = [], scalar_prefetch = 0 : i64, scratch_operands = 0 : i64, tpu.core_type = #tpu.core_type<tc>} {
    %c0 = arith.constant 0 : index
    %c0_0 = arith.constant 0 : index
    %0 = vector.load %arg0[%c0, %c0_0] : memref<16x1xi32, #tpu.memory_space<vmem>>, vector<16x1xi32>
    %1 = tpu.iota {dimensions = array<i32: 1>} : vector<16x128xi32>
    %2 = vector.broadcast %0 : vector<16x1xi32> to vector<16x128xi32>
    %3 = arith.cmpi eq, %1, %2 : vector<16x128xi32>
    %4 = arith.extui %3 : vector<16x128xi1> to vector<16x128xi32>
    %5 = arith.sitofp %4 : vector<16x128xi32> to vector<16x128xf32>
    %c0_1 = arith.constant 0 : index
    %c0_2 = arith.constant 0 : index
    %6 = vector.load %arg2[%c0_1, %c0_2] : memref<128x128xf32, #tpu.memory_space<vmem>>, vector<128x128xf32>
    %cst = arith.constant dense<0.000000e+00> : vector<16x128xf32>
    %7 = tpu.matmul %5, %6, %cst {dimension_numbers = #tpu.dot_dimension_numbers<[1], [0], [0], [1], [0, 0, 1, 1], [], []>} : vector<16x128xf32>, vector<128x128xf32>, vector<16x128xf32> -> vector<16x128xf32>
    %c0_3 = arith.constant 0 : index
    %c0_4 = arith.constant 0 : index
    %8 = vector.load %arg3[%c0_3, %c0_4] : memref<8x128xf32, #tpu.memory_space<vmem>>, vector<8x128xf32>
    %9 = tpu.concatenate %8, %8 in 0 : vector<8x128xf32>, vector<8x128xf32> -> vector<16x128xf32>
    %10 = arith.addf %7, %9 : vector<16x128xf32>
    %c0_5 = arith.constant 0 : index
    %c0_6 = arith.constant 0 : index
    %11 = vector.load %arg4[%c0_5, %c0_6] : memref<1x128xf32, #tpu.memory_space<vmem>>, vector<1x128xf32>
    %c0_7 = arith.constant 0 : index
    %c0_8 = arith.constant 0 : index
    %12 = vector.load %arg5[%c0_7, %c0_8] : memref<1x128xf32, #tpu.memory_space<vmem>>, vector<1x128xf32>
    %cst_9 = arith.constant dense<0.000000e+00> : vector<16xf32>
    %13 = vector.multi_reduction <add>, %10, %cst_9 [1] : vector<16x128xf32> to vector<16xf32>
    %14 = vector.shape_cast %13 : vector<16xf32> to vector<16x1xf32>
    %cst_10 = arith.constant 1.280000e+02 : f32
    %15 = vector.broadcast %cst_10 : f32 to vector<16x1xf32>
    %16 = arith.divf %14, %15 : vector<16x1xf32>
    %17 = vector.broadcast %16 : vector<16x1xf32> to vector<16x128xf32>
    %18 = arith.subf %10, %17 : vector<16x128xf32>
    %19 = arith.mulf %18, %18 : vector<16x128xf32>
    %cst_11 = arith.constant dense<0.000000e+00> : vector<16xf32>
    %20 = vector.multi_reduction <add>, %19, %cst_11 [1] : vector<16x128xf32> to vector<16xf32>
    %21 = vector.shape_cast %20 : vector<16xf32> to vector<16x1xf32>
    %cst_12 = arith.constant 1.280000e+02 : f32
    %22 = vector.broadcast %cst_12 : f32 to vector<16x1xf32>
    %23 = arith.divf %21, %22 : vector<16x1xf32>
    %24 = vector.broadcast %16 : vector<16x1xf32> to vector<16x128xf32>
    %25 = arith.subf %10, %24 : vector<16x128xf32>
    %cst_13 = arith.constant 9.99999996E-13 : f32
    %26 = vector.broadcast %cst_13 : f32 to vector<16x1xf32>
    %27 = arith.addf %23, %26 : vector<16x1xf32>
    %28 = math.rsqrt %27 : vector<16x1xf32>
    %29 = vector.broadcast %28 : vector<16x1xf32> to vector<16x128xf32>
    %30 = arith.mulf %25, %29 : vector<16x128xf32>
    %31 = vector.broadcast %11 : vector<1x128xf32> to vector<16x128xf32>
    %32 = arith.mulf %30, %31 : vector<16x128xf32>
    %33 = vector.broadcast %12 : vector<1x128xf32> to vector<16x128xf32>
    %34 = arith.addf %32, %33 : vector<16x128xf32>
    %c0_14 = arith.constant 0 : index
    %c0_15 = arith.constant 0 : index
    %35 = vector.load %arg1[%c0_14, %c0_15] : memref<2x8xi32, #tpu.memory_space<vmem>>, vector<2x8xi32>
    %36 = arith.sitofp %35 : vector<2x8xi32> to vector<2x8xf32>
    %cst_16 = arith.constant 1.000000e+00 : f32
    %37 = vector.broadcast %cst_16 : f32 to vector<2x8xf32>
    %38 = arith.subf %36, %37 : vector<2x8xf32>
    %cst_17 = arith.constant 1.000000e+04 : f32
    %39 = vector.broadcast %cst_17 : f32 to vector<2x8xf32>
    %40 = arith.mulf %38, %39 : vector<2x8xf32>
    %41 = vector.shape_cast %40 : vector<2x8xf32> to vector<2x1x8xf32>
    %42 = tpu.concatenate %41, %41 in 0 : vector<2x1x8xf32>, vector<2x1x8xf32> -> vector<4x1x8xf32>
    %c0_18 = arith.constant 0 : index
    %c0_19 = arith.constant 0 : index
    %c0_20 = arith.constant 0 : index
    %43 = vector.load %arg6[%c0_18, %c0_19, %c0_20] : memref<2x128x768xbf16, #tpu.memory_space<vmem>>, vector<1x128x768xbf16>
    %44 = vector.shape_cast %43 : vector<1x128x768xbf16> to vector<128x768xbf16>
    %c0_21 = arith.constant 0 : index
    %c0_22 = arith.constant 0 : index
    %c0_23 = arith.constant 0 : index
    %45 = vector.load %arg7[%c0_21, %c0_22, %c0_23] : memref<2x1x768xf32, #tpu.memory_space<vmem>>, vector<1x1x768xf32>
    %46 = vector.shape_cast %45 : vector<1x1x768xf32> to vector<1x768xf32>
    %c0_24 = arith.constant 0 : index
    %c0_25 = arith.constant 0 : index
    %c0_26 = arith.constant 0 : index
    %47 = vector.load %arg8[%c0_24, %c0_25, %c0_26] : memref<2x256x128xbf16, #tpu.memory_space<vmem>>, vector<1x256x128xbf16>
    %48 = vector.shape_cast %47 : vector<1x256x128xbf16> to vector<256x128xbf16>
    %c0_27 = arith.constant 0 : index
    %c0_28 = arith.constant 0 : index
    %c0_29 = arith.constant 0 : index
    %49 = vector.load %arg9[%c0_27, %c0_28, %c0_29] : memref<2x1x128xf32, #tpu.memory_space<vmem>>, vector<1x1x128xf32>
    %50 = vector.shape_cast %49 : vector<1x1x128xf32> to vector<1x128xf32>
    %c0_30 = arith.constant 0 : index
    %c0_31 = arith.constant 0 : index
    %c0_32 = arith.constant 0 : index
    %51 = vector.load %arg10[%c0_30, %c0_31, %c0_32] : memref<2x1x128xf32, #tpu.memory_space<vmem>>, vector<1x1x128xf32>
    %52 = vector.shape_cast %51 : vector<1x1x128xf32> to vector<1x128xf32>
    %c0_33 = arith.constant 0 : index
    %c0_34 = arith.constant 0 : index
    %c0_35 = arith.constant 0 : index
    %53 = vector.load %arg11[%c0_33, %c0_34, %c0_35] : memref<2x1x128xf32, #tpu.memory_space<vmem>>, vector<1x1x128xf32>
    %54 = vector.shape_cast %53 : vector<1x1x128xf32> to vector<1x128xf32>
    %c0_36 = arith.constant 0 : index
    %c0_37 = arith.constant 0 : index
    %c0_38 = arith.constant 0 : index
    %55 = vector.load %arg12[%c0_36, %c0_37, %c0_38] : memref<2x128x256xbf16, #tpu.memory_space<vmem>>, vector<1x128x256xbf16>
    %56 = vector.shape_cast %55 : vector<1x128x256xbf16> to vector<128x256xbf16>
    %c0_39 = arith.constant 0 : index
    %c0_40 = arith.constant 0 : index
    %c0_41 = arith.constant 0 : index
    %57 = vector.load %arg13[%c0_39, %c0_40, %c0_41] : memref<2x1x256xf32, #tpu.memory_space<vmem>>, vector<1x1x256xf32>
    %58 = vector.shape_cast %57 : vector<1x1x256xf32> to vector<1x256xf32>
    %c0_42 = arith.constant 0 : index
    %c0_43 = arith.constant 0 : index
    %c0_44 = arith.constant 0 : index
    %59 = vector.load %arg14[%c0_42, %c0_43, %c0_44] : memref<2x256x128xbf16, #tpu.memory_space<vmem>>, vector<1x256x128xbf16>
    %60 = vector.shape_cast %59 : vector<1x256x128xbf16> to vector<256x128xbf16>
    %c0_45 = arith.constant 0 : index
    %c0_46 = arith.constant 0 : index
    %c0_47 = arith.constant 0 : index
    %61 = vector.load %arg15[%c0_45, %c0_46, %c0_47] : memref<2x1x128xf32, #tpu.memory_space<vmem>>, vector<1x1x128xf32>
    %62 = vector.shape_cast %61 : vector<1x1x128xf32> to vector<1x128xf32>
    %c0_48 = arith.constant 0 : index
    %c0_49 = arith.constant 0 : index
    %c0_50 = arith.constant 0 : index
    %63 = vector.load %arg16[%c0_48, %c0_49, %c0_50] : memref<2x1x128xf32, #tpu.memory_space<vmem>>, vector<1x1x128xf32>
    %64 = vector.shape_cast %63 : vector<1x1x128xf32> to vector<1x128xf32>
    %c0_51 = arith.constant 0 : index
    %c0_52 = arith.constant 0 : index
    %c0_53 = arith.constant 0 : index
    %65 = vector.load %arg17[%c0_51, %c0_52, %c0_53] : memref<2x1x128xf32, #tpu.memory_space<vmem>>, vector<1x1x128xf32>
    %66 = vector.shape_cast %65 : vector<1x1x128xf32> to vector<1x128xf32>
    %67 = arith.truncf %34 : vector<16x128xf32> to vector<16x128xbf16>
    %cst_54 = arith.constant dense<0.000000e+00> : vector<16x768xf32>
    %68 = tpu.matmul %67, %44, %cst_54 {dimension_numbers = #tpu.dot_dimension_numbers<[1], [0], [0], [1], [0, 0, 1, 1], [], []>} : vector<16x128xbf16>, vector<128x768xbf16>, vector<16x768xf32> -> vector<16x768xf32>
    %69 = vector.broadcast %46 : vector<1x768xf32> to vector<16x768xf32>
    %70 = arith.addf %68, %69 : vector<16x768xf32>
    %71 = vector.extract_strided_slice %70 {offsets = [0, 0], sizes = [16, 128], strides = [1, 1]} : vector<16x768xf32> to vector<16x128xf32>
    %72 = vector.shape_cast %71 : vector<16x128xf32> to vector<2x8x128xf32>
    %73 = vector.extract_strided_slice %70 {offsets = [0, 128], sizes = [16, 128], strides = [1, 1]} : vector<16x768xf32> to vector<16x128xf32>
    %74 = vector.shape_cast %73 : vector<16x128xf32> to vector<2x8x128xf32>
    %75 = tpu.concatenate %72, %74 in 0 : vector<2x8x128xf32>, vector<2x8x128xf32> -> vector<4x8x128xf32>
    %76 = arith.truncf %75 : vector<4x8x128xf32> to vector<4x8x128xbf16>
    %77 = vector.extract_strided_slice %70 {offsets = [0, 256], sizes = [16, 128], strides = [1, 1]} : vector<16x768xf32> to vector<16x128xf32>
    %78 = vector.shape_cast %77 : vector<16x128xf32> to vector<2x8x128xf32>
    %79 = vector.extract_strided_slice %70 {offsets = [0, 384], sizes = [16, 128], strides = [1, 1]} : vector<16x768xf32> to vector<16x128xf32>
    %80 = vector.shape_cast %79 : vector<16x128xf32> to vector<2x8x128xf32>
    %81 = tpu.concatenate %78, %80 in 0 : vector<2x8x128xf32>, vector<2x8x128xf32> -> vector<4x8x128xf32>
    %82 = arith.truncf %81 : vector<4x8x128xf32> to vector<4x8x128xbf16>
    %83 = vector.extract_strided_slice %70 {offsets = [0, 512], sizes = [16, 128], strides = [1, 1]} : vector<16x768xf32> to vector<16x128xf32>
    %84 = vector.shape_cast %83 : vector<16x128xf32> to vector<2x8x128xf32>
    %85 = vector.extract_strided_slice %70 {offsets = [0, 640], sizes = [16, 128], strides = [1, 1]} : vector<16x768xf32> to vector<16x128xf32>
    %86 = vector.shape_cast %85 : vector<16x128xf32> to vector<2x8x128xf32>
    %87 = tpu.concatenate %84, %86 in 0 : vector<2x8x128xf32>, vector<2x8x128xf32> -> vector<4x8x128xf32>
    %88 = arith.truncf %87 : vector<4x8x128xf32> to vector<4x8x128xbf16>
    "tpu.trace_start"() <{level = 10 : i32, message = "bqd,bkd->bqk"}> : () -> ()
    %cst_55 = arith.constant dense<0.000000e+00> : vector<4x8x8xf32>
    %89 = tpu.matmul %76, %82, %cst_55 {dimension_numbers = #tpu.dot_dimension_numbers<[2], [2], [1], [1], [0, 0, 0, 1, 1, 1], [0], [0]>} : vector<4x8x128xbf16>, vector<4x8x128xbf16>, vector<4x8x8xf32> -> vector<4x8x8xf32>
    "tpu.trace_stop"() : () -> ()
    %cst_56 = arith.constant 1.250000e-01 : f32
    %90 = vector.broadcast %cst_56 : f32 to vector<4x8x8xf32>
    %91 = arith.mulf %89, %90 : vector<4x8x8xf32>
    %92 = vector.broadcast %42 : vector<4x1x8xf32> to vector<4x8x8xf32>
    %93 = arith.addf %91, %92 : vector<4x8x8xf32>
    %cst_57 = arith.constant dense<0xFF800000> : vector<4x8xf32>
    %94 = vector.multi_reduction <maximumf>, %93, %cst_57 [2] : vector<4x8x8xf32> to vector<4x8xf32>
    %95 = vector.shape_cast %94 : vector<4x8xf32> to vector<4x8x1xf32>
    %96 = vector.broadcast %95 : vector<4x8x1xf32> to vector<4x8x8xf32>
    %97 = arith.subf %93, %96 : vector<4x8x8xf32>
    %98 = math.exp %97 : vector<4x8x8xf32>
    %cst_58 = arith.constant dense<0.000000e+00> : vector<4x8xf32>
    %99 = vector.multi_reduction <add>, %98, %cst_58 [2] : vector<4x8x8xf32> to vector<4x8xf32>
    %100 = vector.shape_cast %99 : vector<4x8xf32> to vector<4x8x1xf32>
    %101 = tpu.reciprocal %100 {approx = true} : vector<4x8x1xf32> -> vector<4x8x1xf32>
    %102 = vector.broadcast %101 : vector<4x8x1xf32> to vector<4x8x8xf32>
    %103 = arith.mulf %98, %102 : vector<4x8x8xf32>
    %104 = arith.truncf %103 : vector<4x8x8xf32> to vector<4x8x8xbf16>
    "tpu.trace_start"() <{level = 10 : i32, message = "bqk,bkd->bqd"}> : () -> ()
    %cst_59 = arith.constant dense<0.000000e+00> : vector<4x8x128xf32>
    %105 = tpu.matmul %104, %88, %cst_59 {dimension_numbers = #tpu.dot_dimension_numbers<[2], [1], [1], [2], [0, 0, 0, 1, 1, 2], [0], [0]>} : vector<4x8x8xbf16>, vector<4x8x128xbf16>, vector<4x8x128xf32> -> vector<4x8x128xf32>
    "tpu.trace_stop"() : () -> ()
    %106 = vector.extract_strided_slice %105 {offsets = [0, 0, 0], sizes = [2, 8, 128], strides = [1, 1, 1]} : vector<4x8x128xf32> to vector<2x8x128xf32>
    %107 = vector.shape_cast %106 : vector<2x8x128xf32> to vector<16x128xf32>
    %108 = vector.extract_strided_slice %105 {offsets = [2, 0, 0], sizes = [2, 8, 128], strides = [1, 1, 1]} : vector<4x8x128xf32> to vector<2x8x128xf32>
    %109 = vector.shape_cast %108 : vector<2x8x128xf32> to vector<16x128xf32>
    %110 = tpu.concatenate %107, %109 in 1 : vector<16x128xf32>, vector<16x128xf32> -> vector<16x256xf32>
    %111 = arith.truncf %110 : vector<16x256xf32> to vector<16x256xbf16>
    %cst_60 = arith.constant dense<0.000000e+00> : vector<16x128xf32>
    %112 = tpu.matmul %111, %48, %cst_60 {dimension_numbers = #tpu.dot_dimension_numbers<[1], [0], [0], [1], [0, 0, 1, 1], [], []>} : vector<16x256xbf16>, vector<256x128xbf16>, vector<16x128xf32> -> vector<16x128xf32>
    %113 = vector.broadcast %50 : vector<1x128xf32> to vector<16x128xf32>
    %114 = arith.addf %112, %113 : vector<16x128xf32>
    %115 = arith.addf %34, %114 : vector<16x128xf32>
    %cst_61 = arith.constant dense<0.000000e+00> : vector<16xf32>
    %116 = vector.multi_reduction <add>, %115, %cst_61 [1] : vector<16x128xf32> to vector<16xf32>
    %117 = vector.shape_cast %116 : vector<16xf32> to vector<16x1xf32>
    %cst_62 = arith.constant 1.280000e+02 : f32
    %118 = vector.broadcast %cst_62 : f32 to vector<16x1xf32>
    %119 = arith.divf %117, %118 : vector<16x1xf32>
    %120 = vector.broadcast %119 : vector<16x1xf32> to vector<16x128xf32>
    %121 = arith.subf %115, %120 : vector<16x128xf32>
    %122 = arith.mulf %121, %121 : vector<16x128xf32>
    %cst_63 = arith.constant dense<0.000000e+00> : vector<16xf32>
    %123 = vector.multi_reduction <add>, %122, %cst_63 [1] : vector<16x128xf32> to vector<16xf32>
    %124 = vector.shape_cast %123 : vector<16xf32> to vector<16x1xf32>
    %cst_64 = arith.constant 1.280000e+02 : f32
    %125 = vector.broadcast %cst_64 : f32 to vector<16x1xf32>
    %126 = arith.divf %124, %125 : vector<16x1xf32>
    %127 = vector.broadcast %119 : vector<16x1xf32> to vector<16x128xf32>
    %128 = arith.subf %115, %127 : vector<16x128xf32>
    %cst_65 = arith.constant 9.99999996E-13 : f32
    %129 = vector.broadcast %cst_65 : f32 to vector<16x1xf32>
    %130 = arith.addf %126, %129 : vector<16x1xf32>
    %131 = math.rsqrt %130 : vector<16x1xf32>
    %132 = vector.broadcast %131 : vector<16x1xf32> to vector<16x128xf32>
    %133 = arith.mulf %128, %132 : vector<16x128xf32>
    %134 = vector.broadcast %52 : vector<1x128xf32> to vector<16x128xf32>
    %135 = arith.mulf %133, %134 : vector<16x128xf32>
    %136 = vector.broadcast %54 : vector<1x128xf32> to vector<16x128xf32>
    %137 = arith.addf %135, %136 : vector<16x128xf32>
    %138 = arith.truncf %137 : vector<16x128xf32> to vector<16x128xbf16>
    %cst_66 = arith.constant dense<0.000000e+00> : vector<16x256xf32>
    %139 = tpu.matmul %138, %56, %cst_66 {dimension_numbers = #tpu.dot_dimension_numbers<[1], [0], [0], [1], [0, 0, 1, 1], [], []>} : vector<16x128xbf16>, vector<128x256xbf16>, vector<16x256xf32> -> vector<16x256xf32>
    %140 = vector.broadcast %58 : vector<1x256xf32> to vector<16x256xf32>
    %141 = arith.addf %139, %140 : vector<16x256xf32>
    %cst_67 = arith.constant 5.000000e-01 : f32
    %142 = vector.broadcast %cst_67 : f32 to vector<16x256xf32>
    %143 = arith.mulf %142, %141 : vector<16x256xf32>
    %cst_68 = arith.constant 4.471500e-02 : f32
    %144 = vector.broadcast %cst_68 : f32 to vector<16x256xf32>
    %145 = arith.mulf %144, %141 : vector<16x256xf32>
    %146 = arith.mulf %145, %141 : vector<16x256xf32>
    %147 = arith.mulf %146, %141 : vector<16x256xf32>
    %148 = arith.addf %141, %147 : vector<16x256xf32>
    %cst_69 = arith.constant 0.797884583 : f32
    %149 = vector.broadcast %cst_69 : f32 to vector<16x256xf32>
    %150 = arith.mulf %149, %148 : vector<16x256xf32>
    %151 = math.tanh %150 : vector<16x256xf32>
    %cst_70 = arith.constant 1.000000e+00 : f32
    %152 = vector.broadcast %cst_70 : f32 to vector<16x256xf32>
    %153 = arith.addf %152, %151 : vector<16x256xf32>
    %154 = arith.mulf %143, %153 : vector<16x256xf32>
    %155 = arith.truncf %154 : vector<16x256xf32> to vector<16x256xbf16>
    %cst_71 = arith.constant dense<0.000000e+00> : vector<16x128xf32>
    %156 = tpu.matmul %155, %60, %cst_71 {dimension_numbers = #tpu.dot_dimension_numbers<[1], [0], [0], [1], [0, 0, 1, 1], [], []>} : vector<16x256xbf16>, vector<256x128xbf16>, vector<16x128xf32> -> vector<16x128xf32>
    %157 = vector.broadcast %62 : vector<1x128xf32> to vector<16x128xf32>
    %158 = arith.addf %156, %157 : vector<16x128xf32>
    %159 = arith.addf %137, %158 : vector<16x128xf32>
    %cst_72 = arith.constant dense<0.000000e+00> : vector<16xf32>
    %160 = vector.multi_reduction <add>, %159, %cst_72 [1] : vector<16x128xf32> to vector<16xf32>
    %161 = vector.shape_cast %160 : vector<16xf32> to vector<16x1xf32>
    %cst_73 = arith.constant 1.280000e+02 : f32
    %162 = vector.broadcast %cst_73 : f32 to vector<16x1xf32>
    %163 = arith.divf %161, %162 : vector<16x1xf32>
    %164 = vector.broadcast %163 : vector<16x1xf32> to vector<16x128xf32>
    %165 = arith.subf %159, %164 : vector<16x128xf32>
    %166 = arith.mulf %165, %165 : vector<16x128xf32>
    %cst_74 = arith.constant dense<0.000000e+00> : vector<16xf32>
    %167 = vector.multi_reduction <add>, %166, %cst_74 [1] : vector<16x128xf32> to vector<16xf32>
    %168 = vector.shape_cast %167 : vector<16xf32> to vector<16x1xf32>
    %cst_75 = arith.constant 1.280000e+02 : f32
    %169 = vector.broadcast %cst_75 : f32 to vector<16x1xf32>
    %170 = arith.divf %168, %169 : vector<16x1xf32>
    %171 = vector.broadcast %163 : vector<16x1xf32> to vector<16x128xf32>
    %172 = arith.subf %159, %171 : vector<16x128xf32>
    %cst_76 = arith.constant 9.99999996E-13 : f32
    %173 = vector.broadcast %cst_76 : f32 to vector<16x1xf32>
    %174 = arith.addf %170, %173 : vector<16x1xf32>
    %175 = math.rsqrt %174 : vector<16x1xf32>
    %176 = vector.broadcast %175 : vector<16x1xf32> to vector<16x128xf32>
    %177 = arith.mulf %172, %176 : vector<16x128xf32>
    %178 = vector.broadcast %64 : vector<1x128xf32> to vector<16x128xf32>
    %179 = arith.mulf %177, %178 : vector<16x128xf32>
    %180 = vector.broadcast %66 : vector<1x128xf32> to vector<16x128xf32>
    %181 = arith.addf %179, %180 : vector<16x128xf32>
    %c1 = arith.constant 1 : index
    %c0_77 = arith.constant 0 : index
    %c0_78 = arith.constant 0 : index
    %182 = vector.load %arg6[%c1, %c0_77, %c0_78] : memref<2x128x768xbf16, #tpu.memory_space<vmem>>, vector<1x128x768xbf16>
    %183 = vector.shape_cast %182 : vector<1x128x768xbf16> to vector<128x768xbf16>
    %c1_79 = arith.constant 1 : index
    %c0_80 = arith.constant 0 : index
    %c0_81 = arith.constant 0 : index
    %184 = vector.load %arg7[%c1_79, %c0_80, %c0_81] : memref<2x1x768xf32, #tpu.memory_space<vmem>>, vector<1x1x768xf32>
    %185 = vector.shape_cast %184 : vector<1x1x768xf32> to vector<1x768xf32>
    %c1_82 = arith.constant 1 : index
    %c0_83 = arith.constant 0 : index
    %c0_84 = arith.constant 0 : index
    %186 = vector.load %arg8[%c1_82, %c0_83, %c0_84] : memref<2x256x128xbf16, #tpu.memory_space<vmem>>, vector<1x256x128xbf16>
    %187 = vector.shape_cast %186 : vector<1x256x128xbf16> to vector<256x128xbf16>
    %c1_85 = arith.constant 1 : index
    %c0_86 = arith.constant 0 : index
    %c0_87 = arith.constant 0 : index
    %188 = vector.load %arg9[%c1_85, %c0_86, %c0_87] : memref<2x1x128xf32, #tpu.memory_space<vmem>>, vector<1x1x128xf32>
    %189 = vector.shape_cast %188 : vector<1x1x128xf32> to vector<1x128xf32>
    %c1_88 = arith.constant 1 : index
    %c0_89 = arith.constant 0 : index
    %c0_90 = arith.constant 0 : index
    %190 = vector.load %arg10[%c1_88, %c0_89, %c0_90] : memref<2x1x128xf32, #tpu.memory_space<vmem>>, vector<1x1x128xf32>
    %191 = vector.shape_cast %190 : vector<1x1x128xf32> to vector<1x128xf32>
    %c1_91 = arith.constant 1 : index
    %c0_92 = arith.constant 0 : index
    %c0_93 = arith.constant 0 : index
    %192 = vector.load %arg11[%c1_91, %c0_92, %c0_93] : memref<2x1x128xf32, #tpu.memory_space<vmem>>, vector<1x1x128xf32>
    %193 = vector.shape_cast %192 : vector<1x1x128xf32> to vector<1x128xf32>
    %c1_94 = arith.constant 1 : index
    %c0_95 = arith.constant 0 : index
    %c0_96 = arith.constant 0 : index
    %194 = vector.load %arg12[%c1_94, %c0_95, %c0_96] : memref<2x128x256xbf16, #tpu.memory_space<vmem>>, vector<1x128x256xbf16>
    %195 = vector.shape_cast %194 : vector<1x128x256xbf16> to vector<128x256xbf16>
    %c1_97 = arith.constant 1 : index
    %c0_98 = arith.constant 0 : index
    %c0_99 = arith.constant 0 : index
    %196 = vector.load %arg13[%c1_97, %c0_98, %c0_99] : memref<2x1x256xf32, #tpu.memory_space<vmem>>, vector<1x1x256xf32>
    %197 = vector.shape_cast %196 : vector<1x1x256xf32> to vector<1x256xf32>
    %c1_100 = arith.constant 1 : index
    %c0_101 = arith.constant 0 : index
    %c0_102 = arith.constant 0 : index
    %198 = vector.load %arg14[%c1_100, %c0_101, %c0_102] : memref<2x256x128xbf16, #tpu.memory_space<vmem>>, vector<1x256x128xbf16>
    %199 = vector.shape_cast %198 : vector<1x256x128xbf16> to vector<256x128xbf16>
    %c1_103 = arith.constant 1 : index
    %c0_104 = arith.constant 0 : index
    %c0_105 = arith.constant 0 : index
    %200 = vector.load %arg15[%c1_103, %c0_104, %c0_105] : memref<2x1x128xf32, #tpu.memory_space<vmem>>, vector<1x1x128xf32>
    %201 = vector.shape_cast %200 : vector<1x1x128xf32> to vector<1x128xf32>
    %c1_106 = arith.constant 1 : index
    %c0_107 = arith.constant 0 : index
    %c0_108 = arith.constant 0 : index
    %202 = vector.load %arg16[%c1_106, %c0_107, %c0_108] : memref<2x1x128xf32, #tpu.memory_space<vmem>>, vector<1x1x128xf32>
    %203 = vector.shape_cast %202 : vector<1x1x128xf32> to vector<1x128xf32>
    %c1_109 = arith.constant 1 : index
    %c0_110 = arith.constant 0 : index
    %c0_111 = arith.constant 0 : index
    %204 = vector.load %arg17[%c1_109, %c0_110, %c0_111] : memref<2x1x128xf32, #tpu.memory_space<vmem>>, vector<1x1x128xf32>
    %205 = vector.shape_cast %204 : vector<1x1x128xf32> to vector<1x128xf32>
    %206 = arith.truncf %181 : vector<16x128xf32> to vector<16x128xbf16>
    %cst_112 = arith.constant dense<0.000000e+00> : vector<16x768xf32>
    %207 = tpu.matmul %206, %183, %cst_112 {dimension_numbers = #tpu.dot_dimension_numbers<[1], [0], [0], [1], [0, 0, 1, 1], [], []>} : vector<16x128xbf16>, vector<128x768xbf16>, vector<16x768xf32> -> vector<16x768xf32>
    %208 = vector.broadcast %185 : vector<1x768xf32> to vector<16x768xf32>
    %209 = arith.addf %207, %208 : vector<16x768xf32>
    %210 = vector.extract_strided_slice %209 {offsets = [0, 0], sizes = [16, 128], strides = [1, 1]} : vector<16x768xf32> to vector<16x128xf32>
    %211 = vector.shape_cast %210 : vector<16x128xf32> to vector<2x8x128xf32>
    %212 = vector.extract_strided_slice %209 {offsets = [0, 128], sizes = [16, 128], strides = [1, 1]} : vector<16x768xf32> to vector<16x128xf32>
    %213 = vector.shape_cast %212 : vector<16x128xf32> to vector<2x8x128xf32>
    %214 = tpu.concatenate %211, %213 in 0 : vector<2x8x128xf32>, vector<2x8x128xf32> -> vector<4x8x128xf32>
    %215 = arith.truncf %214 : vector<4x8x128xf32> to vector<4x8x128xbf16>
    %216 = vector.extract_strided_slice %209 {offsets = [0, 256], sizes = [16, 128], strides = [1, 1]} : vector<16x768xf32> to vector<16x128xf32>
    %217 = vector.shape_cast %216 : vector<16x128xf32> to vector<2x8x128xf32>
    %218 = vector.extract_strided_slice %209 {offsets = [0, 384], sizes = [16, 128], strides = [1, 1]} : vector<16x768xf32> to vector<16x128xf32>
    %219 = vector.shape_cast %218 : vector<16x128xf32> to vector<2x8x128xf32>
    %220 = tpu.concatenate %217, %219 in 0 : vector<2x8x128xf32>, vector<2x8x128xf32> -> vector<4x8x128xf32>
    %221 = arith.truncf %220 : vector<4x8x128xf32> to vector<4x8x128xbf16>
    %222 = vector.extract_strided_slice %209 {offsets = [0, 512], sizes = [16, 128], strides = [1, 1]} : vector<16x768xf32> to vector<16x128xf32>
    %223 = vector.shape_cast %222 : vector<16x128xf32> to vector<2x8x128xf32>
    %224 = vector.extract_strided_slice %209 {offsets = [0, 640], sizes = [16, 128], strides = [1, 1]} : vector<16x768xf32> to vector<16x128xf32>
    %225 = vector.shape_cast %224 : vector<16x128xf32> to vector<2x8x128xf32>
    %226 = tpu.concatenate %223, %225 in 0 : vector<2x8x128xf32>, vector<2x8x128xf32> -> vector<4x8x128xf32>
    %227 = arith.truncf %226 : vector<4x8x128xf32> to vector<4x8x128xbf16>
    "tpu.trace_start"() <{level = 10 : i32, message = "bqd,bkd->bqk"}> : () -> ()
    %cst_113 = arith.constant dense<0.000000e+00> : vector<4x8x8xf32>
    %228 = tpu.matmul %215, %221, %cst_113 {dimension_numbers = #tpu.dot_dimension_numbers<[2], [2], [1], [1], [0, 0, 0, 1, 1, 1], [0], [0]>} : vector<4x8x128xbf16>, vector<4x8x128xbf16>, vector<4x8x8xf32> -> vector<4x8x8xf32>
    "tpu.trace_stop"() : () -> ()
    %cst_114 = arith.constant 1.250000e-01 : f32
    %229 = vector.broadcast %cst_114 : f32 to vector<4x8x8xf32>
    %230 = arith.mulf %228, %229 : vector<4x8x8xf32>
    %231 = vector.broadcast %42 : vector<4x1x8xf32> to vector<4x8x8xf32>
    %232 = arith.addf %230, %231 : vector<4x8x8xf32>
    %cst_115 = arith.constant dense<0xFF800000> : vector<4x8xf32>
    %233 = vector.multi_reduction <maximumf>, %232, %cst_115 [2] : vector<4x8x8xf32> to vector<4x8xf32>
    %234 = vector.shape_cast %233 : vector<4x8xf32> to vector<4x8x1xf32>
    %235 = vector.broadcast %234 : vector<4x8x1xf32> to vector<4x8x8xf32>
    %236 = arith.subf %232, %235 : vector<4x8x8xf32>
    %237 = math.exp %236 : vector<4x8x8xf32>
    %cst_116 = arith.constant dense<0.000000e+00> : vector<4x8xf32>
    %238 = vector.multi_reduction <add>, %237, %cst_116 [2] : vector<4x8x8xf32> to vector<4x8xf32>
    %239 = vector.shape_cast %238 : vector<4x8xf32> to vector<4x8x1xf32>
    %240 = tpu.reciprocal %239 {approx = true} : vector<4x8x1xf32> -> vector<4x8x1xf32>
    %241 = vector.broadcast %240 : vector<4x8x1xf32> to vector<4x8x8xf32>
    %242 = arith.mulf %237, %241 : vector<4x8x8xf32>
    %243 = arith.truncf %242 : vector<4x8x8xf32> to vector<4x8x8xbf16>
    "tpu.trace_start"() <{level = 10 : i32, message = "bqk,bkd->bqd"}> : () -> ()
    %cst_117 = arith.constant dense<0.000000e+00> : vector<4x8x128xf32>
    %244 = tpu.matmul %243, %227, %cst_117 {dimension_numbers = #tpu.dot_dimension_numbers<[2], [1], [1], [2], [0, 0, 0, 1, 1, 2], [0], [0]>} : vector<4x8x8xbf16>, vector<4x8x128xbf16>, vector<4x8x128xf32> -> vector<4x8x128xf32>
    "tpu.trace_stop"() : () -> ()
    %245 = vector.extract_strided_slice %244 {offsets = [0, 0, 0], sizes = [2, 8, 128], strides = [1, 1, 1]} : vector<4x8x128xf32> to vector<2x8x128xf32>
    %246 = vector.shape_cast %245 : vector<2x8x128xf32> to vector<16x128xf32>
    %247 = vector.extract_strided_slice %244 {offsets = [2, 0, 0], sizes = [2, 8, 128], strides = [1, 1, 1]} : vector<4x8x128xf32> to vector<2x8x128xf32>
    %248 = vector.shape_cast %247 : vector<2x8x128xf32> to vector<16x128xf32>
    %249 = tpu.concatenate %246, %248 in 1 : vector<16x128xf32>, vector<16x128xf32> -> vector<16x256xf32>
    %250 = arith.truncf %249 : vector<16x256xf32> to vector<16x256xbf16>
    %cst_118 = arith.constant dense<0.000000e+00> : vector<16x128xf32>
    %251 = tpu.matmul %250, %187, %cst_118 {dimension_numbers = #tpu.dot_dimension_numbers<[1], [0], [0], [1], [0, 0, 1, 1], [], []>} : vector<16x256xbf16>, vector<256x128xbf16>, vector<16x128xf32> -> vector<16x128xf32>
    %252 = vector.broadcast %189 : vector<1x128xf32> to vector<16x128xf32>
    %253 = arith.addf %251, %252 : vector<16x128xf32>
    %254 = arith.addf %181, %253 : vector<16x128xf32>
    %cst_119 = arith.constant dense<0.000000e+00> : vector<16xf32>
    %255 = vector.multi_reduction <add>, %254, %cst_119 [1] : vector<16x128xf32> to vector<16xf32>
    %256 = vector.shape_cast %255 : vector<16xf32> to vector<16x1xf32>
    %cst_120 = arith.constant 1.280000e+02 : f32
    %257 = vector.broadcast %cst_120 : f32 to vector<16x1xf32>
    %258 = arith.divf %256, %257 : vector<16x1xf32>
    %259 = vector.broadcast %258 : vector<16x1xf32> to vector<16x128xf32>
    %260 = arith.subf %254, %259 : vector<16x128xf32>
    %261 = arith.mulf %260, %260 : vector<16x128xf32>
    %cst_121 = arith.constant dense<0.000000e+00> : vector<16xf32>
    %262 = vector.multi_reduction <add>, %261, %cst_121 [1] : vector<16x128xf32> to vector<16xf32>
    %263 = vector.shape_cast %262 : vector<16xf32> to vector<16x1xf32>
    %cst_122 = arith.constant 1.280000e+02 : f32
    %264 = vector.broadcast %cst_122 : f32 to vector<16x1xf32>
    %265 = arith.divf %263, %264 : vector<16x1xf32>
    %266 = vector.broadcast %258 : vector<16x1xf32> to vector<16x128xf32>
    %267 = arith.subf %254, %266 : vector<16x128xf32>
    %cst_123 = arith.constant 9.99999996E-13 : f32
    %268 = vector.broadcast %cst_123 : f32 to vector<16x1xf32>
    %269 = arith.addf %265, %268 : vector<16x1xf32>
    %270 = math.rsqrt %269 : vector<16x1xf32>
    %271 = vector.broadcast %270 : vector<16x1xf32> to vector<16x128xf32>
    %272 = arith.mulf %267, %271 : vector<16x128xf32>
    %273 = vector.broadcast %191 : vector<1x128xf32> to vector<16x128xf32>
    %274 = arith.mulf %272, %273 : vector<16x128xf32>
    %275 = vector.broadcast %193 : vector<1x128xf32> to vector<16x128xf32>
    %276 = arith.addf %274, %275 : vector<16x128xf32>
    %277 = arith.truncf %276 : vector<16x128xf32> to vector<16x128xbf16>
    %cst_124 = arith.constant dense<0.000000e+00> : vector<16x256xf32>
    %278 = tpu.matmul %277, %195, %cst_124 {dimension_numbers = #tpu.dot_dimension_numbers<[1], [0], [0], [1], [0, 0, 1, 1], [], []>} : vector<16x128xbf16>, vector<128x256xbf16>, vector<16x256xf32> -> vector<16x256xf32>
    %279 = vector.broadcast %197 : vector<1x256xf32> to vector<16x256xf32>
    %280 = arith.addf %278, %279 : vector<16x256xf32>
    %cst_125 = arith.constant 5.000000e-01 : f32
    %281 = vector.broadcast %cst_125 : f32 to vector<16x256xf32>
    %282 = arith.mulf %281, %280 : vector<16x256xf32>
    %cst_126 = arith.constant 4.471500e-02 : f32
    %283 = vector.broadcast %cst_126 : f32 to vector<16x256xf32>
    %284 = arith.mulf %283, %280 : vector<16x256xf32>
    %285 = arith.mulf %284, %280 : vector<16x256xf32>
    %286 = arith.mulf %285, %280 : vector<16x256xf32>
    %287 = arith.addf %280, %286 : vector<16x256xf32>
    %cst_127 = arith.constant 0.797884583 : f32
    %288 = vector.broadcast %cst_127 : f32 to vector<16x256xf32>
    %289 = arith.mulf %288, %287 : vector<16x256xf32>
    %290 = math.tanh %289 : vector<16x256xf32>
    %cst_128 = arith.constant 1.000000e+00 : f32
    %291 = vector.broadcast %cst_128 : f32 to vector<16x256xf32>
    %292 = arith.addf %291, %290 : vector<16x256xf32>
    %293 = arith.mulf %282, %292 : vector<16x256xf32>
    %294 = arith.truncf %293 : vector<16x256xf32> to vector<16x256xbf16>
    %cst_129 = arith.constant dense<0.000000e+00> : vector<16x128xf32>
    %295 = tpu.matmul %294, %199, %cst_129 {dimension_numbers = #tpu.dot_dimension_numbers<[1], [0], [0], [1], [0, 0, 1, 1], [], []>} : vector<16x256xbf16>, vector<256x128xbf16>, vector<16x128xf32> -> vector<16x128xf32>
    %296 = vector.broadcast %201 : vector<1x128xf32> to vector<16x128xf32>
    %297 = arith.addf %295, %296 : vector<16x128xf32>
    %298 = arith.addf %276, %297 : vector<16x128xf32>
    %cst_130 = arith.constant dense<0.000000e+00> : vector<16xf32>
    %299 = vector.multi_reduction <add>, %298, %cst_130 [1] : vector<16x128xf32> to vector<16xf32>
    %300 = vector.shape_cast %299 : vector<16xf32> to vector<16x1xf32>
    %cst_131 = arith.constant 1.280000e+02 : f32
    %301 = vector.broadcast %cst_131 : f32 to vector<16x1xf32>
    %302 = arith.divf %300, %301 : vector<16x1xf32>
    %303 = vector.broadcast %302 : vector<16x1xf32> to vector<16x128xf32>
    %304 = arith.subf %298, %303 : vector<16x128xf32>
    %305 = arith.mulf %304, %304 : vector<16x128xf32>
    %cst_132 = arith.constant dense<0.000000e+00> : vector<16xf32>
    %306 = vector.multi_reduction <add>, %305, %cst_132 [1] : vector<16x128xf32> to vector<16xf32>
    %307 = vector.shape_cast %306 : vector<16xf32> to vector<16x1xf32>
    %cst_133 = arith.constant 1.280000e+02 : f32
    %308 = vector.broadcast %cst_133 : f32 to vector<16x1xf32>
    %309 = arith.divf %307, %308 : vector<16x1xf32>
    %310 = vector.broadcast %302 : vector<16x1xf32> to vector<16x128xf32>
    %311 = arith.subf %298, %310 : vector<16x128xf32>
    %cst_134 = arith.constant 9.99999996E-13 : f32
    %312 = vector.broadcast %cst_134 : f32 to vector<16x1xf32>
    %313 = arith.addf %309, %312 : vector<16x1xf32>
    %314 = math.rsqrt %313 : vector<16x1xf32>
    %315 = vector.broadcast %314 : vector<16x1xf32> to vector<16x128xf32>
    %316 = arith.mulf %311, %315 : vector<16x128xf32>
    %317 = vector.broadcast %203 : vector<1x128xf32> to vector<16x128xf32>
    %318 = arith.mulf %316, %317 : vector<16x128xf32>
    %319 = vector.broadcast %205 : vector<1x128xf32> to vector<16x128xf32>
    %320 = arith.addf %318, %319 : vector<16x128xf32>
    %321 = vector.shape_cast %320 : vector<16x128xf32> to vector<2x8x128xf32>
    %322 = vector.extract_strided_slice %321 {offsets = [0, 0, 0], sizes = [2, 1, 128], strides = [1, 1, 1]} : vector<2x8x128xf32> to vector<2x1x128xf32>
    %323 = vector.shape_cast %322 : vector<2x1x128xf32> to vector<2x128xf32>
    %324 = arith.truncf %323 : vector<2x128xf32> to vector<2x128xbf16>
    %c0_135 = arith.constant 0 : index
    %c0_136 = arith.constant 0 : index
    %325 = vector.load %arg18[%c0_135, %c0_136] : memref<128x128xbf16, #tpu.memory_space<vmem>>, vector<128x128xbf16>
    %cst_137 = arith.constant dense<0.000000e+00> : vector<2x128xf32>
    %326 = tpu.matmul %324, %325, %cst_137 {dimension_numbers = #tpu.dot_dimension_numbers<[1], [0], [0], [1], [0, 0, 1, 1], [], []>} : vector<2x128xbf16>, vector<128x128xbf16>, vector<2x128xf32> -> vector<2x128xf32>
    %c0_138 = arith.constant 0 : index
    %c0_139 = arith.constant 0 : index
    %327 = vector.load %arg19[%c0_138, %c0_139] : memref<1x128xf32, #tpu.memory_space<vmem>>, vector<1x128xf32>
    %328 = vector.broadcast %327 : vector<1x128xf32> to vector<2x128xf32>
    %329 = arith.addf %326, %328 : vector<2x128xf32>
    %cst_140 = arith.constant 0.000000e+00 : f32
    %330 = vector.broadcast %cst_140 : f32 to vector<2x128xf32>
    %331 = arith.cmpf ogt, %329, %330 : vector<2x128xf32>
    %cst_141 = arith.constant 2.000000e-01 : f32
    %332 = vector.broadcast %cst_141 : f32 to vector<2x128xf32>
    %333 = arith.mulf %332, %329 : vector<2x128xf32>
    %334 = arith.select %331, %329, %333 : vector<2x128xi1>, vector<2x128xf32>
    %335 = arith.truncf %334 : vector<2x128xf32> to vector<2x128xbf16>
    %c0_142 = arith.constant 0 : index
    %c0_143 = arith.constant 0 : index
    %336 = vector.load %arg20[%c0_142, %c0_143] : memref<128x128xbf16, #tpu.memory_space<vmem>>, vector<128x128xbf16>
    %cst_144 = arith.constant dense<0.000000e+00> : vector<2x128xf32>
    %337 = tpu.matmul %335, %336, %cst_144 {dimension_numbers = #tpu.dot_dimension_numbers<[1], [0], [0], [1], [0, 0, 1, 1], [], []>} : vector<2x128xbf16>, vector<128x128xbf16>, vector<2x128xf32> -> vector<2x128xf32>
    %c0_145 = arith.constant 0 : index
    %c0_146 = arith.constant 0 : index
    %338 = vector.load %arg21[%c0_145, %c0_146] : memref<1x128xf32, #tpu.memory_space<vmem>>, vector<1x128xf32>
    %339 = vector.broadcast %338 : vector<1x128xf32> to vector<2x128xf32>
    %340 = arith.addf %337, %339 : vector<2x128xf32>
    %cst_147 = arith.constant 0.000000e+00 : f32
    %341 = vector.broadcast %cst_147 : f32 to vector<2x128xf32>
    %342 = arith.cmpf ogt, %340, %341 : vector<2x128xf32>
    %cst_148 = arith.constant 2.000000e-01 : f32
    %343 = vector.broadcast %cst_148 : f32 to vector<2x128xf32>
    %344 = arith.mulf %343, %340 : vector<2x128xf32>
    %345 = arith.select %342, %340, %344 : vector<2x128xi1>, vector<2x128xf32>
    %346 = arith.truncf %345 : vector<2x128xf32> to vector<2x128xbf16>
    %c0_149 = arith.constant 0 : index
    %c0_150 = arith.constant 0 : index
    %347 = vector.load %arg22[%c0_149, %c0_150] : memref<128x128xbf16, #tpu.memory_space<vmem>>, vector<128x128xbf16>
    %cst_151 = arith.constant dense<0.000000e+00> : vector<2x128xf32>
    %348 = tpu.matmul %346, %347, %cst_151 {dimension_numbers = #tpu.dot_dimension_numbers<[1], [0], [0], [1], [0, 0, 1, 1], [], []>} : vector<2x128xbf16>, vector<128x128xbf16>, vector<2x128xf32> -> vector<2x128xf32>
    %c0_152 = arith.constant 0 : index
    %c0_153 = arith.constant 0 : index
    %349 = vector.load %arg23[%c0_152, %c0_153] : memref<1x128xf32, #tpu.memory_space<vmem>>, vector<1x128xf32>
    %350 = vector.broadcast %349 : vector<1x128xf32> to vector<2x128xf32>
    %351 = arith.addf %348, %350 : vector<2x128xf32>
    %352 = arith.negf %351 : vector<2x128xf32>
    %353 = math.exp %352 : vector<2x128xf32>
    %cst_154 = arith.constant 1.000000e+00 : f32
    %354 = vector.broadcast %cst_154 : f32 to vector<2x128xf32>
    %355 = arith.addf %354, %353 : vector<2x128xf32>
    %356 = arith.divf %354, %355 : vector<2x128xf32>
    %c0_155 = arith.constant 0 : index
    %c0_156 = arith.constant 0 : index
    %357 = vector.load %arg24[%c0_155, %c0_156] : memref<2x128xf32, #tpu.memory_space<vmem>>, vector<2x128xf32>
    tpu.vector_store %arg24[%c0_155, %c0_156], %356 {strides = array<i32>} : memref<2x128xf32, #tpu.memory_space<vmem>>, vector<2x128xf32>,
    return
  }
}

</mosaic_0001>

<llo_original>
// kernel: bert_finetuner_forward.1
$region0: #{bert_finetuner_forward.1}
  #allocation0 [shape = 'u32[]', space=smem, size = 0x4, offset = 0x4, fixed_abs, tag = 'smem constant byte address 0x4 - core index']
  #allocation1 [shape = 'u32[72,128]{1,0:T(1,128)}', space=vmem, size = 0x9000, scoped, tag = 'internal scratch']
  %s0 = inlined_call_operand.vmem [shape: s32[16,1], index: 0, kind: input, shape index: {}]
  %s1 = inlined_call_operand.hbm [shape: s32[2,8], index: 1, kind: input, shape index: {}]
  %s2 = inlined_call_operand.hbm [shape: f32[128,128], index: 2, kind: input, shape index: {}]
  %s3 = inlined_call_operand.vmem [shape: f32[8,128], index: 3, kind: input, shape index: {}]
  %s4 = inlined_call_operand.hbm [shape: f32[1,128], index: 4, kind: input, shape index: {}]
  %s5 = inlined_call_operand.hbm [shape: f32[1,128], index: 5, kind: input, shape index: {}]
  %s6 = inlined_call_operand.hbm [shape: bf16[2,128,768], index: 6, kind: input, shape index: {}]
  %s7 = inlined_call_operand.vmem [shape: f32[2,1,768], index: 7, kind: input, shape index: {}]
  %s8 = inlined_call_operand.hbm [shape: bf16[2,256,128], index: 8, kind: input, shape index: {}]
  %s9 = inlined_call_operand.vmem [shape: f32[2,1,128], index: 9, kind: input, shape index: {}]
  %s10 = inlined_call_operand.vmem [shape: f32[2,1,128], index: 10, kind: input, shape index: {}]
  %s11 = inlined_call_operand.vmem [shape: f32[2,1,128], index: 11, kind: input, shape index: {}]
  %s12 = inlined_call_operand.hbm [shape: bf16[2,128,256], index: 12, kind: input, shape index: {}]
  %s13 = inlined_call_operand.vmem [shape: f32[2,1,256], index: 13, kind: input, shape index: {}]
  %s14 = inlined_call_operand.hbm [shape: bf16[2,256,128], index: 14, kind: input, shape index: {}]
  %s15 = inlined_call_operand.hbm [shape: f32[2,1,128], index: 15, kind: input, shape index: {}]
  %s16 = inlined_call_operand.vmem [shape: f32[2,1,128], index: 16, kind: input, shape index: {}]
  %s17 = inlined_call_operand.hbm [shape: f32[2,1,128], index: 17, kind: input, shape index: {}]
  %s18 = inlined_call_operand.hbm [shape: bf16[128,128], index: 18, kind: input, shape index: {}]
  %s19 = inlined_call_operand.hbm [shape: f32[1,128], index: 19, kind: input, shape index: {}]
  %s20 = inlined_call_operand.hbm [shape: bf16[128,128], index: 20, kind: input, shape index: {}]
  %s21 = inlined_call_operand.hbm [shape: f32[1,128], index: 21, kind: input, shape index: {}]
  %s22 = inlined_call_operand.hbm [shape: bf16[128,128], index: 22, kind: input, shape index: {}]
  %s23 = inlined_call_operand.hbm [shape: f32[1,128], index: 23, kind: input, shape index: {}]
  %s24 = inlined_call_operand.hbm [shape: f32[2,128], index: 24, kind: output, shape index: {}]
  %s25 = sld [smem:[#allocation0]]
  $region170: #{bert_finetuner_forward.1} parent=0
    _
  %s27 = ssub.s32 1, %s25
  %s28 = scalar_select 0, %s27, %s25
  $region1: #{bert_finetuner_forward.1} parent=0
    #allocation2 [shape = 'u8[1024]{0}', space=vmem, size = 0x400, scoped, tag = 'input window, operand 1, single buffered']
    #allocation3 [shape = 's32[1]{0}', space=sflag, size = 0x4, scoped, tag = 'scoped memory for bert_finetuner_forward.1']
    #allocation4 [shape = 's32[1]{0}', space=sflag, size = 0x4, scoped, tag = 'scoped memory for bert_finetuner_forward.1']
    #allocation5 [shape = 'u8[65536]{0}', space=vmem, size = 0x10000, scoped, tag = 'input window, operand 2, single buffered']
    #allocation6 [shape = 's32[1]{0}', space=sflag, size = 0x4, scoped, tag = 'scoped memory for bert_finetuner_forward.1']
    #allocation7 [shape = 'u8[512]{0}', space=vmem, size = 0x400, scoped, tag = 'input window, operand 4, single buffered']
    #allocation8 [shape = 'u8[512]{0}', space=vmem, size = 0x400, scoped, tag = 'input window, operand 5, single buffered']
    #allocation9 [shape = 's32[1]{0}', space=sflag, size = 0x4, scoped, tag = 'scoped memory for bert_finetuner_forward.1']
    #allocation10 [shape = 'u8[393216]{0}', space=vmem, size = 0x60000, scoped, tag = 'input window, operand 6, single buffered']
    #allocation11 [shape = 'u8[131072]{0}', space=vmem, size = 0x20000, scoped, tag = 'input window, operand 8, single buffered']
    #allocation12 [shape = 's32[1]{0}', space=sflag, size = 0x4, scoped, tag = 'scoped memory for bert_finetuner_forward.1']
    #allocation13 [shape = 'u8[131072]{0}', space=vmem, size = 0x20000, scoped, tag = 'input window, operand 12, single buffered']
    #allocation14 [shape = 'u8[131072]{0}', space=vmem, size = 0x20000, scoped, tag = 'input window, operand 14, single buffered']
    #allocation15 [shape = 's32[1]{0}', space=sflag, size = 0x4, scoped, tag = 'scoped memory for bert_finetuner_forward.1']
    #allocation16 [shape = 'u8[1024]{0}', space=vmem, size = 0x400, scoped, tag = 'input window, operand 15, single buffered']
    #allocation17 [shape = 'u8[1024]{0}', space=vmem, size = 0x400, scoped, tag = 'input window, operand 17, single buffered']
    #allocation18 [shape = 's32[1]{0}', space=sflag, size = 0x4, scoped, tag = 'scoped memory for bert_finetuner_forward.1']
    #allocation19 [shape = 'u8[32768]{0}', space=vmem, size = 0x8000, scoped, tag = 'input window, operand 18, single buffered']
    #allocation20 [shape = 'u8[512]{0}', space=vmem, size = 0x400, scoped, tag = 'input window, operand 19, single buffered']
    #allocation21 [shape = 's32[1]{0}', space=sflag, size = 0x4, scoped, tag = 'scoped memory for bert_finetuner_forward.1']
    #allocation22 [shape = 'u8[32768]{0}', space=vmem, size = 0x8000, scoped, tag = 'input window, operand 20, single buffered']
    #allocation23 [shape = 'u8[512]{0}', space=vmem, size = 0x400, scoped, tag = 'input window, operand 21, single buffered']
    #allocation24 [shape = 's32[1]{0}', space=sflag, size = 0x4, scoped, tag = 'scoped memory for bert_finetuner_forward.1']
    #allocation25 [shape = 'u8[32768]{0}', space=vmem, size = 0x8000, scoped, tag = 'input window, operand 22, single buffered']
    #allocation26 [shape = 'u8[512]{0}', space=vmem, size = 0x400, scoped, tag = 'input window, operand 23, single buffered']
    #allocation27 [shape = 's32[1]{0}', space=sflag, size = 0x4, scoped, tag = 'scoped memory for bert_finetuner_forward.1']
    #allocation28 [shape = 'u8[1024]{0}', space=vmem, size = 0x400, scoped, tag = 'output window, operand 0, single buffered']
    %29 = vsyncpa [#allocation3], 0
    %30 = vsyncpa [#allocation6], 0
    %31 = vsyncpa [#allocation9], 0
    %32 = vsyncpa [#allocation12], 0
    %33 = vsyncpa [#allocation15], 0
    %34 = vsyncpa [#allocation18], 0
    %35 = vsyncpa [#allocation21], 0
    %36 = vsyncpa [#allocation24], 0
    %37 = vsyncpa [#allocation27], 0
    %38 = vsyncpa [#allocation4], 0
    // Predicated region
    $region2: #{bert_finetuner_forward.1} parent=1 // pred_check
      _
    $region3: #{bert_finetuner_forward.1} parent=1 // pred_check_branch
      %40 = sbr.rel (0) target = $region5
    $region4: #{bert_finetuner_forward.1} parent=1 // pred_region
      _
    $region5: #{bert_finetuner_forward.1} parent=1 // pred_fallthru
      _
    // Predicated region
    $region6: #{bert_finetuner_forward.1} parent=1 // pred_check
      _
    $region7: #{bert_finetuner_forward.1} parent=1 // pred_check_branch
      %42 = sbr.rel (0) target = $region9
    $region8: #{bert_finetuner_forward.1} parent=1 // pred_region
      %44 = vsyncadd [#allocation3], 0
      %s46 = sshll.u32 %s1, 4
      %s47 = int_to_ptr.hbm [resolvable:$true] %s46
      %s48 = sshll.u32 [#allocation2], 4
      %s49 = int_to_ptr.vmem [resolvable:$true] %s48
      %51 = dma.hbm_to_vmem [thread:$0]  %s47, 32, %s49, [#allocation3]
    $region9: #{bert_finetuner_forward.1} parent=1 // pred_fallthru
      _
    // Predicated region
    $region10: #{bert_finetuner_forward.1} parent=1 // pred_check
      _
    $region11: #{bert_finetuner_forward.1} parent=1 // pred_check_branch
      %53 = sbr.rel (0) target = $region13
    $region12: #{bert_finetuner_forward.1} parent=1 // pred_region
      %55 = vsyncadd [#allocation6], 0
      %s56 = sshll.u32 %s2, 4
      %s57 = int_to_ptr.hbm [resolvable:$true] %s56
      %s58 = sshll.u32 [#allocation5], 4
      %s59 = int_to_ptr.vmem [resolvable:$true] %s58
      %64 = dma.hbm_to_vmem [thread:$0]  %s57, 2048, %s59, [#allocation6], 128, 128, 8
    $region13: #{bert_finetuner_forward.1} parent=1 // pred_fallthru
      _
    // Predicated region
    $region14: #{bert_finetuner_forward.1} parent=1 // pred_check
      _
    $region15: #{bert_finetuner_forward.1} parent=1 // pred_check_branch
      %66 = sbr.rel (0) target = $region17
    $region16: #{bert_finetuner_forward.1} parent=1 // pred_region
      _
    $region17: #{bert_finetuner_forward.1} parent=1 // pred_fallthru
      _
    // Predicated region
    $region18: #{bert_finetuner_forward.1} parent=1 // pred_check
      _
    $region19: #{bert_finetuner_forward.1} parent=1 // pred_check_branch
      %68 = sbr.rel (0) target = $region21
    $region20: #{bert_finetuner_forward.1} parent=1 // pred_region
      %70 = vsyncadd [#allocation6], 0
      %s72 = sshll.u32 %s4, 4
      %s73 = int_to_ptr.hbm [resolvable:$true] %s72
      %s74 = sshll.u32 [#allocation7], 4
      %s75 = int_to_ptr.vmem [resolvable:$true] %s74
      %77 = dma.hbm_to_vmem [thread:$0]  %s73, 16, %s75, [#allocation6]
    $region21: #{bert_finetuner_forward.1} parent=1 // pred_fallthru
      _
    // Predicated region
    $region22: #{bert_finetuner_forward.1} parent=1 // pred_check
      _
    $region23: #{bert_finetuner_forward.1} parent=1 // pred_check_branch
      %79 = sbr.rel (0) target = $region25
    $region24: #{bert_finetuner_forward.1} parent=1 // pred_region
      %81 = vsyncadd [#allocation9], 0
      %s83 = sshll.u32 %s5, 4
      %s84 = int_to_ptr.hbm [resolvable:$true] %s83
      %s85 = sshll.u32 [#allocation8], 4
      %s86 = int_to_ptr.vmem [resolvable:$true] %s85
      %88 = dma.hbm_to_vmem [thread:$0]  %s84, 16, %s86, [#allocation9]
    $region25: #{bert_finetuner_forward.1} parent=1 // pred_fallthru
      _
    // Predicated region
    $region26: #{bert_finetuner_forward.1} parent=1 // pred_check
      _
    $region27: #{bert_finetuner_forward.1} parent=1 // pred_check_branch
      %90 = sbr.rel (0) target = $region29
    $region28: #{bert_finetuner_forward.1} parent=1 // pred_region
      %92 = vsyncadd [#allocation9], 0
      %s93 = sshll.u32 %s6, 4
      %s94 = int_to_ptr.hbm [resolvable:$true] %s93
      %s95 = sshll.u32 [#allocation10], 4
      %s96 = int_to_ptr.vmem [resolvable:$true] %s95
      %101 = dma.hbm_to_vmem [thread:$0]  %s94, 12288, %s96, [#allocation9], 384, 384, 24
    $region29: #{bert_finetuner_forward.1} parent=1 // pred_fallthru
      _
    // Predicated region
    $region30: #{bert_finetuner_forward.1} parent=1 // pred_check
      _
    $region31: #{bert_finetuner_forward.1} parent=1 // pred_check_branch
      %103 = sbr.rel (0) target = $region33
    $region32: #{bert_finetuner_forward.1} parent=1 // pred_region
      _
    $region33: #{bert_finetuner_forward.1} parent=1 // pred_fallthru
      _
    // Predicated region
    $region34: #{bert_finetuner_forward.1} parent=1 // pred_check
      _
    $region35: #{bert_finetuner_forward.1} parent=1 // pred_check_branch
      %105 = sbr.rel (0) target = $region37
    $region36: #{bert_finetuner_forward.1} parent=1 // pred_region
      %107 = vsyncadd [#allocation12], 0
      %s108 = sshll.u32 %s8, 4
      %s109 = int_to_ptr.hbm [resolvable:$true] %s108
      %s110 = sshll.u32 [#allocation11], 4
      %s111 = int_to_ptr.vmem [resolvable:$true] %s110
      %116 = dma.hbm_to_vmem [thread:$0]  %s109, 4096, %s111, [#allocation12], 64, 64, 4
    $region37: #{bert_finetuner_forward.1} parent=1 // pred_fallthru
      _
    // Predicated region
    $region38: #{bert_finetuner_forward.1} parent=1 // pred_check
      _
    $region39: #{bert_finetuner_forward.1} parent=1 // pred_check_branch
      %118 = sbr.rel (0) target = $region41
    $region40: #{bert_finetuner_forward.1} parent=1 // pred_region
      _
    $region41: #{bert_finetuner_forward.1} parent=1 // pred_fallthru
      _
    // Predicated region
    $region42: #{bert_finetuner_forward.1} parent=1 // pred_check
      _
    $region43: #{bert_finetuner_forward.1} parent=1 // pred_check_branch
      %120 = sbr.rel (0) target = $region45
    $region44: #{bert_finetuner_forward.1} parent=1 // pred_region
      _
    $region45: #{bert_finetuner_forward.1} parent=1 // pred_fallthru
      _
    // Predicated region
    $region46: #{bert_finetuner_forward.1} parent=1 // pred_check
      _
    $region47: #{bert_finetuner_forward.1} parent=1 // pred_check_branch
      %122 = sbr.rel (0) target = $region49
    $region48: #{bert_finetuner_forward.1} parent=1 // pred_region
      _
    $region49: #{bert_finetuner_forward.1} parent=1 // pred_fallthru
      _
    // Predicated region
    $region50: #{bert_finetuner_forward.1} parent=1 // pred_check
      _
    $region51: #{bert_finetuner_forward.1} parent=1 // pred_check_branch
      %124 = sbr.rel (0) target = $region53
    $region52: #{bert_finetuner_forward.1} parent=1 // pred_region
      %126 = vsyncadd [#allocation12], 0
      %s127 = sshll.u32 %s12, 4
      %s128 = int_to_ptr.hbm [resolvable:$true] %s127
      %s129 = sshll.u32 [#allocation13], 4
      %s130 = int_to_ptr.vmem [resolvable:$true] %s129
      %135 = dma.hbm_to_vmem [thread:$0]  %s128, 4096, %s130, [#allocation12], 128, 128, 8
    $region53: #{bert_finetuner_forward.1} parent=1 // pred_fallthru
      _
    // Predicated region
    $region54: #{bert_finetuner_forward.1} parent=1 // pred_check
      _
    $region55: #{bert_finetuner_forward.1} parent=1 // pred_check_branch
      %137 = sbr.rel (0) target = $region57
    $region56: #{bert_finetuner_forward.1} parent=1 // pred_region
      _
    $region57: #{bert_finetuner_forward.1} parent=1 // pred_fallthru
      _
    // Predicated region
    $region58: #{bert_finetuner_forward.1} parent=1 // pred_check
      _
    $region59: #{bert_finetuner_forward.1} parent=1 // pred_check_branch
      %139 = sbr.rel (0) target = $region61
    $region60: #{bert_finetuner_forward.1} parent=1 // pred_region
      %141 = vsyncadd [#allocation15], 0
      %s142 = sshll.u32 %s14, 4
      %s143 = int_to_ptr.hbm [resolvable:$true] %s142
      %s144 = sshll.u32 [#allocation14], 4
      %s145 = int_to_ptr.vmem [resolvable:$true] %s144
      %150 = dma.hbm_to_vmem [thread:$0]  %s143, 4096, %s145, [#allocation15], 64, 64, 4
    $region61: #{bert_finetuner_forward.1} parent=1 // pred_fallthru
      _
    // Predicated region
    $region62: #{bert_finetuner_forward.1} parent=1 // pred_check
      _
    $region63: #{bert_finetuner_forward.1} parent=1 // pred_check_branch
      %152 = sbr.rel (0) target = $region65
    $region64: #{bert_finetuner_forward.1} parent=1 // pred_region
      %154 = vsyncadd [#allocation15], 0
      %s155 = sshll.u32 %s15, 4
      %s156 = int_to_ptr.hbm [resolvable:$true] %s155
      %s157 = sshll.u32 [#allocation16], 4
      %s158 = int_to_ptr.vmem [resolvable:$true] %s157
      %163 = dma.hbm_to_vmem [thread:$0]  %s156, 32, %s158, [#allocation15], 16, 16, 1
    $region65: #{bert_finetuner_forward.1} parent=1 // pred_fallthru
      _
    // Predicated region
    $region66: #{bert_finetuner_forward.1} parent=1 // pred_check
      _
    $region67: #{bert_finetuner_forward.1} parent=1 // pred_check_branch
      %165 = sbr.rel (0) target = $region69
    $region68: #{bert_finetuner_forward.1} parent=1 // pred_region
      _
    $region69: #{bert_finetuner_forward.1} parent=1 // pred_fallthru
      _
    // Predicated region
    $region70: #{bert_finetuner_forward.1} parent=1 // pred_check
      _
    $region71: #{bert_finetuner_forward.1} parent=1 // pred_check_branch
      %167 = sbr.rel (0) target = $region73
    $region72: #{bert_finetuner_forward.1} parent=1 // pred_region
      %169 = vsyncadd [#allocation18], 0
      %s170 = sshll.u32 %s17, 4
      %s171 = int_to_ptr.hbm [resolvable:$true] %s170
      %s172 = sshll.u32 [#allocation17], 4
      %s173 = int_to_ptr.vmem [resolvable:$true] %s172
      %178 = dma.hbm_to_vmem [thread:$0]  %s171, 32, %s173, [#allocation18], 16, 16, 1
    $region73: #{bert_finetuner_forward.1} parent=1 // pred_fallthru
      _
    // Predicated region
    $region74: #{bert_finetuner_forward.1} parent=1 // pred_check
      _
    $region75: #{bert_finetuner_forward.1} parent=1 // pred_check_branch
      %180 = sbr.rel (0) target = $region77
    $region76: #{bert_finetuner_forward.1} parent=1 // pred_region
      %182 = vsyncadd [#allocation18], 0
      %s183 = sshll.u32 %s18, 4
      %s184 = int_to_ptr.hbm [resolvable:$true] %s183
      %s185 = sshll.u32 [#allocation19], 4
      %s186 = int_to_ptr.vmem [resolvable:$true] %s185
      %191 = dma.hbm_to_vmem [thread:$0]  %s184, 1024, %s186, [#allocation18], 64, 64, 4
    $region77: #{bert_finetuner_forward.1} parent=1 // pred_fallthru
      _
    // Predicated region
    $region78: #{bert_finetuner_forward.1} parent=1 // pred_check
      _
    $region79: #{bert_finetuner_forward.1} parent=1 // pred_check_branch
      %193 = sbr.rel (0) target = $region81
    $region80: #{bert_finetuner_forward.1} parent=1 // pred_region
      %195 = vsyncadd [#allocation21], 0
      %s197 = sshll.u32 %s19, 4
      %s198 = int_to_ptr.hbm [resolvable:$true] %s197
      %s199 = sshll.u32 [#allocation20], 4
      %s200 = int_to_ptr.vmem [resolvable:$true] %s199
      %202 = dma.hbm_to_vmem [thread:$0]  %s198, 16, %s200, [#allocation21]
    $region81: #{bert_finetuner_forward.1} parent=1 // pred_fallthru
      _
    // Predicated region
    $region82: #{bert_finetuner_forward.1} parent=1 // pred_check
      _
    $region83: #{bert_finetuner_forward.1} parent=1 // pred_check_branch
      %204 = sbr.rel (0) target = $region85
    $region84: #{bert_finetuner_forward.1} parent=1 // pred_region
      %206 = vsyncadd [#allocation21], 0
      %s207 = sshll.u32 %s20, 4
      %s208 = int_to_ptr.hbm [resolvable:$true] %s207
      %s209 = sshll.u32 [#allocation22], 4
      %s210 = int_to_ptr.vmem [resolvable:$true] %s209
      %215 = dma.hbm_to_vmem [thread:$0]  %s208, 1024, %s210, [#allocation21], 64, 64, 4
    $region85: #{bert_finetuner_forward.1} parent=1 // pred_fallthru
      _
    // Predicated region
    $region86: #{bert_finetuner_forward.1} parent=1 // pred_check
      _
    $region87: #{bert_finetuner_forward.1} parent=1 // pred_check_branch
      %217 = sbr.rel (0) target = $region89
    $region88: #{bert_finetuner_forward.1} parent=1 // pred_region
      %219 = vsyncadd [#allocation24], 0
      %s221 = sshll.u32 %s21, 4
      %s222 = int_to_ptr.hbm [resolvable:$true] %s221
      %s223 = sshll.u32 [#allocation23], 4
      %s224 = int_to_ptr.vmem [resolvable:$true] %s223
      %226 = dma.hbm_to_vmem [thread:$0]  %s222, 16, %s224, [#allocation24]
    $region89: #{bert_finetuner_forward.1} parent=1 // pred_fallthru
      _
    // Predicated region
    $region90: #{bert_finetuner_forward.1} parent=1 // pred_check
      _
    $region91: #{bert_finetuner_forward.1} parent=1 // pred_check_branch
      %228 = sbr.rel (0) target = $region93
    $region92: #{bert_finetuner_forward.1} parent=1 // pred_region
      %230 = vsyncadd [#allocation24], 0
      %s231 = sshll.u32 %s22, 4
      %s232 = int_to_ptr.hbm [resolvable:$true] %s231
      %s233 = sshll.u32 [#allocation25], 4
      %s234 = int_to_ptr.vmem [resolvable:$true] %s233
      %239 = dma.hbm_to_vmem [thread:$0]  %s232, 1024, %s234, [#allocation24], 64, 64, 4
    $region93: #{bert_finetuner_forward.1} parent=1 // pred_fallthru
      _
    // Predicated region
    $region94: #{bert_finetuner_forward.1} parent=1 // pred_check
      _
    $region95: #{bert_finetuner_forward.1} parent=1 // pred_check_branch
      %241 = sbr.rel (0) target = $region97
    $region96: #{bert_finetuner_forward.1} parent=1 // pred_region
      %243 = vsyncadd [#allocation27], 0
      %s245 = sshll.u32 %s23, 4
      %s246 = int_to_ptr.hbm [resolvable:$true] %s245
      %s247 = sshll.u32 [#allocation26], 4
      %s248 = int_to_ptr.vmem [resolvable:$true] %s247
      %250 = dma.hbm_to_vmem [thread:$0]  %s246, 16, %s248, [#allocation27]
    $region97: #{bert_finetuner_forward.1} parent=1 // pred_fallthru
      _
    // Predicated region
    $region98: #{bert_finetuner_forward.1} parent=1 // pred_check
      _
    $region99: #{bert_finetuner_forward.1} parent=1 // pred_check_branch
      %252 = sbr.rel (0) target = $region101
    $region100: #{bert_finetuner_forward.1} parent=1 // pred_region
      %254 = dma.done [#allocation3], 32
    $region101: #{bert_finetuner_forward.1} parent=1 // pred_fallthru
      _
    // Predicated region
    $region102: #{bert_finetuner_forward.1} parent=1 // pred_check
      _
    $region103: #{bert_finetuner_forward.1} parent=1 // pred_check_branch
      %256 = sbr.rel (0) target = $region105
    $region104: #{bert_finetuner_forward.1} parent=1 // pred_region
      %258 = dma.done [#allocation6], 2048
    $region105: #{bert_finetuner_forward.1} parent=1 // pred_fallthru
      _
    // Predicated region
    $region106: #{bert_finetuner_forward.1} parent=1 // pred_check
      _
    $region107: #{bert_finetuner_forward.1} parent=1 // pred_check_branch
      %260 = sbr.rel (0) target = $region109
    $region108: #{bert_finetuner_forward.1} parent=1 // pred_region
      %262 = dma.done [#allocation6], 16
    $region109: #{bert_finetuner_forward.1} parent=1 // pred_fallthru
      _
    // Predicated region
    $region110: #{bert_finetuner_forward.1} parent=1 // pred_check
      _
    $region111: #{bert_finetuner_forward.1} parent=1 // pred_check_branch
      %264 = sbr.rel (0) target = $region113
    $region112: #{bert_finetuner_forward.1} parent=1 // pred_region
      %266 = dma.done [#allocation9], 16
    $region113: #{bert_finetuner_forward.1} parent=1 // pred_fallthru
      _
    // Predicated region
    $region114: #{bert_finetuner_forward.1} parent=1 // pred_check
      _
    $region115: #{bert_finetuner_forward.1} parent=1 // pred_check_branch
      %268 = sbr.rel (0) target = $region117
    $region116: #{bert_finetuner_forward.1} parent=1 // pred_region
      %270 = dma.done [#allocation9], 12288
    $region117: #{bert_finetuner_forward.1} parent=1 // pred_fallthru
      _
    // Predicated region
    $region118: #{bert_finetuner_forward.1} parent=1 // pred_check
      _
    $region119: #{bert_finetuner_forward.1} parent=1 // pred_check_branch
      %272 = sbr.rel (0) target = $region121
    $region120: #{bert_finetuner_forward.1} parent=1 // pred_region
      %274 = dma.done [#allocation12], 4096
    $region121: #{bert_finetuner_forward.1} parent=1 // pred_fallthru
      _
    // Predicated region
    $region122: #{bert_finetuner_forward.1} parent=1 // pred_check
      _
    $region123: #{bert_finetuner_forward.1} parent=1 // pred_check_branch
      %276 = sbr.rel (0) target = $region125
    $region124: #{bert_finetuner_forward.1} parent=1 // pred_region
      %278 = dma.done [#allocation12], 4096
    $region125: #{bert_finetuner_forward.1} parent=1 // pred_fallthru
      _
    // Predicated region
    $region126: #{bert_finetuner_forward.1} parent=1 // pred_check
      _
    $region127: #{bert_finetuner_forward.1} parent=1 // pred_check_branch
      %280 = sbr.rel (0) target = $region129
    $region128: #{bert_finetuner_forward.1} parent=1 // pred_region
      %282 = dma.done [#allocation15], 4096
    $region129: #{bert_finetuner_forward.1} parent=1 // pred_fallthru
      _
    // Predicated region
    $region130: #{bert_finetuner_forward.1} parent=1 // pred_check
      _
    $region131: #{bert_finetuner_forward.1} parent=1 // pred_check_branch
      %284 = sbr.rel (0) target = $region133
    $region132: #{bert_finetuner_forward.1} parent=1 // pred_region
      %286 = dma.done [#allocation15], 32
    $region133: #{bert_finetuner_forward.1} parent=1 // pred_fallthru
      _
    // Predicated region
    $region134: #{bert_finetuner_forward.1} parent=1 // pred_check
      _
    $region135: #{bert_finetuner_forward.1} parent=1 // pred_check_branch
      %288 = sbr.rel (0) target = $region137
    $region136: #{bert_finetuner_forward.1} parent=1 // pred_region
      %290 = dma.done [#allocation18], 32
    $region137: #{bert_finetuner_forward.1} parent=1 // pred_fallthru
      _
    // Predicated region
    $region138: #{bert_finetuner_forward.1} parent=1 // pred_check
      _
    $region139: #{bert_finetuner_forward.1} parent=1 // pred_check_branch
      %292 = sbr.rel (0) target = $region141
    $region140: #{bert_finetuner_forward.1} parent=1 // pred_region
      %294 = dma.done [#allocation18], 1024
    $region141: #{bert_finetuner_forward.1} parent=1 // pred_fallthru
      _
    // Predicated region
    $region142: #{bert_finetuner_forward.1} parent=1 // pred_check
      _
    $region143: #{bert_finetuner_forward.1} parent=1 // pred_check_branch
      %296 = sbr.rel (0) target = $region145
    $region144: #{bert_finetuner_forward.1} parent=1 // pred_region
      %298 = dma.done [#allocation21], 16
    $region145: #{bert_finetuner_forward.1} parent=1 // pred_fallthru
      _
    // Predicated region
    $region146: #{bert_finetuner_forward.1} parent=1 // pred_check
      _
    $region147: #{bert_finetuner_forward.1} parent=1 // pred_check_branch
      %300 = sbr.rel (0) target = $region149
    $region148: #{bert_finetuner_forward.1} parent=1 // pred_region
      %302 = dma.done [#allocation21], 1024
    $region149: #{bert_finetuner_forward.1} parent=1 // pred_fallthru
      _
    // Predicated region
    $region150: #{bert_finetuner_forward.1} parent=1 // pred_check
      _
    $region151: #{bert_finetuner_forward.1} parent=1 // pred_check_branch
      %304 = sbr.rel (0) target = $region153
    $region152: #{bert_finetuner_forward.1} parent=1 // pred_region
      %306 = dma.done [#allocation24], 16
    $region153: #{bert_finetuner_forward.1} parent=1 // pred_fallthru
      _
    // Predicated region
    $region154: #{bert_finetuner_forward.1} parent=1 // pred_check
      _
    $region155: #{bert_finetuner_forward.1} parent=1 // pred_check_branch
      %308 = sbr.rel (0) target = $region157
    $region156: #{bert_finetuner_forward.1} parent=1 // pred_region
      %310 = dma.done [#allocation24], 1024
    $region157: #{bert_finetuner_forward.1} parent=1 // pred_fallthru
      _
    // Predicated region
    $region158: #{bert_finetuner_forward.1} parent=1 // pred_check
      _
    $region159: #{bert_finetuner_forward.1} parent=1 // pred_check_branch
      %312 = sbr.rel (0) target = $region161
    $region160: #{bert_finetuner_forward.1} parent=1 // pred_region
      %314 = dma.done [#allocation27], 16
    $region161: #{bert_finetuner_forward.1} parent=1 // pred_fallthru
      _
    %v316 = vld [vmem:[%s0] sm:$0xff]
    %v317 = vld [vmem:[%s0 + $0x8] sm:$0xff]
    %v318 = vlaneseq
    %v319 = vand.u32 %v318, 127
    %320 = vset.pattern.permute.xlu0 0
    %321 = vperm.xlu0 %320, %v316
    %v322 = vpop.permute.xlu0 %321
    %323 = vset.pattern.permute.xlu0 0
    %324 = vperm.xlu0 %323, %v317
    %v325 = vpop.permute.xlu0 %324
    %vm326 = vcmp.eq.s32.totalorder %v319, %v322
    %vm327 = vcmp.eq.s32.totalorder %v319, %v325
    %v328 = vsel %vm326, 1, 0
    %v329 = vsel %vm327, 1, 0
    %v330 = vcvt.s32.f32 %v328
    %v331 = vcvt.s32.f32 %v329
    %v332 = vld [vmem:[#allocation5] sm:$0xff]
    %v333 = vld [vmem:[#allocation5 + $0x8] sm:$0xff]
    %v334 = vld [vmem:[#allocation5 + $0x10] sm:$0xff]
    %v335 = vld [vmem:[#allocation5 + $0x18] sm:$0xff]
    %v336 = vld [vmem:[#allocation5 + $0x20] sm:$0xff]
    %v337 = vld [vmem:[#allocation5 + $0x28] sm:$0xff]
    %v338 = vld [vmem:[#allocation5 + $0x30] sm:$0xff]
    %v339 = vld [vmem:[#allocation5 + $0x38] sm:$0xff]
    %v340 = vld [vmem:[#allocation5 + $0x40] sm:$0xff]
    %v341 = vld [vmem:[#allocation5 + $0x48] sm:$0xff]
    %v342 = vld [vmem:[#allocation5 + $0x50] sm:$0xff]
    %v343 = vld [vmem:[#allocation5 + $0x58] sm:$0xff]
    %v344 = vld [vmem:[#allocation5 + $0x60] sm:$0xff]
    %v345 = vld [vmem:[#allocation5 + $0x68] sm:$0xff]
    %v346 = vld [vmem:[#allocation5 + $0x70] sm:$0xff]
    %v347 = vld [vmem:[#allocation5 + $0x78] sm:$0xff]
    %v348 = vld [vmem:[%s3] sm:$0xff]
    %349 = vmatpush.msra.mxu0 %v347
    %350 = vmatpush.msra.mxu0 %v346
    %351 = vmatpush.msra.mxu0 %v345
    %352 = vmatpush.msra.mxu0 %v344
    %353 = vmatpush.msra.mxu0 %v343
    %354 = vmatpush.msra.mxu0 %v342
    %355 = vmatpush.msra.mxu0 %v341
    %356 = vmatpush.msra.mxu0 %v340
    %357 = vmatpush.msra.mxu0 %v339
    %358 = vmatpush.msra.mxu0 %v338
    %359 = vmatpush.msra.mxu0 %v337
    %360 = vmatpush.msra.mxu0 %v336
    %361 = vmatpush.msra.mxu0 %v335
    %362 = vmatpush.msra.mxu0 %v334
    %363 = vmatpush.msra.mxu0 %v333
    %364 = vmatpush.msra.mxu0 %v332
    %365 = vmatmul.f32.gmra.mxu0 %v330
    %v366 = vpop.f32.mrf.mxu0
    %v367 = vadd.f32 %v348, %v366
    %368 = vmatmul.f32.gmra.mxu0 %v331
    %v369 = vpop.f32.mrf.mxu0
    %v370 = vadd.f32 %v348, %v369
    %371 = vdwg.mxu0
    %v372 = vld [vmem:[#allocation7] sm:$0x1]
    %v373 = vld [vmem:[#allocation8] sm:$0x1]
    %374 = vadd.xlane.f32.xlu0 %v367
    %v375 = vpop.xlane.xlu0 %374
    %376 = vadd.xlane.f32.xlu0 %v370
    %v377 = vpop.xlane.xlu0 %376
    %v378 = vrcp.pop 128.0
    %v379 = vmul.f32 128.0, %v378
    %v380 = vsub.f32 1.0, %v379
    %v381 = vmul.f32 %v378, %v380
    %v382 = vadd.f32 %v378, %v381
    %vm383 = vweird.f32 %v378
    %v384 = vsel %vm383, %v378, %v382
    %v385 = vmul.f32 %v375, %v384
    %v386 = vmul.f32 %v377, %v384
    %v387 = vsub.f32 %v367, %v385
    %v388 = vsub.f32 %v370, %v386
    %v389 = vmul.f32 %v387, %v387
    %v390 = vmul.f32 %v388, %v388
    %391 = vadd.xlane.f32.xlu0 %v389
    %v392 = vpop.xlane.xlu0 %391
    %393 = vadd.xlane.f32.xlu0 %v390
    %v394 = vpop.xlane.xlu0 %393
    %v395 = vmul.f32 %v392, %v384
    %v396 = vmul.f32 %v394, %v384
    %v397 = vadd.f32 %v395, 1e-12
    %v398 = vadd.f32 %v396, 1e-12
    %v399 = vrsqrt.pop %v397
    %v400 = vmul.f32 %v399, %v397
    %v401 = vmul.f32 %v400, %v399
    %v402 = vmul.f32 0.5, %v401
    %v403 = vsub.f32 1.5, %v402
    %v404 = vmul.f32 %v399, %v403
    %vm405 = vweird.f32 %v397
    %vm406 = vweird.f32 %v399
    %vm407 = vmor %vm405, %vm406
    %v408 = vsel %vm407, %v399, %v404
    %v409 = vrsqrt.pop %v398
    %v410 = vmul.f32 %v409, %v398
    %v411 = vmul.f32 %v410, %v409
    %v412 = vmul.f32 0.5, %v411
    %v413 = vsub.f32 1.5, %v412
    %v414 = vmul.f32 %v409, %v413
    %vm415 = vweird.f32 %v398
    %vm416 = vweird.f32 %v409
    %vm417 = vmor %vm415, %vm416
    %v418 = vsel %vm417, %v409, %v414
    %v419 = vmul.f32 %v387, %v408
    %v420 = vmul.f32 %v388, %v418
    %v422 = vperm.slane %v372, 0
    %v424 = vmul.f32 %v419, %v422
    %v425 = vmul.f32 %v420, %v422
    %v427 = vperm.slane %v373, 0
    %v429 = vadd.f32 %v424, %v427
    %v430 = vadd.f32 %v425, %v427
    %v431 = vld [vmem:[#allocation2] sm:$0x3]
    %v432 = vcvt.s32.f32 %v431
    %v433 = vsub.f32 %v432, 1.0
    %v434 = vmul.f32 %v433, 10000.0
    %v436 = vrot.slane %v434, 1
    %v437 = vld [vmem:[#allocation10] sm:$0xff]
    %v438 = vld [vmem:[#allocation10 + $0x8] sm:$0xff]
    %v439 = vld [vmem:[#allocation10 + $0x10] sm:$0xff]
    %v440 = vld [vmem:[#allocation10 + $0x18] sm:$0xff]
    %v441 = vld [vmem:[#allocation10 + $0x20] sm:$0xff]
    %v442 = vld [vmem:[#allocation10 + $0x28] sm:$0xff]
    %v443 = vld [vmem:[#allocation10 + $0x30] sm:$0xff]
    %v444 = vld [vmem:[#allocation10 + $0x38] sm:$0xff]
    %v445 = vld [vmem:[#allocation10 + $0x40] sm:$0xff]
    %v446 = vld [vmem:[#allocation10 + $0x48] sm:$0xff]
    %v447 = vld [vmem:[#allocation10 + $0x50] sm:$0xff]
    %v448 = vld [vmem:[#allocation10 + $0x58] sm:$0xff]
    %v449 = vld [vmem:[#allocation10 + $0x60] sm:$0xff]
    %v450 = vld [vmem:[#allocation10 + $0x68] sm:$0xff]
    %v451 = vld [vmem:[#allocation10 + $0x70] sm:$0xff]
    %v452 = vld [vmem:[#allocation10 + $0x78] sm:$0xff]
    %v453 = vld [vmem:[#allocation10 + $0x80] sm:$0xff]
    %v454 = vld [vmem:[#allocation10 + $0x88] sm:$0xff]
    %v455 = vld [vmem:[#allocation10 + $0x90] sm:$0xff]
    %v456 = vld [vmem:[#allocation10 + $0x98] sm:$0xff]
    %v457 = vld [vmem:[#allocation10 + $0xa0] sm:$0xff]
    %v458 = vld [vmem:[#allocation10 + $0xa8] sm:$0xff]
    %v459 = vld [vmem:[#allocation10 + $0xb0] sm:$0xff]
    %v460 = vld [vmem:[#allocation10 + $0xb8] sm:$0xff]
    %v461 = vld [vmem:[#allocation10 + $0xc0] sm:$0xff]
    %v462 = vld [vmem:[#allocation10 + $0xc8] sm:$0xff]
    %v463 = vld [vmem:[#allocation10 + $0xd0] sm:$0xff]
    %v464 = vld [vmem:[#allocation10 + $0xd8] sm:$0xff]
    %v465 = vld [vmem:[#allocation10 + $0xe0] sm:$0xff]
    %v466 = vld [vmem:[#allocation10 + $0xe8] sm:$0xff]
    %v467 = vld [vmem:[#allocation10 + $0xf0] sm:$0xff]
    %v468 = vld [vmem:[#allocation10 + $0xf8] sm:$0xff]
    %v469 = vld [vmem:[#allocation10 + $0x100] sm:$0xff]
    %v470 = vld [vmem:[#allocation10 + $0x108] sm:$0xff]
    %v471 = vld [vmem:[#allocation10 + $0x110] sm:$0xff]
    %v472 = vld [vmem:[#allocation10 + $0x118] sm:$0xff]
    %v473 = vld [vmem:[#allocation10 + $0x120] sm:$0xff]
    %v474 = vld [vmem:[#allocation10 + $0x128] sm:$0xff]
    %v475 = vld [vmem:[#allocation10 + $0x130] sm:$0xff]
    %v476 = vld [vmem:[#allocation10 + $0x138] sm:$0xff]
    %v477 = vld [vmem:[#allocation10 + $0x140] sm:$0xff]
    %v478 = vld [vmem:[#allocation10 + $0x148] sm:$0xff]
    %v479 = vld [vmem:[#allocation10 + $0x150] sm:$0xff]
    %v480 = vld [vmem:[#allocation10 + $0x158] sm:$0xff]
    %v481 = vld [vmem:[#allocation10 + $0x160] sm:$0xff]
    %v482 = vld [vmem:[#allocation10 + $0x168] sm:$0xff]
    %v483 = vld [vmem:[#allocation10 + $0x170] sm:$0xff]
    %v484 = vld [vmem:[#allocation10 + $0x178] sm:$0xff]
    %v485 = vld [vmem:[%s7] sm:$0x3f]
    %v486 = vld [vmem:[#allocation11] sm:$0xf]
    %v487 = vld [vmem:[#allocation11 + $0x4] sm:$0xf]
    %v488 = vld [vmem:[#allocation11 + $0x8] sm:$0xf]
    %v489 = vld [vmem:[#allocation11 + $0xc] sm:$0xf]
    %v490 = vld [vmem:[#allocation11 + $0x10] sm:$0xf]
    %v491 = vld [vmem:[#allocation11 + $0x14] sm:$0xf]
    %v492 = vld [vmem:[#allocation11 + $0x18] sm:$0xf]
    %v493 = vld [vmem:[#allocation11 + $0x1c] sm:$0xf]
    %v494 = vld [vmem:[#allocation11 + $0x20] sm:$0xf]
    %v495 = vld [vmem:[#allocation11 + $0x24] sm:$0xf]
    %v496 = vld [vmem:[#allocation11 + $0x28] sm:$0xf]
    %v497 = vld [vmem:[#allocation11 + $0x2c] sm:$0xf]
    %v498 = vld [vmem:[#allocation11 + $0x30] sm:$0xf]
    %v499 = vld [vmem:[#allocation11 + $0x34] sm:$0xf]
    %v500 = vld [vmem:[#allocation11 + $0x38] sm:$0xf]
    %v501 = vld [vmem:[#allocation11 + $0x3c] sm:$0xf]
    %v502 = vld [vmem:[#allocation11 + $0x40] sm:$0xf]
    %v503 = vld [vmem:[#allocation11 + $0x44] sm:$0xf]
    %v504 = vld [vmem:[#allocation11 + $0x48] sm:$0xf]
    %v505 = vld [vmem:[#allocation11 + $0x4c] sm:$0xf]
    %v506 = vld [vmem:[#allocation11 + $0x50] sm:$0xf]
    %v507 = vld [vmem:[#allocation11 + $0x54] sm:$0xf]
    %v508 = vld [vmem:[#allocation11 + $0x58] sm:$0xf]
    %v509 = vld [vmem:[#allocation11 + $0x5c] sm:$0xf]
    %v510 = vld [vmem:[#allocation11 + $0x60] sm:$0xf]
    %v511 = vld [vmem:[#allocation11 + $0x64] sm:$0xf]
    %v512 = vld [vmem:[#allocation11 + $0x68] sm:$0xf]
    %v513 = vld [vmem:[#allocation11 + $0x6c] sm:$0xf]
    %v514 = vld [vmem:[#allocation11 + $0x70] sm:$0xf]
    %v515 = vld [vmem:[#allocation11 + $0x74] sm:$0xf]
    %v516 = vld [vmem:[#allocation11 + $0x78] sm:$0xf]
    %v517 = vld [vmem:[#allocation11 + $0x7c] sm:$0xf]
    %v518 = vld [vmem:[%s9] sm:$0x1]
    %v519 = vld [vmem:[%s10] sm:$0x1]
    %v520 = vld [vmem:[%s11] sm:$0x1]
    %v521 = vld [vmem:[#allocation13] sm:$0xff]
    %v522 = vld [vmem:[#allocation13 + $0x8] sm:$0xff]
    %v523 = vld [vmem:[#allocation13 + $0x10] sm:$0xff]
    %v524 = vld [vmem:[#allocation13 + $0x18] sm:$0xff]
    %v525 = vld [vmem:[#allocation13 + $0x20] sm:$0xff]
    %v526 = vld [vmem:[#allocation13 + $0x28] sm:$0xff]
    %v527 = vld [vmem:[#allocation13 + $0x30] sm:$0xff]
    %v528 = vld [vmem:[#allocation13 + $0x38] sm:$0xff]
    %v529 = vld [vmem:[#allocation13 + $0x40] sm:$0xff]
    %v530 = vld [vmem:[#allocation13 + $0x48] sm:$0xff]
    %v531 = vld [vmem:[#allocation13 + $0x50] sm:$0xff]
    %v532 = vld [vmem:[#allocation13 + $0x58] sm:$0xff]
    %v533 = vld [vmem:[#allocation13 + $0x60] sm:$0xff]
    %v534 = vld [vmem:[#allocation13 + $0x68] sm:$0xff]
    %v535 = vld [vmem:[#allocation13 + $0x70] sm:$0xff]
    %v536 = vld [vmem:[#allocation13 + $0x78] sm:$0xff]
    %v537 = vld [vmem:[%s13] sm:$0x3]
    %v538 = vld [vmem:[#allocation14] sm:$0xf]
    %v539 = vld [vmem:[#allocation14 + $0x4] sm:$0xf]
    %v540 = vld [vmem:[#allocation14 + $0x8] sm:$0xf]
    %v541 = vld [vmem:[#allocation14 + $0xc] sm:$0xf]
    %v542 = vld [vmem:[#allocation14 + $0x10] sm:$0xf]
    %v543 = vld [vmem:[#allocation14 + $0x14] sm:$0xf]
    %v544 = vld [vmem:[#allocation14 + $0x18] sm:$0xf]
    %v545 = vld [vmem:[#allocation14 + $0x1c] sm:$0xf]
    %v546 = vld [vmem:[#allocation14 + $0x20] sm:$0xf]
    %v547 = vld [vmem:[#allocation14 + $0x24] sm:$0xf]
    %v548 = vld [vmem:[#allocation14 + $0x28] sm:$0xf]
    %v549 = vld [vmem:[#allocation14 + $0x2c] sm:$0xf]
    %v550 = vld [vmem:[#allocation14 + $0x30] sm:$0xf]
    %v551 = vld [vmem:[#allocation14 + $0x34] sm:$0xf]
    %v552 = vld [vmem:[#allocation14 + $0x38] sm:$0xf]
    %v553 = vld [vmem:[#allocation14 + $0x3c] sm:$0xf]
    %v554 = vld [vmem:[#allocation14 + $0x40] sm:$0xf]
    %v555 = vld [vmem:[#allocation14 + $0x44] sm:$0xf]
    %v556 = vld [vmem:[#allocation14 + $0x48] sm:$0xf]
    %v557 = vld [vmem:[#allocation14 + $0x4c] sm:$0xf]
    %v558 = vld [vmem:[#allocation14 + $0x50] sm:$0xf]
    %v559 = vld [vmem:[#allocation14 + $0x54] sm:$0xf]
    %v560 = vld [vmem:[#allocation14 + $0x58] sm:$0xf]
    %v561 = vld [vmem:[#allocation14 + $0x5c] sm:$0xf]
    %v562 = vld [vmem:[#allocation14 + $0x60] sm:$0xf]
    %v563 = vld [vmem:[#allocation14 + $0x64] sm:$0xf]
    %v564 = vld [vmem:[#allocation14 + $0x68] sm:$0xf]
    %v565 = vld [vmem:[#allocation14 + $0x6c] sm:$0xf]
    %v566 = vld [vmem:[#allocation14 + $0x70] sm:$0xf]
    %v567 = vld [vmem:[#allocation14 + $0x74] sm:$0xf]
    %v568 = vld [vmem:[#allocation14 + $0x78] sm:$0xf]
    %v569 = vld [vmem:[#allocation14 + $0x7c] sm:$0xf]
    %v570 = vld [vmem:[#allocation16] sm:$0x1]
    %v571 = vld [vmem:[%s16] sm:$0x1]
    %v572 = vld [vmem:[#allocation17] sm:$0x1]
    %v573 = vpack.c.bf16 %v430, %v429
    %v575 = vperm.slane %v485, 0
    %v576 = vperm.slane %v485, 1
    %v577 = vperm.slane %v485, 2
    %v578 = vperm.slane %v485, 3
    %v579 = vperm.slane %v485, 4
    %v580 = vperm.slane %v485, 5
    %v635 = vunpack.c.l.b16 %v437
    %v636 = vunpack.c.h.b16 %v437
    %v637 = vunpack.c.l.b16 %v438
    %v638 = vunpack.c.h.b16 %v438
    %v639 = vunpack.c.l.b16 %v439
    %v640 = vunpack.c.h.b16 %v439
    %v641 = vunpack.c.l.b16 %v440
    %v642 = vunpack.c.h.b16 %v440
    %v643 = vunpack.c.l.b16 %v441
    %v644 = vunpack.c.h.b16 %v441
    %v645 = vunpack.c.l.b16 %v442
    %v646 = vunpack.c.h.b16 %v442
    %v647 = vunpack.c.l.b16 %v443
    %v648 = vunpack.c.h.b16 %v443
    %v649 = vunpack.c.l.b16 %v444
    %v650 = vunpack.c.h.b16 %v444
    %v651 = vunpack.c.l.b16 %v445
    %v652 = vunpack.c.h.b16 %v445
    %v653 = vunpack.c.l.b16 %v446
    %v654 = vunpack.c.h.b16 %v446
    %v655 = vunpack.c.l.b16 %v447
    %v656 = vunpack.c.h.b16 %v447
    %v657 = vunpack.c.l.b16 %v448
    %v658 = vunpack.c.h.b16 %v448
    %v659 = vunpack.c.l.b16 %v449
    %v660 = vunpack.c.h.b16 %v449
    %v661 = vunpack.c.l.b16 %v450
    %v662 = vunpack.c.h.b16 %v450
    %v663 = vunpack.c.l.b16 %v451
    %v664 = vunpack.c.h.b16 %v451
    %v665 = vunpack.c.l.b16 %v452
    %v666 = vunpack.c.h.b16 %v452
    %v667 = vunpack.c.l.b16 %v453
    %v668 = vunpack.c.h.b16 %v453
    %v669 = vunpack.c.l.b16 %v454
    %v670 = vunpack.c.h.b16 %v454
    %v671 = vunpack.c.l.b16 %v455
    %v672 = vunpack.c.h.b16 %v455
    %v673 = vunpack.c.l.b16 %v456
    %v674 = vunpack.c.h.b16 %v456
    %v675 = vunpack.c.l.b16 %v457
    %v676 = vunpack.c.h.b16 %v457
    %v677 = vunpack.c.l.b16 %v458
    %v678 = vunpack.c.h.b16 %v458
    %v679 = vunpack.c.l.b16 %v459
    %v680 = vunpack.c.h.b16 %v459
    %v681 = vunpack.c.l.b16 %v460
    %v682 = vunpack.c.h.b16 %v460
    %v683 = vunpack.c.l.b16 %v461
    %v684 = vunpack.c.h.b16 %v461
    %v685 = vunpack.c.l.b16 %v462
    %v686 = vunpack.c.h.b16 %v462
    %v687 = vunpack.c.l.b16 %v463
    %v688 = vunpack.c.h.b16 %v463
    %v689 = vunpack.c.l.b16 %v464
    %v690 = vunpack.c.h.b16 %v464
    %v691 = vunpack.c.l.b16 %v465
    %v692 = vunpack.c.h.b16 %v465
    %v693 = vunpack.c.l.b16 %v466
    %v694 = vunpack.c.h.b16 %v466
    %v695 = vunpack.c.l.b16 %v467
    %v696 = vunpack.c.h.b16 %v467
    %v697 = vunpack.c.l.b16 %v468
    %v698 = vunpack.c.h.b16 %v468
    %v699 = vunpack.c.l.b16 %v469
    %v700 = vunpack.c.h.b16 %v469
    %v701 = vunpack.c.l.b16 %v470
    %v702 = vunpack.c.h.b16 %v470
    %v703 = vunpack.c.l.b16 %v471
    %v704 = vunpack.c.h.b16 %v471
    %v705 = vunpack.c.l.b16 %v472
    %v706 = vunpack.c.h.b16 %v472
    %v707 = vunpack.c.l.b16 %v473
    %v708 = vunpack.c.h.b16 %v473
    %v709 = vunpack.c.l.b16 %v474
    %v710 = vunpack.c.h.b16 %v474
    %v711 = vunpack.c.l.b16 %v475
    %v712 = vunpack.c.h.b16 %v475
    %v713 = vunpack.c.l.b16 %v476
    %v714 = vunpack.c.h.b16 %v476
    %v715 = vunpack.c.l.b16 %v477
    %v716 = vunpack.c.h.b16 %v477
    %v717 = vunpack.c.l.b16 %v478
    %v718 = vunpack.c.h.b16 %v478
    %v719 = vunpack.c.l.b16 %v479
    %v720 = vunpack.c.h.b16 %v479
    %v721 = vunpack.c.l.b16 %v480
    %v722 = vunpack.c.h.b16 %v480
    %v723 = vunpack.c.l.b16 %v481
    %v724 = vunpack.c.h.b16 %v481
    %v725 = vunpack.c.l.b16 %v482
    %v726 = vunpack.c.h.b16 %v482
    %v727 = vunpack.c.l.b16 %v483
    %v728 = vunpack.c.h.b16 %v483
    %v729 = vunpack.c.l.b16 %v484
    %v730 = vunpack.c.h.b16 %v484
    %v731 = vpack.c.b16 %v641, %v635
    %v732 = vpack.c.b16 %v642, %v636
    %v733 = vpack.c.b16 %v643, %v637
    %v734 = vpack.c.b16 %v644, %v638
    %v735 = vpack.c.b16 %v645, %v639
    %v736 = vpack.c.b16 %v646, %v640
    %v737 = vpack.c.b16 %v653, %v647
    %v738 = vpack.c.b16 %v654, %v648
    %v739 = vpack.c.b16 %v655, %v649
    %v740 = vpack.c.b16 %v656, %v650
    %v741 = vpack.c.b16 %v657, %v651
    %v742 = vpack.c.b16 %v658, %v652
    %v743 = vpack.c.b16 %v665, %v659
    %v744 = vpack.c.b16 %v666, %v660
    %v745 = vpack.c.b16 %v667, %v661
    %v746 = vpack.c.b16 %v668, %v662
    %v747 = vpack.c.b16 %v669, %v663
    %v748 = vpack.c.b16 %v670, %v664
    %v749 = vpack.c.b16 %v677, %v671
    %v750 = vpack.c.b16 %v678, %v672
    %v751 = vpack.c.b16 %v679, %v673
    %v752 = vpack.c.b16 %v680, %v674
    %v753 = vpack.c.b16 %v681, %v675
    %v754 = vpack.c.b16 %v682, %v676
    %v755 = vpack.c.b16 %v689, %v683
    %v756 = vpack.c.b16 %v690, %v684
    %v757 = vpack.c.b16 %v691, %v685
    %v758 = vpack.c.b16 %v692, %v686
    %v759 = vpack.c.b16 %v693, %v687
    %v760 = vpack.c.b16 %v694, %v688
    %v761 = vpack.c.b16 %v701, %v695
    %v762 = vpack.c.b16 %v702, %v696
    %v763 = vpack.c.b16 %v703, %v697
    %v764 = vpack.c.b16 %v704, %v698
    %v765 = vpack.c.b16 %v705, %v699
    %v766 = vpack.c.b16 %v706, %v700
    %v767 = vpack.c.b16 %v713, %v707
    %v768 = vpack.c.b16 %v714, %v708
    %v769 = vpack.c.b16 %v715, %v709
    %v770 = vpack.c.b16 %v716, %v710
    %v771 = vpack.c.b16 %v717, %v711
    %v772 = vpack.c.b16 %v718, %v712
    %v773 = vpack.c.b16 %v725, %v719
    %v774 = vpack.c.b16 %v726, %v720
    %v775 = vpack.c.b16 %v727, %v721
    %v776 = vpack.c.b16 %v728, %v722
    %v777 = vpack.c.b16 %v729, %v723
    %v778 = vpack.c.b16 %v730, %v724
    %827 = vmatpush.bf16.msra.mxu0 %v773
    %828 = vmatpush.bf16.msra.mxu0 %v767
    %829 = vmatpush.bf16.msra.mxu0 %v761
    %830 = vmatpush.bf16.msra.mxu0 %v755
    %831 = vmatpush.bf16.msra.mxu0 %v749
    %832 = vmatpush.bf16.msra.mxu0 %v743
    %833 = vmatpush.bf16.msra.mxu0 %v737
    %834 = vmatpush.bf16.msra.mxu0 %v731
    %835 = vmatmul.bf16.gmra.mxu0 %v573
    %v836 = vpop.f32.mrf.mxu0
    %v837 = vadd.f32 %v575, %v836
    %v838 = vpop.f32.mrf.mxu0
    %v839 = vadd.f32 %v575, %v838
    %840 = vdwg.mxu0
    %841 = vmatpush.bf16.msra.mxu0 %v774
    %842 = vmatpush.bf16.msra.mxu0 %v768
    %843 = vmatpush.bf16.msra.mxu0 %v762
    %844 = vmatpush.bf16.msra.mxu0 %v756
    %845 = vmatpush.bf16.msra.mxu0 %v750
    %846 = vmatpush.bf16.msra.mxu0 %v744
    %847 = vmatpush.bf16.msra.mxu0 %v738
    %848 = vmatpush.bf16.msra.mxu0 %v732
    %849 = vmatmul.bf16.gmra.mxu0 %v573
    %v850 = vpop.f32.mrf.mxu0
    %v851 = vadd.f32 %v576, %v850
    %v852 = vpop.f32.mrf.mxu0
    %v853 = vadd.f32 %v576, %v852
    %854 = vdwg.mxu0
    %855 = vmatpush.bf16.msra.mxu0 %v775
    %856 = vmatpush.bf16.msra.mxu0 %v769
    %857 = vmatpush.bf16.msra.mxu0 %v763
    %858 = vmatpush.bf16.msra.mxu0 %v757
    %859 = vmatpush.bf16.msra.mxu0 %v751
    %860 = vmatpush.bf16.msra.mxu0 %v745
    %861 = vmatpush.bf16.msra.mxu0 %v739
    %862 = vmatpush.bf16.msra.mxu0 %v733
    %863 = vmatmul.bf16.gmra.mxu0 %v573
    %v864 = vpop.f32.mrf.mxu0
    %v865 = vadd.f32 %v577, %v864
    %v866 = vpop.f32.mrf.mxu0
    %v867 = vadd.f32 %v577, %v866
    %868 = vdwg.mxu0
    %869 = vmatpush.bf16.msra.mxu0 %v776
    %870 = vmatpush.bf16.msra.mxu0 %v770
    %871 = vmatpush.bf16.msra.mxu0 %v764
    %872 = vmatpush.bf16.msra.mxu0 %v758
    %873 = vmatpush.bf16.msra.mxu0 %v752
    %874 = vmatpush.bf16.msra.mxu0 %v746
    %875 = vmatpush.bf16.msra.mxu0 %v740
    %876 = vmatpush.bf16.msra.mxu0 %v734
    %877 = vmatmul.bf16.gmra.mxu0 %v573
    %v878 = vpop.f32.mrf.mxu0
    %v879 = vadd.f32 %v578, %v878
    %v880 = vpop.f32.mrf.mxu0
    %v881 = vadd.f32 %v578, %v880
    %882 = vdwg.mxu0
    %883 = vmatpush.bf16.msra.mxu0 %v777
    %884 = vmatpush.bf16.msra.mxu0 %v771
    %885 = vmatpush.bf16.msra.mxu0 %v765
    %886 = vmatpush.bf16.msra.mxu0 %v759
    %887 = vmatpush.bf16.msra.mxu0 %v753
    %888 = vmatpush.bf16.msra.mxu0 %v747
    %889 = vmatpush.bf16.msra.mxu0 %v741
    %890 = vmatpush.bf16.msra.mxu0 %v735
    %891 = vmatmul.bf16.gmra.mxu0 %v573
    %v892 = vpop.f32.mrf.mxu0
    %v893 = vadd.f32 %v579, %v892
    %v894 = vpop.f32.mrf.mxu0
    %v895 = vadd.f32 %v579, %v894
    %896 = vdwg.mxu0
    %897 = vmatpush.bf16.msra.mxu0 %v778
    %898 = vmatpush.bf16.msra.mxu0 %v772
    %899 = vmatpush.bf16.msra.mxu0 %v766
    %900 = vmatpush.bf16.msra.mxu0 %v760
    %901 = vmatpush.bf16.msra.mxu0 %v754
    %902 = vmatpush.bf16.msra.mxu0 %v748
    %903 = vmatpush.bf16.msra.mxu0 %v742
    %904 = vmatpush.bf16.msra.mxu0 %v736
    %905 = vmatmul.bf16.gmra.mxu0 %v573
    %v906 = vpop.f32.mrf.mxu0
    %v907 = vadd.f32 %v580, %v906
    %v908 = vpop.f32.mrf.mxu0
    %v909 = vadd.f32 %v580, %v908
    %910 = vdwg.mxu0
    %v911 = vpack.c.bf16 %v837, %v837
    %v912 = vpack.c.bf16 %v839, %v839
    %v913 = vpack.c.bf16 %v851, %v851
    %v914 = vpack.c.bf16 %v853, %v853
    %v915 = vpack.c.bf16 %v865, %v865
    %v916 = vpack.c.bf16 %v867, %v867
    %v917 = vpack.c.bf16 %v879, %v879
    %v918 = vpack.c.bf16 %v881, %v881
    %v919 = vpack.c.bf16 %v893, %v893
    %v920 = vpack.c.bf16 %v895, %v895
    %v921 = vpack.c.bf16 %v907, %v907
    %v922 = vpack.c.bf16 %v909, %v909
    %923 = vmatpush.bf16.xpose.msra.mxu0 0
    %924 = vmatpush.bf16.xpose.msra.mxu0 0
    %925 = vmatpush.bf16.xpose.msra.mxu0 0
    %926 = vmatpush.bf16.xpose.msra.mxu0 0
    %927 = vmatpush.bf16.xpose.msra.mxu0 0
    %928 = vmatpush.bf16.xpose.msra.mxu0 0
    %929 = vmatpush.bf16.xpose.msra.mxu0 0
    %930 = vmatpush.bf16.xpose.msra.mxu0 %v915
    %931 = vmatmul.bf16.gmra.mxu0 %v911
    %v932 = vpop.f32.mrf.mxu0
    %v933 = vadd.f32 0.0, %v932
    %v934 = vpop.f32.mrf.mxu0
    %935 = vdwg.mxu0
    %936 = vmatpush.bf16.xpose.msra.mxu0 0
    %937 = vmatpush.bf16.xpose.msra.mxu0 0
    %938 = vmatpush.bf16.xpose.msra.mxu0 0
    %939 = vmatpush.bf16.xpose.msra.mxu0 0
    %940 = vmatpush.bf16.xpose.msra.mxu0 0
    %941 = vmatpush.bf16.xpose.msra.mxu0 0
    %942 = vmatpush.bf16.xpose.msra.mxu0 0
    %943 = vmatpush.bf16.xpose.msra.mxu0 %v916
    %944 = vmatmul.bf16.gmra.mxu0 %v912
    %v945 = vpop.f32.mrf.mxu0
    %v946 = vadd.f32 0.0, %v945
    %v947 = vpop.f32.mrf.mxu0
    %948 = vdwg.mxu0
    %949 = vmatpush.bf16.xpose.msra.mxu0 0
    %950 = vmatpush.bf16.xpose.msra.mxu0 0
    %951 = vmatpush.bf16.xpose.msra.mxu0 0
    %952 = vmatpush.bf16.xpose.msra.mxu0 0
    %953 = vmatpush.bf16.xpose.msra.mxu0 0
    %954 = vmatpush.bf16.xpose.msra.mxu0 0
    %955 = vmatpush.bf16.xpose.msra.mxu0 0
    %956 = vmatpush.bf16.xpose.msra.mxu0 %v917
    %957 = vmatmul.bf16.gmra.mxu0 %v913
    %v958 = vpop.f32.mrf.mxu0
    %v959 = vadd.f32 0.0, %v958
    %v960 = vpop.f32.mrf.mxu0
    %961 = vdwg.mxu0
    %962 = vmatpush.bf16.xpose.msra.mxu0 0
    %963 = vmatpush.bf16.xpose.msra.mxu0 0
    %964 = vmatpush.bf16.xpose.msra.mxu0 0
    %965 = vmatpush.bf16.xpose.msra.mxu0 0
    %966 = vmatpush.bf16.xpose.msra.mxu0 0
    %967 = vmatpush.bf16.xpose.msra.mxu0 0
    %968 = vmatpush.bf16.xpose.msra.mxu0 0
    %969 = vmatpush.bf16.xpose.msra.mxu0 %v918
    %970 = vmatmul.bf16.gmra.mxu0 %v914
    %v971 = vpop.f32.mrf.mxu0
    %v972 = vadd.f32 0.0, %v971
    %v973 = vpop.f32.mrf.mxu0
    %974 = vdwg.mxu0
    %v975 = vmul.f32 %v933, 0.125
    %v976 = vmul.f32 %v946, 0.125
    %v977 = vmul.f32 %v959, 0.125
    %v978 = vmul.f32 %v972, 0.125
    %v979 = vperm.slane %v434, 0
    %v980 = vperm.slane %v436, 0
    %v983 = vadd.f32 %v975, %v979
    %v984 = vadd.f32 %v976, %v980
    %v985 = vadd.f32 %v977, %v979
    %v986 = vadd.f32 %v978, %v980
    %vm987 = vcmask 64512
    %v988 = vsel %vm987, %v983, -inf
    %989 = vmax.xlane.f32.xlu0 %v988
    %v990 = vpop.xlane.xlu0 %989
    %v991 = vsel %vm987, %v984, -inf
    %992 = vmax.xlane.f32.xlu0 %v991
    %v993 = vpop.xlane.xlu0 %992
    %v994 = vsel %vm987, %v985, -inf
    %995 = vmax.xlane.f32.xlu0 %v994
    %v996 = vpop.xlane.xlu0 %995
    %v997 = vsel %vm987, %v986, -inf
    %998 = vmax.xlane.f32.xlu0 %v997
    %v999 = vpop.xlane.xlu0 %998
    %v1000 = vsub.f32 %v983, %v990
    %v1001 = vsub.f32 %v984, %v993
    %v1002 = vsub.f32 %v985, %v996
    %v1003 = vsub.f32 %v986, %v999
    %v1004 = vmul.f32 %v1000, 1.442695
    %v1005 = vpow.pop %v1004
    %v1006 = vmul.f32 %v1001, 1.442695
    %v1007 = vpow.pop %v1006
    %v1008 = vmul.f32 %v1002, 1.442695
    %v1009 = vpow.pop %v1008
    %v1010 = vmul.f32 %v1003, 1.442695
    %v1011 = vpow.pop %v1010
    %v1012 = vsel %vm987, %v1005, 0.0
    %1013 = vadd.xlane.f32.xlu0 %v1012
    %v1014 = vpop.xlane.xlu0 %1013
    %v1015 = vsel %vm987, %v1007, 0.0
    %1016 = vadd.xlane.f32.xlu0 %v1015
    %v1017 = vpop.xlane.xlu0 %1016
    %v1018 = vsel %vm987, %v1009, 0.0
    %1019 = vadd.xlane.f32.xlu0 %v1018
    %v1020 = vpop.xlane.xlu0 %1019
    %v1021 = vsel %vm987, %v1011, 0.0
    %1022 = vadd.xlane.f32.xlu0 %v1021
    %v1023 = vpop.xlane.xlu0 %1022
    %v1024 = vrcp.pop %v1014
    %v1025 = vrcp.pop %v1017
    %v1026 = vrcp.pop %v1020
    %v1027 = vrcp.pop %v1023
    %v1028 = vmul.f32 %v1005, %v1024
    %v1029 = vmul.f32 %v1007, %v1025
    %v1030 = vmul.f32 %v1009, %v1026
    %v1031 = vmul.f32 %v1011, %v1027
    %v1032 = vpack.c.bf16 %v1028, %v1028
    %v1033 = vpack.c.bf16 %v1029, %v1029
    %v1034 = vpack.c.bf16 %v1030, %v1030
    %v1035 = vpack.c.bf16 %v1031, %v1031
    %v1037 = vsel %vm987, %v1032, 0
    %vm1039 = vcmask 1043456
    %v1041 = vsel %vm1039, %v919, 0
    %1043 = vmatpush.bf16.msra.mxu0 0
    %1044 = vmatpush.bf16.msra.mxu0 0
    %1045 = vmatpush.bf16.msra.mxu0 0
    %1046 = vmatpush.bf16.msra.mxu0 0
    %1047 = vmatpush.bf16.msra.mxu0 0
    %1048 = vmatpush.bf16.msra.mxu0 0
    %1049 = vmatpush.bf16.msra.mxu0 0
    %1050 = vmatpush.bf16.msra.mxu0 %v1041
    %1051 = vmatmul.bf16.gmra.mxu0 %v1037
    %v1052 = vpop.f32.mrf.mxu0
    %v1053 = vadd.f32 0.0, %v1052
    %v1054 = vpop.f32.mrf.mxu0
    %1055 = vdwg.mxu0
    %v1057 = vsel %vm987, %v1033, 0
    %v1060 = vsel %vm1039, %v920, 0
    %1062 = vmatpush.bf16.msra.mxu0 0
    %1063 = vmatpush.bf16.msra.mxu0 0
    %1064 = vmatpush.bf16.msra.mxu0 0
    %1065 = vmatpush.bf16.msra.mxu0 0
    %1066 = vmatpush.bf16.msra.mxu0 0
    %1067 = vmatpush.bf16.msra.mxu0 0
    %1068 = vmatpush.bf16.msra.mxu0 0
    %1069 = vmatpush.bf16.msra.mxu0 %v1060
    %1070 = vmatmul.bf16.gmra.mxu0 %v1057
    %v1071 = vpop.f32.mrf.mxu0
    %v1072 = vadd.f32 0.0, %v1071
    %v1073 = vpop.f32.mrf.mxu0
    %1074 = vdwg.mxu0
    %v1076 = vsel %vm987, %v1034, 0
    %v1079 = vsel %vm1039, %v921, 0
    %1081 = vmatpush.bf16.msra.mxu0 0
    %1082 = vmatpush.bf16.msra.mxu0 0
    %1083 = vmatpush.bf16.msra.mxu0 0
    %1084 = vmatpush.bf16.msra.mxu0 0
    %1085 = vmatpush.bf16.msra.mxu0 0
    %1086 = vmatpush.bf16.msra.mxu0 0
    %1087 = vmatpush.bf16.msra.mxu0 0
    %1088 = vmatpush.bf16.msra.mxu0 %v1079
    %1089 = vmatmul.bf16.gmra.mxu0 %v1076
    %v1090 = vpop.f32.mrf.mxu0
    %v1091 = vadd.f32 0.0, %v1090
    %v1092 = vpop.f32.mrf.mxu0
    %1093 = vdwg.mxu0
    %v1095 = vsel %vm987, %v1035, 0
    %v1098 = vsel %vm1039, %v922, 0
    %1100 = vmatpush.bf16.msra.mxu0 0
    %1101 = vmatpush.bf16.msra.mxu0 0
    %1102 = vmatpush.bf16.msra.mxu0 0
    %1103 = vmatpush.bf16.msra.mxu0 0
    %1104 = vmatpush.bf16.msra.mxu0 0
    %1105 = vmatpush.bf16.msra.mxu0 0
    %1106 = vmatpush.bf16.msra.mxu0 0
    %1107 = vmatpush.bf16.msra.mxu0 %v1098
    %1108 = vmatmul.bf16.gmra.mxu0 %v1095
    %v1109 = vpop.f32.mrf.mxu0
    %v1110 = vadd.f32 0.0, %v1109
    %v1111 = vpop.f32.mrf.mxu0
    %1112 = vdwg.mxu0
    %v1113 = vpack.c.bf16 %v1072, %v1053
    %v1114 = vpack.c.bf16 %v1110, %v1091
    %v1116 = vperm.slane %v518, 0
    %v1150 = vunpack.c.l.b16 %v486
    %v1151 = vunpack.c.l.b16 %v487
    %v1152 = vunpack.c.l.b16 %v488
    %v1153 = vunpack.c.l.b16 %v489
    %v1154 = vunpack.c.l.b16 %v490
    %v1155 = vunpack.c.l.b16 %v491
    %v1156 = vunpack.c.l.b16 %v492
    %v1157 = vunpack.c.l.b16 %v493
    %v1158 = vunpack.c.l.b16 %v494
    %v1159 = vunpack.c.l.b16 %v495
    %v1160 = vunpack.c.l.b16 %v496
    %v1161 = vunpack.c.l.b16 %v497
    %v1162 = vunpack.c.l.b16 %v498
    %v1163 = vunpack.c.l.b16 %v499
    %v1164 = vunpack.c.l.b16 %v500
    %v1165 = vunpack.c.l.b16 %v501
    %v1166 = vunpack.c.l.b16 %v502
    %v1167 = vunpack.c.l.b16 %v503
    %v1168 = vunpack.c.l.b16 %v504
    %v1169 = vunpack.c.l.b16 %v505
    %v1170 = vunpack.c.l.b16 %v506
    %v1171 = vunpack.c.l.b16 %v507
    %v1172 = vunpack.c.l.b16 %v508
    %v1173 = vunpack.c.l.b16 %v509
    %v1174 = vunpack.c.l.b16 %v510
    %v1175 = vunpack.c.l.b16 %v511
    %v1176 = vunpack.c.l.b16 %v512
    %v1177 = vunpack.c.l.b16 %v513
    %v1178 = vunpack.c.l.b16 %v514
    %v1179 = vunpack.c.l.b16 %v515
    %v1180 = vunpack.c.l.b16 %v516
    %v1181 = vunpack.c.l.b16 %v517
    %v1182 = vpack.c.b16 %v1151, %v1150
    %v1183 = vpack.c.b16 %v1153, %v1152
    %v1184 = vpack.c.b16 %v1155, %v1154
    %v1185 = vpack.c.b16 %v1157, %v1156
    %v1186 = vpack.c.b16 %v1159, %v1158
    %v1187 = vpack.c.b16 %v1161, %v1160
    %v1188 = vpack.c.b16 %v1163, %v1162
    %v1189 = vpack.c.b16 %v1165, %v1164
    %v1190 = vpack.c.b16 %v1167, %v1166
    %v1191 = vpack.c.b16 %v1169, %v1168
    %v1192 = vpack.c.b16 %v1171, %v1170
    %v1193 = vpack.c.b16 %v1173, %v1172
    %v1194 = vpack.c.b16 %v1175, %v1174
    %v1195 = vpack.c.b16 %v1177, %v1176
    %v1196 = vpack.c.b16 %v1179, %v1178
    %v1197 = vpack.c.b16 %v1181, %v1180
    %1214 = vmatpush.bf16.msra.mxu0 %v1189
    %1215 = vmatpush.bf16.msra.mxu0 %v1188
    %1216 = vmatpush.bf16.msra.mxu0 %v1187
    %1217 = vmatpush.bf16.msra.mxu0 %v1186
    %1218 = vmatpush.bf16.msra.mxu0 %v1185
    %1219 = vmatpush.bf16.msra.mxu0 %v1184
    %1220 = vmatpush.bf16.msra.mxu0 %v1183
    %1221 = vmatpush.bf16.msra.mxu0 %v1182
    %1222 = vmatmul.bf16.gmra.mxu0 %v1113
    %v1223 = vpop.f32.mrf.mxu0
    %v1224 = vadd.f32 %v1116, %v1223
    %v1225 = vpop.f32.mrf.mxu0
    %v1226 = vadd.f32 %v1116, %v1225
    %1227 = vdwg.mxu0
    %1228 = vmatpush.bf16.msra.mxu0 %v1197
    %1229 = vmatpush.bf16.msra.mxu0 %v1196
    %1230 = vmatpush.bf16.msra.mxu0 %v1195
    %1231 = vmatpush.bf16.msra.mxu0 %v1194
    %1232 = vmatpush.bf16.msra.mxu0 %v1193
    %1233 = vmatpush.bf16.msra.mxu0 %v1192
    %1234 = vmatpush.bf16.msra.mxu0 %v1191
    %1235 = vmatpush.bf16.msra.mxu0 %v1190
    %1236 = vmatmul.bf16.gmra.mxu0 %v1114
    %v1237 = vpop.f32.mrf.mxu0
    %v1238 = vadd.f32 %v1224, %v1237
    %v1239 = vpop.f32.mrf.mxu0
    %v1240 = vadd.f32 %v1226, %v1239
    %1241 = vdwg.mxu0
    %v1242 = vadd.f32 %v429, %v1238
    %v1243 = vadd.f32 %v430, %v1240
    %1244 = vadd.xlane.f32.xlu0 %v1242
    %v1245 = vpop.xlane.xlu0 %1244
    %1246 = vadd.xlane.f32.xlu0 %v1243
    %v1247 = vpop.xlane.xlu0 %1246
    %v1248 = vmul.f32 %v1245, %v384
    %v1249 = vmul.f32 %v1247, %v384
    %v1250 = vsub.f32 %v1242, %v1248
    %v1251 = vsub.f32 %v1243, %v1249
    %v1252 = vmul.f32 %v1250, %v1250
    %v1253 = vmul.f32 %v1251, %v1251
    %1254 = vadd.xlane.f32.xlu0 %v1252
    %v1255 = vpop.xlane.xlu0 %1254
    %1256 = vadd.xlane.f32.xlu0 %v1253
    %v1257 = vpop.xlane.xlu0 %1256
    %v1258 = vmul.f32 %v1255, %v384
    %v1259 = vmul.f32 %v1257, %v384
    %v1260 = vadd.f32 %v1258, 1e-12
    %v1261 = vadd.f32 %v1259, 1e-12
    %v1262 = vrsqrt.pop %v1260
    %v1263 = vmul.f32 %v1262, %v1260
    %v1264 = vmul.f32 %v1263, %v1262
    %v1265 = vmul.f32 0.5, %v1264
    %v1266 = vsub.f32 1.5, %v1265
    %v1267 = vmul.f32 %v1262, %v1266
    %vm1268 = vweird.f32 %v1260
    %vm1269 = vweird.f32 %v1262
    %vm1270 = vmor %vm1268, %vm1269
    %v1271 = vsel %vm1270, %v1262, %v1267
    %v1272 = vrsqrt.pop %v1261
    %v1273 = vmul.f32 %v1272, %v1261
    %v1274 = vmul.f32 %v1273, %v1272
    %v1275 = vmul.f32 0.5, %v1274
    %v1276 = vsub.f32 1.5, %v1275
    %v1277 = vmul.f32 %v1272, %v1276
    %vm1278 = vweird.f32 %v1261
    %vm1279 = vweird.f32 %v1272
    %vm1280 = vmor %vm1278, %vm1279
    %v1281 = vsel %vm1280, %v1272, %v1277
    %v1282 = vmul.f32 %v1250, %v1271
    %v1283 = vmul.f32 %v1251, %v1281
    %v1285 = vperm.slane %v519, 0
    %v1287 = vmul.f32 %v1282, %v1285
    %v1288 = vmul.f32 %v1283, %v1285
    %v1290 = vperm.slane %v520, 0
    %v1292 = vadd.f32 %v1287, %v1290
    %v1293 = vadd.f32 %v1288, %v1290
    %v1294 = vpack.c.bf16 %v1293, %v1292
    %v1296 = vperm.slane %v537, 0
    %v1297 = vperm.slane %v537, 1
    %v1316 = vunpack.c.l.b16 %v521
    %v1317 = vunpack.c.h.b16 %v521
    %v1318 = vunpack.c.l.b16 %v522
    %v1319 = vunpack.c.h.b16 %v522
    %v1320 = vunpack.c.l.b16 %v523
    %v1321 = vunpack.c.h.b16 %v523
    %v1322 = vunpack.c.l.b16 %v524
    %v1323 = vunpack.c.h.b16 %v524
    %v1324 = vunpack.c.l.b16 %v525
    %v1325 = vunpack.c.h.b16 %v525
    %v1326 = vunpack.c.l.b16 %v526
    %v1327 = vunpack.c.h.b16 %v526
    %v1328 = vunpack.c.l.b16 %v527
    %v1329 = vunpack.c.h.b16 %v527
    %v1330 = vunpack.c.l.b16 %v528
    %v1331 = vunpack.c.h.b16 %v528
    %v1332 = vunpack.c.l.b16 %v529
    %v1333 = vunpack.c.h.b16 %v529
    %v1334 = vunpack.c.l.b16 %v530
    %v1335 = vunpack.c.h.b16 %v530
    %v1336 = vunpack.c.l.b16 %v531
    %v1337 = vunpack.c.h.b16 %v531
    %v1338 = vunpack.c.l.b16 %v532
    %v1339 = vunpack.c.h.b16 %v532
    %v1340 = vunpack.c.l.b16 %v533
    %v1341 = vunpack.c.h.b16 %v533
    %v1342 = vunpack.c.l.b16 %v534
    %v1343 = vunpack.c.h.b16 %v534
    %v1344 = vunpack.c.l.b16 %v535
    %v1345 = vunpack.c.h.b16 %v535
    %v1346 = vunpack.c.l.b16 %v536
    %v1347 = vunpack.c.h.b16 %v536
    %v1348 = vpack.c.b16 %v1318, %v1316
    %v1349 = vpack.c.b16 %v1319, %v1317
    %v1350 = vpack.c.b16 %v1322, %v1320
    %v1351 = vpack.c.b16 %v1323, %v1321
    %v1352 = vpack.c.b16 %v1326, %v1324
    %v1353 = vpack.c.b16 %v1327, %v1325
    %v1354 = vpack.c.b16 %v1330, %v1328
    %v1355 = vpack.c.b16 %v1331, %v1329
    %v1356 = vpack.c.b16 %v1334, %v1332
    %v1357 = vpack.c.b16 %v1335, %v1333
    %v1358 = vpack.c.b16 %v1338, %v1336
    %v1359 = vpack.c.b16 %v1339, %v1337
    %v1360 = vpack.c.b16 %v1342, %v1340
    %v1361 = vpack.c.b16 %v1343, %v1341
    %v1362 = vpack.c.b16 %v1346, %v1344
    %v1363 = vpack.c.b16 %v1347, %v1345
    %1380 = vmatpush.bf16.msra.mxu0 %v1362
    %1381 = vmatpush.bf16.msra.mxu0 %v1360
    %1382 = vmatpush.bf16.msra.mxu0 %v1358
    %1383 = vmatpush.bf16.msra.mxu0 %v1356
    %1384 = vmatpush.bf16.msra.mxu0 %v1354
    %1385 = vmatpush.bf16.msra.mxu0 %v1352
    %1386 = vmatpush.bf16.msra.mxu0 %v1350
    %1387 = vmatpush.bf16.msra.mxu0 %v1348
    %1388 = vmatmul.bf16.gmra.mxu0 %v1294
    %v1389 = vpop.f32.mrf.mxu0
    %v1390 = vadd.f32 %v1296, %v1389
    %v1391 = vpop.f32.mrf.mxu0
    %v1392 = vadd.f32 %v1296, %v1391
    %1393 = vdwg.mxu0
    %1394 = vmatpush.bf16.msra.mxu0 %v1363
    %1395 = vmatpush.bf16.msra.mxu0 %v1361
    %1396 = vmatpush.bf16.msra.mxu0 %v1359
    %1397 = vmatpush.bf16.msra.mxu0 %v1357
    %1398 = vmatpush.bf16.msra.mxu0 %v1355
    %1399 = vmatpush.bf16.msra.mxu0 %v1353
    %1400 = vmatpush.bf16.msra.mxu0 %v1351
    %1401 = vmatpush.bf16.msra.mxu0 %v1349
    %1402 = vmatmul.bf16.gmra.mxu0 %v1294
    %v1403 = vpop.f32.mrf.mxu0
    %v1404 = vadd.f32 %v1297, %v1403
    %v1405 = vpop.f32.mrf.mxu0
    %v1406 = vadd.f32 %v1297, %v1405
    %1407 = vdwg.mxu0
    %v1408 = vmul.f32 %v1390, 0.5
    %v1409 = vmul.f32 %v1404, 0.5
    %v1410 = vmul.f32 %v1392, 0.5
    %v1411 = vmul.f32 %v1406, 0.5
    %v1412 = vmul.f32 %v1390, 0.044715
    %v1413 = vmul.f32 %v1404, 0.044715
    %v1414 = vmul.f32 %v1392, 0.044715
    %v1415 = vmul.f32 %v1406, 0.044715
    %v1416 = vmul.f32 %v1412, %v1390
    %v1417 = vmul.f32 %v1413, %v1404
    %v1418 = vmul.f32 %v1414, %v1392
    %v1419 = vmul.f32 %v1415, %v1406
    %v1420 = vmul.f32 %v1416, %v1390
    %v1421 = vmul.f32 %v1417, %v1404
    %v1422 = vmul.f32 %v1418, %v1392
    %v1423 = vmul.f32 %v1419, %v1406
    %v1424 = vadd.f32 %v1390, %v1420
    %v1425 = vadd.f32 %v1404, %v1421
    %v1426 = vadd.f32 %v1392, %v1422
    %v1427 = vadd.f32 %v1406, %v1423
    %v1428 = vmul.f32 %v1424, 0.7978846
    %v1429 = vmul.f32 %v1425, 0.7978846
    %v1430 = vmul.f32 %v1426, 0.7978846
    %v1431 = vmul.f32 %v1427, 0.7978846
    %v1432 = vtanh.pop %v1428
    %v1433 = vtanh.pop %v1429
    %v1434 = vtanh.pop %v1430
    %v1435 = vtanh.pop %v1431
    %v1436 = vadd.f32 %v1432, 1.0
    %v1437 = vadd.f32 %v1433, 1.0
    %v1438 = vadd.f32 %v1434, 1.0
    %v1439 = vadd.f32 %v1435, 1.0
    %v1440 = vmul.f32 %v1408, %v1436
    %v1441 = vmul.f32 %v1409, %v1437
    %v1442 = vmul.f32 %v1410, %v1438
    %v1443 = vmul.f32 %v1411, %v1439
    %v1444 = vpack.c.bf16 %v1442, %v1440
    %v1445 = vpack.c.bf16 %v1443, %v1441
    %v1447 = vperm.slane %v570, 0
    %v1481 = vunpack.c.l.b16 %v538
    %v1482 = vunpack.c.l.b16 %v539
    %v1483 = vunpack.c.l.b16 %v540
    %v1484 = vunpack.c.l.b16 %v541
    %v1485 = vunpack.c.l.b16 %v542
    %v1486 = vunpack.c.l.b16 %v543
    %v1487 = vunpack.c.l.b16 %v544
    %v1488 = vunpack.c.l.b16 %v545
    %v1489 = vunpack.c.l.b16 %v546
    %v1490 = vunpack.c.l.b16 %v547
    %v1491 = vunpack.c.l.b16 %v548
    %v1492 = vunpack.c.l.b16 %v549
    %v1493 = vunpack.c.l.b16 %v550
    %v1494 = vunpack.c.l.b16 %v551
    %v1495 = vunpack.c.l.b16 %v552
    %v1496 = vunpack.c.l.b16 %v553
    %v1497 = vunpack.c.l.b16 %v554
    %v1498 = vunpack.c.l.b16 %v555
    %v1499 = vunpack.c.l.b16 %v556
    %v1500 = vunpack.c.l.b16 %v557
    %v1501 = vunpack.c.l.b16 %v558
    %v1502 = vunpack.c.l.b16 %v559
    %v1503 = vunpack.c.l.b16 %v560
    %v1504 = vunpack.c.l.b16 %v561
    %v1505 = vunpack.c.l.b16 %v562
    %v1506 = vunpack.c.l.b16 %v563
    %v1507 = vunpack.c.l.b16 %v564
    %v1508 = vunpack.c.l.b16 %v565
    %v1509 = vunpack.c.l.b16 %v566
    %v1510 = vunpack.c.l.b16 %v567
    %v1511 = vunpack.c.l.b16 %v568
    %v1512 = vunpack.c.l.b16 %v569
    %v1513 = vpack.c.b16 %v1482, %v1481
    %v1514 = vpack.c.b16 %v1484, %v1483
    %v1515 = vpack.c.b16 %v1486, %v1485
    %v1516 = vpack.c.b16 %v1488, %v1487
    %v1517 = vpack.c.b16 %v1490, %v1489
    %v1518 = vpack.c.b16 %v1492, %v1491
    %v1519 = vpack.c.b16 %v1494, %v1493
    %v1520 = vpack.c.b16 %v1496, %v1495
    %v1521 = vpack.c.b16 %v1498, %v1497
    %v1522 = vpack.c.b16 %v1500, %v1499
    %v1523 = vpack.c.b16 %v1502, %v1501
    %v1524 = vpack.c.b16 %v1504, %v1503
    %v1525 = vpack.c.b16 %v1506, %v1505
    %v1526 = vpack.c.b16 %v1508, %v1507
    %v1527 = vpack.c.b16 %v1510, %v1509
    %v1528 = vpack.c.b16 %v1512, %v1511
    %1545 = vmatpush.bf16.msra.mxu0 %v1520
    %1546 = vmatpush.bf16.msra.mxu0 %v1519
    %1547 = vmatpush.bf16.msra.mxu0 %v1518
    %1548 = vmatpush.bf16.msra.mxu0 %v1517
    %1549 = vmatpush.bf16.msra.mxu0 %v1516
    %1550 = vmatpush.bf16.msra.mxu0 %v1515
    %1551 = vmatpush.bf16.msra.mxu0 %v1514
    %1552 = vmatpush.bf16.msra.mxu0 %v1513
    %1553 = vmatmul.bf16.gmra.mxu0 %v1444
    %v1554 = vpop.f32.mrf.mxu0
    %v1555 = vadd.f32 %v1447, %v1554
    %v1556 = vpop.f32.mrf.mxu0
    %v1557 = vadd.f32 %v1447, %v1556
    %1558 = vdwg.mxu0
    %1559 = vmatpush.bf16.msra.mxu0 %v1528
    %1560 = vmatpush.bf16.msra.mxu0 %v1527
    %1561 = vmatpush.bf16.msra.mxu0 %v1526
    %1562 = vmatpush.bf16.msra.mxu0 %v1525
    %1563 = vmatpush.bf16.msra.mxu0 %v1524
    %1564 = vmatpush.bf16.msra.mxu0 %v1523
    %1565 = vmatpush.bf16.msra.mxu0 %v1522
    %1566 = vmatpush.bf16.msra.mxu0 %v1521
    %1567 = vmatmul.bf16.gmra.mxu0 %v1445
    %v1568 = vpop.f32.mrf.mxu0
    %v1569 = vadd.f32 %v1555, %v1568
    %v1570 = vpop.f32.mrf.mxu0
    %v1571 = vadd.f32 %v1557, %v1570
    %1572 = vdwg.mxu0
    %v1573 = vadd.f32 %v1292, %v1569
    %v1574 = vadd.f32 %v1293, %v1571
    %1575 = vadd.xlane.f32.xlu0 %v1573
    %v1576 = vpop.xlane.xlu0 %1575
    %1577 = vadd.xlane.f32.xlu0 %v1574
    %v1578 = vpop.xlane.xlu0 %1577
    %v1579 = vmul.f32 %v1576, %v384
    %v1580 = vmul.f32 %v1578, %v384
    %v1581 = vsub.f32 %v1573, %v1579
    %v1582 = vsub.f32 %v1574, %v1580
    %v1583 = vmul.f32 %v1581, %v1581
    %v1584 = vmul.f32 %v1582, %v1582
    %1585 = vadd.xlane.f32.xlu0 %v1583
    %v1586 = vpop.xlane.xlu0 %1585
    %1587 = vadd.xlane.f32.xlu0 %v1584
    %v1588 = vpop.xlane.xlu0 %1587
    %v1589 = vmul.f32 %v1586, %v384
    %v1590 = vmul.f32 %v1588, %v384
    %v1591 = vadd.f32 %v1589, 1e-12
    %v1592 = vadd.f32 %v1590, 1e-12
    %v1593 = vrsqrt.pop %v1591
    %v1594 = vmul.f32 %v1593, %v1591
    %v1595 = vmul.f32 %v1594, %v1593
    %v1596 = vmul.f32 0.5, %v1595
    %v1597 = vsub.f32 1.5, %v1596
    %v1598 = vmul.f32 %v1593, %v1597
    %vm1599 = vweird.f32 %v1591
    %vm1600 = vweird.f32 %v1593
    %vm1601 = vmor %vm1599, %vm1600
    %v1602 = vsel %vm1601, %v1593, %v1598
    %v1603 = vrsqrt.pop %v1592
    %v1604 = vmul.f32 %v1603, %v1592
    %v1605 = vmul.f32 %v1604, %v1603
    %v1606 = vmul.f32 0.5, %v1605
    %v1607 = vsub.f32 1.5, %v1606
    %v1608 = vmul.f32 %v1603, %v1607
    %vm1609 = vweird.f32 %v1592
    %vm1610 = vweird.f32 %v1603
    %vm1611 = vmor %vm1609, %vm1610
    %v1612 = vsel %vm1611, %v1603, %v1608
    %v1613 = vmul.f32 %v1581, %v1602
    %v1614 = vmul.f32 %v1582, %v1612
    %v1616 = vperm.slane %v571, 0
    %v1618 = vmul.f32 %v1613, %v1616
    %v1619 = vmul.f32 %v1614, %v1616
    %v1621 = vperm.slane %v572, 0
    %v1623 = vadd.f32 %v1618, %v1621
    %v1624 = vadd.f32 %v1619, %v1621
    %s1625 = scalar_lea.vmem [#allocation10], 384
    %v1626 = vld [vmem:[%s1625] sm:$0xff]
    %v1627 = vld [vmem:[%s1625 + $0x8] sm:$0xff]
    %v1628 = vld [vmem:[%s1625 + $0x10] sm:$0xff]
    %v1629 = vld [vmem:[%s1625 + $0x18] sm:$0xff]
    %v1630 = vld [vmem:[%s1625 + $0x20] sm:$0xff]
    %v1631 = vld [vmem:[%s1625 + $0x28] sm:$0xff]
    %v1632 = vld [vmem:[%s1625 + $0x30] sm:$0xff]
    %v1633 = vld [vmem:[%s1625 + $0x38] sm:$0xff]
    %v1634 = vld [vmem:[%s1625 + $0x40] sm:$0xff]
    %v1635 = vld [vmem:[%s1625 + $0x48] sm:$0xff]
    %v1636 = vld [vmem:[%s1625 + $0x50] sm:$0xff]
    %v1637 = vld [vmem:[%s1625 + $0x58] sm:$0xff]
    %v1638 = vld [vmem:[%s1625 + $0x60] sm:$0xff]
    %v1639 = vld [vmem:[%s1625 + $0x68] sm:$0xff]
    %v1640 = vld [vmem:[%s1625 + $0x70] sm:$0xff]
    %v1641 = vld [vmem:[%s1625 + $0x78] sm:$0xff]
    %v1642 = vld [vmem:[%s1625 + $0x80] sm:$0xff]
    %v1643 = vld [vmem:[%s1625 + $0x88] sm:$0xff]
    %v1644 = vld [vmem:[%s1625 + $0x90] sm:$0xff]
    %v1645 = vld [vmem:[%s1625 + $0x98] sm:$0xff]
    %v1646 = vld [vmem:[%s1625 + $0xa0] sm:$0xff]
    %v1647 = vld [vmem:[%s1625 + $0xa8] sm:$0xff]
    %v1648 = vld [vmem:[%s1625 + $0xb0] sm:$0xff]
    %v1649 = vld [vmem:[%s1625 + $0xb8] sm:$0xff]
    %v1650 = vld [vmem:[%s1625 + $0xc0] sm:$0xff]
    %v1651 = vld [vmem:[%s1625 + $0xc8] sm:$0xff]
    %v1652 = vld [vmem:[%s1625 + $0xd0] sm:$0xff]
    %v1653 = vld [vmem:[%s1625 + $0xd8] sm:$0xff]
    %v1654 = vld [vmem:[%s1625 + $0xe0] sm:$0xff]
    %v1655 = vld [vmem:[%s1625 + $0xe8] sm:$0xff]
    %v1656 = vld [vmem:[%s1625 + $0xf0] sm:$0xff]
    %v1657 = vld [vmem:[%s1625 + $0xf8] sm:$0xff]
    %v1658 = vld [vmem:[%s1625 + $0x100] sm:$0xff]
    %v1659 = vld [vmem:[%s1625 + $0x108] sm:$0xff]
    %v1660 = vld [vmem:[%s1625 + $0x110] sm:$0xff]
    %v1661 = vld [vmem:[%s1625 + $0x118] sm:$0xff]
    %v1662 = vld [vmem:[%s1625 + $0x120] sm:$0xff]
    %v1663 = vld [vmem:[%s1625 + $0x128] sm:$0xff]
    %v1664 = vld [vmem:[%s1625 + $0x130] sm:$0xff]
    %v1665 = vld [vmem:[%s1625 + $0x138] sm:$0xff]
    %v1666 = vld [vmem:[%s1625 + $0x140] sm:$0xff]
    %v1667 = vld [vmem:[%s1625 + $0x148] sm:$0xff]
    %v1668 = vld [vmem:[%s1625 + $0x150] sm:$0xff]
    %v1669 = vld [vmem:[%s1625 + $0x158] sm:$0xff]
    %v1670 = vld [vmem:[%s1625 + $0x160] sm:$0xff]
    %v1671 = vld [vmem:[%s1625 + $0x168] sm:$0xff]
    %v1672 = vld [vmem:[%s1625 + $0x170] sm:$0xff]
    %v1673 = vld [vmem:[%s1625 + $0x178] sm:$0xff]
    %s1674 = scalar_lea.vmem %s7, 6
    %v1675 = vld [vmem:[%s1674] sm:$0x3f]
    %s1676 = scalar_lea.vmem [#allocation11], 128
    %v1677 = vld [vmem:[%s1676] sm:$0xf]
    %v1678 = vld [vmem:[%s1676 + $0x4] sm:$0xf]
    %v1679 = vld [vmem:[%s1676 + $0x8] sm:$0xf]
    %v1680 = vld [vmem:[%s1676 + $0xc] sm:$0xf]
    %v1681 = vld [vmem:[%s1676 + $0x10] sm:$0xf]
    %v1682 = vld [vmem:[%s1676 + $0x14] sm:$0xf]
    %v1683 = vld [vmem:[%s1676 + $0x18] sm:$0xf]
    %v1684 = vld [vmem:[%s1676 + $0x1c] sm:$0xf]
    %v1685 = vld [vmem:[%s1676 + $0x20] sm:$0xf]
    %v1686 = vld [vmem:[%s1676 + $0x24] sm:$0xf]
    %v1687 = vld [vmem:[%s1676 + $0x28] sm:$0xf]
    %v1688 = vld [vmem:[%s1676 + $0x2c] sm:$0xf]
    %v1689 = vld [vmem:[%s1676 + $0x30] sm:$0xf]
    %v1690 = vld [vmem:[%s1676 + $0x34] sm:$0xf]
    %v1691 = vld [vmem:[%s1676 + $0x38] sm:$0xf]
    %v1692 = vld [vmem:[%s1676 + $0x3c] sm:$0xf]
    %v1693 = vld [vmem:[%s1676 + $0x40] sm:$0xf]
    %v1694 = vld [vmem:[%s1676 + $0x44] sm:$0xf]
    %v1695 = vld [vmem:[%s1676 + $0x48] sm:$0xf]
    %v1696 = vld [vmem:[%s1676 + $0x4c] sm:$0xf]
    %v1697 = vld [vmem:[%s1676 + $0x50] sm:$0xf]
    %v1698 = vld [vmem:[%s1676 + $0x54] sm:$0xf]
    %v1699 = vld [vmem:[%s1676 + $0x58] sm:$0xf]
    %v1700 = vld [vmem:[%s1676 + $0x5c] sm:$0xf]
    %v1701 = vld [vmem:[%s1676 + $0x60] sm:$0xf]
    %v1702 = vld [vmem:[%s1676 + $0x64] sm:$0xf]
    %v1703 = vld [vmem:[%s1676 + $0x68] sm:$0xf]
    %v1704 = vld [vmem:[%s1676 + $0x6c] sm:$0xf]
    %v1705 = vld [vmem:[%s1676 + $0x70] sm:$0xf]
    %v1706 = vld [vmem:[%s1676 + $0x74] sm:$0xf]
    %v1707 = vld [vmem:[%s1676 + $0x78] sm:$0xf]
    %v1708 = vld [vmem:[%s1676 + $0x7c] sm:$0xf]
    %s1709 = scalar_lea.vmem %s9, 1
    %v1710 = vld [vmem:[%s1709] sm:$0x1]
    %s1711 = scalar_lea.vmem %s10, 1
    %v1712 = vld [vmem:[%s1711] sm:$0x1]
    %s1713 = scalar_lea.vmem %s11, 1
    %v1714 = vld [vmem:[%s1713] sm:$0x1]
    %s1715 = scalar_lea.vmem [#allocation13], 128
    %v1716 = vld [vmem:[%s1715] sm:$0xff]
    %v1717 = vld [vmem:[%s1715 + $0x8] sm:$0xff]
    %v1718 = vld [vmem:[%s1715 + $0x10] sm:$0xff]
    %v1719 = vld [vmem:[%s1715 + $0x18] sm:$0xff]
    %v1720 = vld [vmem:[%s1715 + $0x20] sm:$0xff]
    %v1721 = vld [vmem:[%s1715 + $0x28] sm:$0xff]
    %v1722 = vld [vmem:[%s1715 + $0x30] sm:$0xff]
    %v1723 = vld [vmem:[%s1715 + $0x38] sm:$0xff]
    %v1724 = vld [vmem:[%s1715 + $0x40] sm:$0xff]
    %v1725 = vld [vmem:[%s1715 + $0x48] sm:$0xff]
    %v1726 = vld [vmem:[%s1715 + $0x50] sm:$0xff]
    %v1727 = vld [vmem:[%s1715 + $0x58] sm:$0xff]
    %v1728 = vld [vmem:[%s1715 + $0x60] sm:$0xff]
    %v1729 = vld [vmem:[%s1715 + $0x68] sm:$0xff]
    %v1730 = vld [vmem:[%s1715 + $0x70] sm:$0xff]
    %v1731 = vld [vmem:[%s1715 + $0x78] sm:$0xff]
    %s1732 = scalar_lea.vmem %s13, 2
    %v1733 = vld [vmem:[%s1732] sm:$0x3]
    %s1734 = scalar_lea.vmem [#allocation14], 128
    %v1735 = vld [vmem:[%s1734] sm:$0xf]
    %v1736 = vld [vmem:[%s1734 + $0x4] sm:$0xf]
    %v1737 = vld [vmem:[%s1734 + $0x8] sm:$0xf]
    %v1738 = vld [vmem:[%s1734 + $0xc] sm:$0xf]
    %v1739 = vld [vmem:[%s1734 + $0x10] sm:$0xf]
    %v1740 = vld [vmem:[%s1734 + $0x14] sm:$0xf]
    %v1741 = vld [vmem:[%s1734 + $0x18] sm:$0xf]
    %v1742 = vld [vmem:[%s1734 + $0x1c] sm:$0xf]
    %v1743 = vld [vmem:[%s1734 + $0x20] sm:$0xf]
    %v1744 = vld [vmem:[%s1734 + $0x24] sm:$0xf]
    %v1745 = vld [vmem:[%s1734 + $0x28] sm:$0xf]
    %v1746 = vld [vmem:[%s1734 + $0x2c] sm:$0xf]
    %v1747 = vld [vmem:[%s1734 + $0x30] sm:$0xf]
    %v1748 = vld [vmem:[%s1734 + $0x34] sm:$0xf]
    %v1749 = vld [vmem:[%s1734 + $0x38] sm:$0xf]
    %v1750 = vld [vmem:[%s1734 + $0x3c] sm:$0xf]
    %v1751 = vld [vmem:[%s1734 + $0x40] sm:$0xf]
    %v1752 = vld [vmem:[%s1734 + $0x44] sm:$0xf]
    %v1753 = vld [vmem:[%s1734 + $0x48] sm:$0xf]
    %v1754 = vld [vmem:[%s1734 + $0x4c] sm:$0xf]
    %v1755 = vld [vmem:[%s1734 + $0x50] sm:$0xf]
    %v1756 = vld [vmem:[%s1734 + $0x54] sm:$0xf]
    %v1757 = vld [vmem:[%s1734 + $0x58] sm:$0xf]
    %v1758 = vld [vmem:[%s1734 + $0x5c] sm:$0xf]
    %v1759 = vld [vmem:[%s1734 + $0x60] sm:$0xf]
    %v1760 = vld [vmem:[%s1734 + $0x64] sm:$0xf]
    %v1761 = vld [vmem:[%s1734 + $0x68] sm:$0xf]
    %v1762 = vld [vmem:[%s1734 + $0x6c] sm:$0xf]
    %v1763 = vld [vmem:[%s1734 + $0x70] sm:$0xf]
    %v1764 = vld [vmem:[%s1734 + $0x74] sm:$0xf]
    %v1765 = vld [vmem:[%s1734 + $0x78] sm:$0xf]
    %v1766 = vld [vmem:[%s1734 + $0x7c] sm:$0xf]
    %s1767 = scalar_lea.vmem [#allocation16], 1
    %v1768 = vld [vmem:[%s1767] sm:$0x1]
    %s1769 = scalar_lea.vmem %s16, 1
    %v1770 = vld [vmem:[%s1769] sm:$0x1]
    %s1771 = scalar_lea.vmem [#allocation17], 1
    %v1772 = vld [vmem:[%s1771] sm:$0x1]
    %v1773 = vpack.c.bf16 %v1624, %v1623
    %v1775 = vperm.slane %v1675, 0
    %v1776 = vperm.slane %v1675, 1
    %v1777 = vperm.slane %v1675, 2
    %v1778 = vperm.slane %v1675, 3
    %v1779 = vperm.slane %v1675, 4
    %v1780 = vperm.slane %v1675, 5
    %v1835 = vunpack.c.l.b16 %v1626
    %v1836 = vunpack.c.h.b16 %v1626
    %v1837 = vunpack.c.l.b16 %v1627
    %v1838 = vunpack.c.h.b16 %v1627
    %v1839 = vunpack.c.l.b16 %v1628
    %v1840 = vunpack.c.h.b16 %v1628
    %v1841 = vunpack.c.l.b16 %v1629
    %v1842 = vunpack.c.h.b16 %v1629
    %v1843 = vunpack.c.l.b16 %v1630
    %v1844 = vunpack.c.h.b16 %v1630
    %v1845 = vunpack.c.l.b16 %v1631
    %v1846 = vunpack.c.h.b16 %v1631
    %v1847 = vunpack.c.l.b16 %v1632
    %v1848 = vunpack.c.h.b16 %v1632
    %v1849 = vunpack.c.l.b16 %v1633
    %v1850 = vunpack.c.h.b16 %v1633
    %v1851 = vunpack.c.l.b16 %v1634
    %v1852 = vunpack.c.h.b16 %v1634
    %v1853 = vunpack.c.l.b16 %v1635
    %v1854 = vunpack.c.h.b16 %v1635
    %v1855 = vunpack.c.l.b16 %v1636
    %v1856 = vunpack.c.h.b16 %v1636
    %v1857 = vunpack.c.l.b16 %v1637
    %v1858 = vunpack.c.h.b16 %v1637
    %v1859 = vunpack.c.l.b16 %v1638
    %v1860 = vunpack.c.h.b16 %v1638
    %v1861 = vunpack.c.l.b16 %v1639
    %v1862 = vunpack.c.h.b16 %v1639
    %v1863 = vunpack.c.l.b16 %v1640
    %v1864 = vunpack.c.h.b16 %v1640
    %v1865 = vunpack.c.l.b16 %v1641
    %v1866 = vunpack.c.h.b16 %v1641
    %v1867 = vunpack.c.l.b16 %v1642
    %v1868 = vunpack.c.h.b16 %v1642
    %v1869 = vunpack.c.l.b16 %v1643
    %v1870 = vunpack.c.h.b16 %v1643
    %v1871 = vunpack.c.l.b16 %v1644
    %v1872 = vunpack.c.h.b16 %v1644
    %v1873 = vunpack.c.l.b16 %v1645
    %v1874 = vunpack.c.h.b16 %v1645
    %v1875 = vunpack.c.l.b16 %v1646
    %v1876 = vunpack.c.h.b16 %v1646
    %v1877 = vunpack.c.l.b16 %v1647
    %v1878 = vunpack.c.h.b16 %v1647
    %v1879 = vunpack.c.l.b16 %v1648
    %v1880 = vunpack.c.h.b16 %v1648
    %v1881 = vunpack.c.l.b16 %v1649
    %v1882 = vunpack.c.h.b16 %v1649
    %v1883 = vunpack.c.l.b16 %v1650
    %v1884 = vunpack.c.h.b16 %v1650
    %v1885 = vunpack.c.l.b16 %v1651
    %v1886 = vunpack.c.h.b16 %v1651
    %v1887 = vunpack.c.l.b16 %v1652
    %v1888 = vunpack.c.h.b16 %v1652
    %v1889 = vunpack.c.l.b16 %v1653
    %v1890 = vunpack.c.h.b16 %v1653
    %v1891 = vunpack.c.l.b16 %v1654
    %v1892 = vunpack.c.h.b16 %v1654
    %v1893 = vunpack.c.l.b16 %v1655
    %v1894 = vunpack.c.h.b16 %v1655
    %v1895 = vunpack.c.l.b16 %v1656
    %v1896 = vunpack.c.h.b16 %v1656
    %v1897 = vunpack.c.l.b16 %v1657
    %v1898 = vunpack.c.h.b16 %v1657
    %v1899 = vunpack.c.l.b16 %v1658
    %v1900 = vunpack.c.h.b16 %v1658
    %v1901 = vunpack.c.l.b16 %v1659
    %v1902 = vunpack.c.h.b16 %v1659
    %v1903 = vunpack.c.l.b16 %v1660
    %v1904 = vunpack.c.h.b16 %v1660
    %v1905 = vunpack.c.l.b16 %v1661
    %v1906 = vunpack.c.h.b16 %v1661
    %v1907 = vunpack.c.l.b16 %v1662
    %v1908 = vunpack.c.h.b16 %v1662
    %v1909 = vunpack.c.l.b16 %v1663
    %v1910 = vunpack.c.h.b16 %v1663
    %v1911 = vunpack.c.l.b16 %v1664
    %v1912 = vunpack.c.h.b16 %v1664
    %v1913 = vunpack.c.l.b16 %v1665
    %v1914 = vunpack.c.h.b16 %v1665
    %v1915 = vunpack.c.l.b16 %v1666
    %v1916 = vunpack.c.h.b16 %v1666
    %v1917 = vunpack.c.l.b16 %v1667
    %v1918 = vunpack.c.h.b16 %v1667
    %v1919 = vunpack.c.l.b16 %v1668
    %v1920 = vunpack.c.h.b16 %v1668
    %v1921 = vunpack.c.l.b16 %v1669
    %v1922 = vunpack.c.h.b16 %v1669
    %v1923 = vunpack.c.l.b16 %v1670
    %v1924 = vunpack.c.h.b16 %v1670
    %v1925 = vunpack.c.l.b16 %v1671
    %v1926 = vunpack.c.h.b16 %v1671
    %v1927 = vunpack.c.l.b16 %v1672
    %v1928 = vunpack.c.h.b16 %v1672
    %v1929 = vunpack.c.l.b16 %v1673
    %v1930 = vunpack.c.h.b16 %v1673
    %v1931 = vpack.c.b16 %v1841, %v1835
    %v1932 = vpack.c.b16 %v1842, %v1836
    %v1933 = vpack.c.b16 %v1843, %v1837
    %v1934 = vpack.c.b16 %v1844, %v1838
    %v1935 = vpack.c.b16 %v1845, %v1839
    %v1936 = vpack.c.b16 %v1846, %v1840
    %v1937 = vpack.c.b16 %v1853, %v1847
    %v1938 = vpack.c.b16 %v1854, %v1848
    %v1939 = vpack.c.b16 %v1855, %v1849
    %v1940 = vpack.c.b16 %v1856, %v1850
    %v1941 = vpack.c.b16 %v1857, %v1851
    %v1942 = vpack.c.b16 %v1858, %v1852
    %v1943 = vpack.c.b16 %v1865, %v1859
    %v1944 = vpack.c.b16 %v1866, %v1860
    %v1945 = vpack.c.b16 %v1867, %v1861
    %v1946 = vpack.c.b16 %v1868, %v1862
    %v1947 = vpack.c.b16 %v1869, %v1863
    %v1948 = vpack.c.b16 %v1870, %v1864
    %v1949 = vpack.c.b16 %v1877, %v1871
    %v1950 = vpack.c.b16 %v1878, %v1872
    %v1951 = vpack.c.b16 %v1879, %v1873
    %v1952 = vpack.c.b16 %v1880, %v1874
    %v1953 = vpack.c.b16 %v1881, %v1875
    %v1954 = vpack.c.b16 %v1882, %v1876
    %v1955 = vpack.c.b16 %v1889, %v1883
    %v1956 = vpack.c.b16 %v1890, %v1884
    %v1957 = vpack.c.b16 %v1891, %v1885
    %v1958 = vpack.c.b16 %v1892, %v1886
    %v1959 = vpack.c.b16 %v1893, %v1887
    %v1960 = vpack.c.b16 %v1894, %v1888
    %v1961 = vpack.c.b16 %v1901, %v1895
    %v1962 = vpack.c.b16 %v1902, %v1896
    %v1963 = vpack.c.b16 %v1903, %v1897
    %v1964 = vpack.c.b16 %v1904, %v1898
    %v1965 = vpack.c.b16 %v1905, %v1899
    %v1966 = vpack.c.b16 %v1906, %v1900
    %v1967 = vpack.c.b16 %v1913, %v1907
    %v1968 = vpack.c.b16 %v1914, %v1908
    %v1969 = vpack.c.b16 %v1915, %v1909
    %v1970 = vpack.c.b16 %v1916, %v1910
    %v1971 = vpack.c.b16 %v1917, %v1911
    %v1972 = vpack.c.b16 %v1918, %v1912
    %v1973 = vpack.c.b16 %v1925, %v1919
    %v1974 = vpack.c.b16 %v1926, %v1920
    %v1975 = vpack.c.b16 %v1927, %v1921
    %v1976 = vpack.c.b16 %v1928, %v1922
    %v1977 = vpack.c.b16 %v1929, %v1923
    %v1978 = vpack.c.b16 %v1930, %v1924
    %2027 = vmatpush.bf16.msra.mxu0 %v1973
    %2028 = vmatpush.bf16.msra.mxu0 %v1967
    %2029 = vmatpush.bf16.msra.mxu0 %v1961
    %2030 = vmatpush.bf16.msra.mxu0 %v1955
    %2031 = vmatpush.bf16.msra.mxu0 %v1949
    %2032 = vmatpush.bf16.msra.mxu0 %v1943
    %2033 = vmatpush.bf16.msra.mxu0 %v1937
    %2034 = vmatpush.bf16.msra.mxu0 %v1931
    %2035 = vmatmul.bf16.gmra.mxu0 %v1773
    %v2036 = vpop.f32.mrf.mxu0
    %v2037 = vadd.f32 %v1775, %v2036
    %v2038 = vpop.f32.mrf.mxu0
    %v2039 = vadd.f32 %v1775, %v2038
    %2040 = vdwg.mxu0
    %2041 = vmatpush.bf16.msra.mxu0 %v1974
    %2042 = vmatpush.bf16.msra.mxu0 %v1968
    %2043 = vmatpush.bf16.msra.mxu0 %v1962
    %2044 = vmatpush.bf16.msra.mxu0 %v1956
    %2045 = vmatpush.bf16.msra.mxu0 %v1950
    %2046 = vmatpush.bf16.msra.mxu0 %v1944
    %2047 = vmatpush.bf16.msra.mxu0 %v1938
    %2048 = vmatpush.bf16.msra.mxu0 %v1932
    %2049 = vmatmul.bf16.gmra.mxu0 %v1773
    %v2050 = vpop.f32.mrf.mxu0
    %v2051 = vadd.f32 %v1776, %v2050
    %v2052 = vpop.f32.mrf.mxu0
    %v2053 = vadd.f32 %v1776, %v2052
    %2054 = vdwg.mxu0
    %2055 = vmatpush.bf16.msra.mxu0 %v1975
    %2056 = vmatpush.bf16.msra.mxu0 %v1969
    %2057 = vmatpush.bf16.msra.mxu0 %v1963
    %2058 = vmatpush.bf16.msra.mxu0 %v1957
    %2059 = vmatpush.bf16.msra.mxu0 %v1951
    %2060 = vmatpush.bf16.msra.mxu0 %v1945
    %2061 = vmatpush.bf16.msra.mxu0 %v1939
    %2062 = vmatpush.bf16.msra.mxu0 %v1933
    %2063 = vmatmul.bf16.gmra.mxu0 %v1773
    %v2064 = vpop.f32.mrf.mxu0
    %v2065 = vadd.f32 %v1777, %v2064
    %v2066 = vpop.f32.mrf.mxu0
    %v2067 = vadd.f32 %v1777, %v2066
    %2068 = vdwg.mxu0
    %2069 = vmatpush.bf16.msra.mxu0 %v1976
    %2070 = vmatpush.bf16.msra.mxu0 %v1970
    %2071 = vmatpush.bf16.msra.mxu0 %v1964
    %2072 = vmatpush.bf16.msra.mxu0 %v1958
    %2073 = vmatpush.bf16.msra.mxu0 %v1952
    %2074 = vmatpush.bf16.msra.mxu0 %v1946
    %2075 = vmatpush.bf16.msra.mxu0 %v1940
    %2076 = vmatpush.bf16.msra.mxu0 %v1934
    %2077 = vmatmul.bf16.gmra.mxu0 %v1773
    %v2078 = vpop.f32.mrf.mxu0
    %v2079 = vadd.f32 %v1778, %v2078
    %v2080 = vpop.f32.mrf.mxu0
    %v2081 = vadd.f32 %v1778, %v2080
    %2082 = vdwg.mxu0
    %2083 = vmatpush.bf16.msra.mxu0 %v1977
    %2084 = vmatpush.bf16.msra.mxu0 %v1971
    %2085 = vmatpush.bf16.msra.mxu0 %v1965
    %2086 = vmatpush.bf16.msra.mxu0 %v1959
    %2087 = vmatpush.bf16.msra.mxu0 %v1953
    %2088 = vmatpush.bf16.msra.mxu0 %v1947
    %2089 = vmatpush.bf16.msra.mxu0 %v1941
    %2090 = vmatpush.bf16.msra.mxu0 %v1935
    %2091 = vmatmul.bf16.gmra.mxu0 %v1773
    %v2092 = vpop.f32.mrf.mxu0
    %v2093 = vadd.f32 %v1779, %v2092
    %v2094 = vpop.f32.mrf.mxu0
    %v2095 = vadd.f32 %v1779, %v2094
    %2096 = vdwg.mxu0
    %2097 = vmatpush.bf16.msra.mxu0 %v1978
    %2098 = vmatpush.bf16.msra.mxu0 %v1972
    %2099 = vmatpush.bf16.msra.mxu0 %v1966
    %2100 = vmatpush.bf16.msra.mxu0 %v1960
    %2101 = vmatpush.bf16.msra.mxu0 %v1954
    %2102 = vmatpush.bf16.msra.mxu0 %v1948
    %2103 = vmatpush.bf16.msra.mxu0 %v1942
    %2104 = vmatpush.bf16.msra.mxu0 %v1936
    %2105 = vmatmul.bf16.gmra.mxu0 %v1773
    %v2106 = vpop.f32.mrf.mxu0
    %v2107 = vadd.f32 %v1780, %v2106
    %v2108 = vpop.f32.mrf.mxu0
    %v2109 = vadd.f32 %v1780, %v2108
    %2110 = vdwg.mxu0
    %v2111 = vpack.c.bf16 %v2037, %v2037
    %v2112 = vpack.c.bf16 %v2039, %v2039
    %v2113 = vpack.c.bf16 %v2051, %v2051
    %v2114 = vpack.c.bf16 %v2053, %v2053
    %v2115 = vpack.c.bf16 %v2065, %v2065
    %v2116 = vpack.c.bf16 %v2067, %v2067
    %v2117 = vpack.c.bf16 %v2079, %v2079
    %v2118 = vpack.c.bf16 %v2081, %v2081
    %v2119 = vpack.c.bf16 %v2093, %v2093
    %v2120 = vpack.c.bf16 %v2095, %v2095
    %v2121 = vpack.c.bf16 %v2107, %v2107
    %v2122 = vpack.c.bf16 %v2109, %v2109
    %2123 = vmatpush.bf16.xpose.msra.mxu0 0
    %2124 = vmatpush.bf16.xpose.msra.mxu0 0
    %2125 = vmatpush.bf16.xpose.msra.mxu0 0
    %2126 = vmatpush.bf16.xpose.msra.mxu0 0
    %2127 = vmatpush.bf16.xpose.msra.mxu0 0
    %2128 = vmatpush.bf16.xpose.msra.mxu0 0
    %2129 = vmatpush.bf16.xpose.msra.mxu0 0
    %2130 = vmatpush.bf16.xpose.msra.mxu0 %v2115
    %2131 = vmatmul.bf16.gmra.mxu0 %v2111
    %v2132 = vpop.f32.mrf.mxu0
    %v2133 = vadd.f32 0.0, %v2132
    %v2134 = vpop.f32.mrf.mxu0
    %2135 = vdwg.mxu0
    %2136 = vmatpush.bf16.xpose.msra.mxu0 0
    %2137 = vmatpush.bf16.xpose.msra.mxu0 0
    %2138 = vmatpush.bf16.xpose.msra.mxu0 0
    %2139 = vmatpush.bf16.xpose.msra.mxu0 0
    %2140 = vmatpush.bf16.xpose.msra.mxu0 0
    %2141 = vmatpush.bf16.xpose.msra.mxu0 0
    %2142 = vmatpush.bf16.xpose.msra.mxu0 0
    %2143 = vmatpush.bf16.xpose.msra.mxu0 %v2116
    %2144 = vmatmul.bf16.gmra.mxu0 %v2112
    %v2145 = vpop.f32.mrf.mxu0
    %v2146 = vadd.f32 0.0, %v2145
    %v2147 = vpop.f32.mrf.mxu0
    %2148 = vdwg.mxu0
    %2149 = vmatpush.bf16.xpose.msra.mxu0 0
    %2150 = vmatpush.bf16.xpose.msra.mxu0 0
    %2151 = vmatpush.bf16.xpose.msra.mxu0 0
    %2152 = vmatpush.bf16.xpose.msra.mxu0 0
    %2153 = vmatpush.bf16.xpose.msra.mxu0 0
    %2154 = vmatpush.bf16.xpose.msra.mxu0 0
    %2155 = vmatpush.bf16.xpose.msra.mxu0 0
    %2156 = vmatpush.bf16.xpose.msra.mxu0 %v2117
    %2157 = vmatmul.bf16.gmra.mxu0 %v2113
    %v2158 = vpop.f32.mrf.mxu0
    %v2159 = vadd.f32 0.0, %v2158
    %v2160 = vpop.f32.mrf.mxu0
    %2161 = vdwg.mxu0
    %2162 = vmatpush.bf16.xpose.msra.mxu0 0
    %2163 = vmatpush.bf16.xpose.msra.mxu0 0
    %2164 = vmatpush.bf16.xpose.msra.mxu0 0
    %2165 = vmatpush.bf16.xpose.msra.mxu0 0
    %2166 = vmatpush.bf16.xpose.msra.mxu0 0
    %2167 = vmatpush.bf16.xpose.msra.mxu0 0
    %2168 = vmatpush.bf16.xpose.msra.mxu0 0
    %2169 = vmatpush.bf16.xpose.msra.mxu0 %v2118
    %2170 = vmatmul.bf16.gmra.mxu0 %v2114
    %v2171 = vpop.f32.mrf.mxu0
    %v2172 = vadd.f32 0.0, %v2171
    %v2173 = vpop.f32.mrf.mxu0
    %2174 = vdwg.mxu0
    %v2175 = vmul.f32 %v2133, 0.125
    %v2176 = vmul.f32 %v2146, 0.125
    %v2177 = vmul.f32 %v2159, 0.125
    %v2178 = vmul.f32 %v2172, 0.125
    %v2179 = vadd.f32 %v2175, %v979
    %v2180 = vadd.f32 %v2176, %v980
    %v2181 = vadd.f32 %v2177, %v979
    %v2182 = vadd.f32 %v2178, %v980
    %v2183 = vsel %vm987, %v2179, -inf
    %2184 = vmax.xlane.f32.xlu0 %v2183
    %v2185 = vpop.xlane.xlu0 %2184
    %v2186 = vsel %vm987, %v2180, -inf
    %2187 = vmax.xlane.f32.xlu0 %v2186
    %v2188 = vpop.xlane.xlu0 %2187
    %v2189 = vsel %vm987, %v2181, -inf
    %2190 = vmax.xlane.f32.xlu0 %v2189
    %v2191 = vpop.xlane.xlu0 %2190
    %v2192 = vsel %vm987, %v2182, -inf
    %2193 = vmax.xlane.f32.xlu0 %v2192
    %v2194 = vpop.xlane.xlu0 %2193
    %v2195 = vsub.f32 %v2179, %v2185
    %v2196 = vsub.f32 %v2180, %v2188
    %v2197 = vsub.f32 %v2181, %v2191
    %v2198 = vsub.f32 %v2182, %v2194
    %v2199 = vmul.f32 %v2195, 1.442695
    %v2200 = vpow.pop %v2199
    %v2201 = vmul.f32 %v2196, 1.442695
    %v2202 = vpow.pop %v2201
    %v2203 = vmul.f32 %v2197, 1.442695
    %v2204 = vpow.pop %v2203
    %v2205 = vmul.f32 %v2198, 1.442695
    %v2206 = vpow.pop %v2205
    %v2207 = vsel %vm987, %v2200, 0.0
    %2208 = vadd.xlane.f32.xlu0 %v2207
    %v2209 = vpop.xlane.xlu0 %2208
    %v2210 = vsel %vm987, %v2202, 0.0
    %2211 = vadd.xlane.f32.xlu0 %v2210
    %v2212 = vpop.xlane.xlu0 %2211
    %v2213 = vsel %vm987, %v2204, 0.0
    %2214 = vadd.xlane.f32.xlu0 %v2213
    %v2215 = vpop.xlane.xlu0 %2214
    %v2216 = vsel %vm987, %v2206, 0.0
    %2217 = vadd.xlane.f32.xlu0 %v2216
    %v2218 = vpop.xlane.xlu0 %2217
    %v2219 = vrcp.pop %v2209
    %v2220 = vrcp.pop %v2212
    %v2221 = vrcp.pop %v2215
    %v2222 = vrcp.pop %v2218
    %v2223 = vmul.f32 %v2200, %v2219
    %v2224 = vmul.f32 %v2202, %v2220
    %v2225 = vmul.f32 %v2204, %v2221
    %v2226 = vmul.f32 %v2206, %v2222
    %v2227 = vpack.c.bf16 %v2223, %v2223
    %v2228 = vpack.c.bf16 %v2224, %v2224
    %v2229 = vpack.c.bf16 %v2225, %v2225
    %v2230 = vpack.c.bf16 %v2226, %v2226
    %v2232 = vsel %vm987, %v2227, 0
    %v2235 = vsel %vm1039, %v2119, 0
    %2237 = vmatpush.bf16.msra.mxu0 0
    %2238 = vmatpush.bf16.msra.mxu0 0
    %2239 = vmatpush.bf16.msra.mxu0 0
    %2240 = vmatpush.bf16.msra.mxu0 0
    %2241 = vmatpush.bf16.msra.mxu0 0
    %2242 = vmatpush.bf16.msra.mxu0 0
    %2243 = vmatpush.bf16.msra.mxu0 0
    %2244 = vmatpush.bf16.msra.mxu0 %v2235
    %2245 = vmatmul.bf16.gmra.mxu0 %v2232
    %v2246 = vpop.f32.mrf.mxu0
    %v2247 = vadd.f32 0.0, %v2246
    %v2248 = vpop.f32.mrf.mxu0
    %2249 = vdwg.mxu0
    %v2251 = vsel %vm987, %v2228, 0
    %v2254 = vsel %vm1039, %v2120, 0
    %2256 = vmatpush.bf16.msra.mxu0 0
    %2257 = vmatpush.bf16.msra.mxu0 0
    %2258 = vmatpush.bf16.msra.mxu0 0
    %2259 = vmatpush.bf16.msra.mxu0 0
    %2260 = vmatpush.bf16.msra.mxu0 0
    %2261 = vmatpush.bf16.msra.mxu0 0
    %2262 = vmatpush.bf16.msra.mxu0 0
    %2263 = vmatpush.bf16.msra.mxu0 %v2254
    %2264 = vmatmul.bf16.gmra.mxu0 %v2251
    %v2265 = vpop.f32.mrf.mxu0
    %v2266 = vadd.f32 0.0, %v2265
    %v2267 = vpop.f32.mrf.mxu0
    %2268 = vdwg.mxu0
    %v2270 = vsel %vm987, %v2229, 0
    %v2273 = vsel %vm1039, %v2121, 0
    %2275 = vmatpush.bf16.msra.mxu0 0
    %2276 = vmatpush.bf16.msra.mxu0 0
    %2277 = vmatpush.bf16.msra.mxu0 0
    %2278 = vmatpush.bf16.msra.mxu0 0
    %2279 = vmatpush.bf16.msra.mxu0 0
    %2280 = vmatpush.bf16.msra.mxu0 0
    %2281 = vmatpush.bf16.msra.mxu0 0
    %2282 = vmatpush.bf16.msra.mxu0 %v2273
    %2283 = vmatmul.bf16.gmra.mxu0 %v2270
    %v2284 = vpop.f32.mrf.mxu0
    %v2285 = vadd.f32 0.0, %v2284
    %v2286 = vpop.f32.mrf.mxu0
    %2287 = vdwg.mxu0
    %v2289 = vsel %vm987, %v2230, 0
    %v2292 = vsel %vm1039, %v2122, 0
    %2294 = vmatpush.bf16.msra.mxu0 0
    %2295 = vmatpush.bf16.msra.mxu0 0
    %2296 = vmatpush.bf16.msra.mxu0 0
    %2297 = vmatpush.bf16.msra.mxu0 0
    %2298 = vmatpush.bf16.msra.mxu0 0
    %2299 = vmatpush.bf16.msra.mxu0 0
    %2300 = vmatpush.bf16.msra.mxu0 0
    %2301 = vmatpush.bf16.msra.mxu0 %v2292
    %2302 = vmatmul.bf16.gmra.mxu0 %v2289
    %v2303 = vpop.f32.mrf.mxu0
    %v2304 = vadd.f32 0.0, %v2303
    %v2305 = vpop.f32.mrf.mxu0
    %2306 = vdwg.mxu0
    %v2307 = vpack.c.bf16 %v2266, %v2247
    %v2308 = vpack.c.bf16 %v2304, %v2285
    %v2310 = vperm.slane %v1710, 0
    %v2344 = vunpack.c.l.b16 %v1677
    %v2345 = vunpack.c.l.b16 %v1678
    %v2346 = vunpack.c.l.b16 %v1679
    %v2347 = vunpack.c.l.b16 %v1680
    %v2348 = vunpack.c.l.b16 %v1681
    %v2349 = vunpack.c.l.b16 %v1682
    %v2350 = vunpack.c.l.b16 %v1683
    %v2351 = vunpack.c.l.b16 %v1684
    %v2352 = vunpack.c.l.b16 %v1685
    %v2353 = vunpack.c.l.b16 %v1686
    %v2354 = vunpack.c.l.b16 %v1687
    %v2355 = vunpack.c.l.b16 %v1688
    %v2356 = vunpack.c.l.b16 %v1689
    %v2357 = vunpack.c.l.b16 %v1690
    %v2358 = vunpack.c.l.b16 %v1691
    %v2359 = vunpack.c.l.b16 %v1692
    %v2360 = vunpack.c.l.b16 %v1693
    %v2361 = vunpack.c.l.b16 %v1694
    %v2362 = vunpack.c.l.b16 %v1695
    %v2363 = vunpack.c.l.b16 %v1696
    %v2364 = vunpack.c.l.b16 %v1697
    %v2365 = vunpack.c.l.b16 %v1698
    %v2366 = vunpack.c.l.b16 %v1699
    %v2367 = vunpack.c.l.b16 %v1700
    %v2368 = vunpack.c.l.b16 %v1701
    %v2369 = vunpack.c.l.b16 %v1702
    %v2370 = vunpack.c.l.b16 %v1703
    %v2371 = vunpack.c.l.b16 %v1704
    %v2372 = vunpack.c.l.b16 %v1705
    %v2373 = vunpack.c.l.b16 %v1706
    %v2374 = vunpack.c.l.b16 %v1707
    %v2375 = vunpack.c.l.b16 %v1708
    %v2376 = vpack.c.b16 %v2345, %v2344
    %v2377 = vpack.c.b16 %v2347, %v2346
    %v2378 = vpack.c.b16 %v2349, %v2348
    %v2379 = vpack.c.b16 %v2351, %v2350
    %v2380 = vpack.c.b16 %v2353, %v2352
    %v2381 = vpack.c.b16 %v2355, %v2354
    %v2382 = vpack.c.b16 %v2357, %v2356
    %v2383 = vpack.c.b16 %v2359, %v2358
    %v2384 = vpack.c.b16 %v2361, %v2360
    %v2385 = vpack.c.b16 %v2363, %v2362
    %v2386 = vpack.c.b16 %v2365, %v2364
    %v2387 = vpack.c.b16 %v2367, %v2366
    %v2388 = vpack.c.b16 %v2369, %v2368
    %v2389 = vpack.c.b16 %v2371, %v2370
    %v2390 = vpack.c.b16 %v2373, %v2372
    %v2391 = vpack.c.b16 %v2375, %v2374
    %2408 = vmatpush.bf16.msra.mxu0 %v2383
    %2409 = vmatpush.bf16.msra.mxu0 %v2382
    %2410 = vmatpush.bf16.msra.mxu0 %v2381
    %2411 = vmatpush.bf16.msra.mxu0 %v2380
    %2412 = vmatpush.bf16.msra.mxu0 %v2379
    %2413 = vmatpush.bf16.msra.mxu0 %v2378
    %2414 = vmatpush.bf16.msra.mxu0 %v2377
    %2415 = vmatpush.bf16.msra.mxu0 %v2376
    %2416 = vmatmul.bf16.gmra.mxu0 %v2307
    %v2417 = vpop.f32.mrf.mxu0
    %v2418 = vadd.f32 %v2310, %v2417
    %v2419 = vpop.f32.mrf.mxu0
    %v2420 = vadd.f32 %v2310, %v2419
    %2421 = vdwg.mxu0
    %2422 = vmatpush.bf16.msra.mxu0 %v2391
    %2423 = vmatpush.bf16.msra.mxu0 %v2390
    %2424 = vmatpush.bf16.msra.mxu0 %v2389
    %2425 = vmatpush.bf16.msra.mxu0 %v2388
    %2426 = vmatpush.bf16.msra.mxu0 %v2387
    %2427 = vmatpush.bf16.msra.mxu0 %v2386
    %2428 = vmatpush.bf16.msra.mxu0 %v2385
    %2429 = vmatpush.bf16.msra.mxu0 %v2384
    %2430 = vmatmul.bf16.gmra.mxu0 %v2308
    %v2431 = vpop.f32.mrf.mxu0
    %v2432 = vadd.f32 %v2418, %v2431
    %v2433 = vpop.f32.mrf.mxu0
    %v2434 = vadd.f32 %v2420, %v2433
    %2435 = vdwg.mxu0
    %v2436 = vadd.f32 %v1623, %v2432
    %v2437 = vadd.f32 %v1624, %v2434
    %2438 = vadd.xlane.f32.xlu0 %v2436
    %v2439 = vpop.xlane.xlu0 %2438
    %2440 = vadd.xlane.f32.xlu0 %v2437
    %v2441 = vpop.xlane.xlu0 %2440
    %v2442 = vmul.f32 %v2439, %v384
    %v2443 = vmul.f32 %v2441, %v384
    %v2444 = vsub.f32 %v2436, %v2442
    %v2445 = vsub.f32 %v2437, %v2443
    %v2446 = vmul.f32 %v2444, %v2444
    %v2447 = vmul.f32 %v2445, %v2445
    %2448 = vadd.xlane.f32.xlu0 %v2446
    %v2449 = vpop.xlane.xlu0 %2448
    %2450 = vadd.xlane.f32.xlu0 %v2447
    %v2451 = vpop.xlane.xlu0 %2450
    %v2452 = vmul.f32 %v2449, %v384
    %v2453 = vmul.f32 %v2451, %v384
    %v2454 = vadd.f32 %v2452, 1e-12
    %v2455 = vadd.f32 %v2453, 1e-12
    %v2456 = vrsqrt.pop %v2454
    %v2457 = vmul.f32 %v2456, %v2454
    %v2458 = vmul.f32 %v2457, %v2456
    %v2459 = vmul.f32 0.5, %v2458
    %v2460 = vsub.f32 1.5, %v2459
    %v2461 = vmul.f32 %v2456, %v2460
    %vm2462 = vweird.f32 %v2454
    %vm2463 = vweird.f32 %v2456
    %vm2464 = vmor %vm2462, %vm2463
    %v2465 = vsel %vm2464, %v2456, %v2461
    %v2466 = vrsqrt.pop %v2455
    %v2467 = vmul.f32 %v2466, %v2455
    %v2468 = vmul.f32 %v2467, %v2466
    %v2469 = vmul.f32 0.5, %v2468
    %v2470 = vsub.f32 1.5, %v2469
    %v2471 = vmul.f32 %v2466, %v2470
    %vm2472 = vweird.f32 %v2455
    %vm2473 = vweird.f32 %v2466
    %vm2474 = vmor %vm2472, %vm2473
    %v2475 = vsel %vm2474, %v2466, %v2471
    %v2476 = vmul.f32 %v2444, %v2465
    %v2477 = vmul.f32 %v2445, %v2475
    %v2479 = vperm.slane %v1712, 0
    %v2481 = vmul.f32 %v2476, %v2479
    %v2482 = vmul.f32 %v2477, %v2479
    %v2484 = vperm.slane %v1714, 0
    %v2486 = vadd.f32 %v2481, %v2484
    %v2487 = vadd.f32 %v2482, %v2484
    %v2488 = vpack.c.bf16 %v2487, %v2486
    %v2490 = vperm.slane %v1733, 0
    %v2491 = vperm.slane %v1733, 1
    %v2510 = vunpack.c.l.b16 %v1716
    %v2511 = vunpack.c.h.b16 %v1716
    %v2512 = vunpack.c.l.b16 %v1717
    %v2513 = vunpack.c.h.b16 %v1717
    %v2514 = vunpack.c.l.b16 %v1718
    %v2515 = vunpack.c.h.b16 %v1718
    %v2516 = vunpack.c.l.b16 %v1719
    %v2517 = vunpack.c.h.b16 %v1719
    %v2518 = vunpack.c.l.b16 %v1720
    %v2519 = vunpack.c.h.b16 %v1720
    %v2520 = vunpack.c.l.b16 %v1721
    %v2521 = vunpack.c.h.b16 %v1721
    %v2522 = vunpack.c.l.b16 %v1722
    %v2523 = vunpack.c.h.b16 %v1722
    %v2524 = vunpack.c.l.b16 %v1723
    %v2525 = vunpack.c.h.b16 %v1723
    %v2526 = vunpack.c.l.b16 %v1724
    %v2527 = vunpack.c.h.b16 %v1724
    %v2528 = vunpack.c.l.b16 %v1725
    %v2529 = vunpack.c.h.b16 %v1725
    %v2530 = vunpack.c.l.b16 %v1726
    %v2531 = vunpack.c.h.b16 %v1726
    %v2532 = vunpack.c.l.b16 %v1727
    %v2533 = vunpack.c.h.b16 %v1727
    %v2534 = vunpack.c.l.b16 %v1728
    %v2535 = vunpack.c.h.b16 %v1728
    %v2536 = vunpack.c.l.b16 %v1729
    %v2537 = vunpack.c.h.b16 %v1729
    %v2538 = vunpack.c.l.b16 %v1730
    %v2539 = vunpack.c.h.b16 %v1730
    %v2540 = vunpack.c.l.b16 %v1731
    %v2541 = vunpack.c.h.b16 %v1731
    %v2542 = vpack.c.b16 %v2512, %v2510
    %v2543 = vpack.c.b16 %v2513, %v2511
    %v2544 = vpack.c.b16 %v2516, %v2514
    %v2545 = vpack.c.b16 %v2517, %v2515
    %v2546 = vpack.c.b16 %v2520, %v2518
    %v2547 = vpack.c.b16 %v2521, %v2519
    %v2548 = vpack.c.b16 %v2524, %v2522
    %v2549 = vpack.c.b16 %v2525, %v2523
    %v2550 = vpack.c.b16 %v2528, %v2526
    %v2551 = vpack.c.b16 %v2529, %v2527
    %v2552 = vpack.c.b16 %v2532, %v2530
    %v2553 = vpack.c.b16 %v2533, %v2531
    %v2554 = vpack.c.b16 %v2536, %v2534
    %v2555 = vpack.c.b16 %v2537, %v2535
    %v2556 = vpack.c.b16 %v2540, %v2538
    %v2557 = vpack.c.b16 %v2541, %v2539
    %2574 = vmatpush.bf16.msra.mxu0 %v2556
    %2575 = vmatpush.bf16.msra.mxu0 %v2554
    %2576 = vmatpush.bf16.msra.mxu0 %v2552
    %2577 = vmatpush.bf16.msra.mxu0 %v2550
    %2578 = vmatpush.bf16.msra.mxu0 %v2548
    %2579 = vmatpush.bf16.msra.mxu0 %v2546
    %2580 = vmatpush.bf16.msra.mxu0 %v2544
    %2581 = vmatpush.bf16.msra.mxu0 %v2542
    %2582 = vmatmul.bf16.gmra.mxu0 %v2488
    %v2583 = vpop.f32.mrf.mxu0
    %v2584 = vadd.f32 %v2490, %v2583
    %v2585 = vpop.f32.mrf.mxu0
    %v2586 = vadd.f32 %v2490, %v2585
    %2587 = vdwg.mxu0
    %2588 = vmatpush.bf16.msra.mxu0 %v2557
    %2589 = vmatpush.bf16.msra.mxu0 %v2555
    %2590 = vmatpush.bf16.msra.mxu0 %v2553
    %2591 = vmatpush.bf16.msra.mxu0 %v2551
    %2592 = vmatpush.bf16.msra.mxu0 %v2549
    %2593 = vmatpush.bf16.msra.mxu0 %v2547
    %2594 = vmatpush.bf16.msra.mxu0 %v2545
    %2595 = vmatpush.bf16.msra.mxu0 %v2543
    %2596 = vmatmul.bf16.gmra.mxu0 %v2488
    %v2597 = vpop.f32.mrf.mxu0
    %v2598 = vadd.f32 %v2491, %v2597
    %v2599 = vpop.f32.mrf.mxu0
    %v2600 = vadd.f32 %v2491, %v2599
    %2601 = vdwg.mxu0
    %v2602 = vmul.f32 %v2584, 0.5
    %v2603 = vmul.f32 %v2598, 0.5
    %v2604 = vmul.f32 %v2586, 0.5
    %v2605 = vmul.f32 %v2600, 0.5
    %v2606 = vmul.f32 %v2584, 0.044715
    %v2607 = vmul.f32 %v2598, 0.044715
    %v2608 = vmul.f32 %v2586, 0.044715
    %v2609 = vmul.f32 %v2600, 0.044715
    %v2610 = vmul.f32 %v2606, %v2584
    %v2611 = vmul.f32 %v2607, %v2598
    %v2612 = vmul.f32 %v2608, %v2586
    %v2613 = vmul.f32 %v2609, %v2600
    %v2614 = vmul.f32 %v2610, %v2584
    %v2615 = vmul.f32 %v2611, %v2598
    %v2616 = vmul.f32 %v2612, %v2586
    %v2617 = vmul.f32 %v2613, %v2600
    %v2618 = vadd.f32 %v2584, %v2614
    %v2619 = vadd.f32 %v2598, %v2615
    %v2620 = vadd.f32 %v2586, %v2616
    %v2621 = vadd.f32 %v2600, %v2617
    %v2622 = vmul.f32 %v2618, 0.7978846
    %v2623 = vmul.f32 %v2619, 0.7978846
    %v2624 = vmul.f32 %v2620, 0.7978846
    %v2625 = vmul.f32 %v2621, 0.7978846
    %v2626 = vtanh.pop %v2622
    %v2627 = vtanh.pop %v2623
    %v2628 = vtanh.pop %v2624
    %v2629 = vtanh.pop %v2625
    %v2630 = vadd.f32 %v2626, 1.0
    %v2631 = vadd.f32 %v2627, 1.0
    %v2632 = vadd.f32 %v2628, 1.0
    %v2633 = vadd.f32 %v2629, 1.0
    %v2634 = vmul.f32 %v2602, %v2630
    %v2635 = vmul.f32 %v2603, %v2631
    %v2636 = vmul.f32 %v2604, %v2632
    %v2637 = vmul.f32 %v2605, %v2633
    %v2638 = vpack.c.bf16 %v2636, %v2634
    %v2639 = vpack.c.bf16 %v2637, %v2635
    %v2641 = vperm.slane %v1768, 0
    %v2675 = vunpack.c.l.b16 %v1735
    %v2676 = vunpack.c.l.b16 %v1736
    %v2677 = vunpack.c.l.b16 %v1737
    %v2678 = vunpack.c.l.b16 %v1738
    %v2679 = vunpack.c.l.b16 %v1739
    %v2680 = vunpack.c.l.b16 %v1740
    %v2681 = vunpack.c.l.b16 %v1741
    %v2682 = vunpack.c.l.b16 %v1742
    %v2683 = vunpack.c.l.b16 %v1743
    %v2684 = vunpack.c.l.b16 %v1744
    %v2685 = vunpack.c.l.b16 %v1745
    %v2686 = vunpack.c.l.b16 %v1746
    %v2687 = vunpack.c.l.b16 %v1747
    %v2688 = vunpack.c.l.b16 %v1748
    %v2689 = vunpack.c.l.b16 %v1749
    %v2690 = vunpack.c.l.b16 %v1750
    %v2691 = vunpack.c.l.b16 %v1751
    %v2692 = vunpack.c.l.b16 %v1752
    %v2693 = vunpack.c.l.b16 %v1753
    %v2694 = vunpack.c.l.b16 %v1754
    %v2695 = vunpack.c.l.b16 %v1755
    %v2696 = vunpack.c.l.b16 %v1756
    %v2697 = vunpack.c.l.b16 %v1757
    %v2698 = vunpack.c.l.b16 %v1758
    %v2699 = vunpack.c.l.b16 %v1759
    %v2700 = vunpack.c.l.b16 %v1760
    %v2701 = vunpack.c.l.b16 %v1761
    %v2702 = vunpack.c.l.b16 %v1762
    %v2703 = vunpack.c.l.b16 %v1763
    %v2704 = vunpack.c.l.b16 %v1764
    %v2705 = vunpack.c.l.b16 %v1765
    %v2706 = vunpack.c.l.b16 %v1766
    %v2707 = vpack.c.b16 %v2676, %v2675
    %v2708 = vpack.c.b16 %v2678, %v2677
    %v2709 = vpack.c.b16 %v2680, %v2679
    %v2710 = vpack.c.b16 %v2682, %v2681
    %v2711 = vpack.c.b16 %v2684, %v2683
    %v2712 = vpack.c.b16 %v2686, %v2685
    %v2713 = vpack.c.b16 %v2688, %v2687
    %v2714 = vpack.c.b16 %v2690, %v2689
    %v2715 = vpack.c.b16 %v2692, %v2691
    %v2716 = vpack.c.b16 %v2694, %v2693
    %v2717 = vpack.c.b16 %v2696, %v2695
    %v2718 = vpack.c.b16 %v2698, %v2697
    %v2719 = vpack.c.b16 %v2700, %v2699
    %v2720 = vpack.c.b16 %v2702, %v2701
    %v2721 = vpack.c.b16 %v2704, %v2703
    %v2722 = vpack.c.b16 %v2706, %v2705
    %2739 = vmatpush.bf16.msra.mxu0 %v2714
    %2740 = vmatpush.bf16.msra.mxu0 %v2713
    %2741 = vmatpush.bf16.msra.mxu0 %v2712
    %2742 = vmatpush.bf16.msra.mxu0 %v2711
    %2743 = vmatpush.bf16.msra.mxu0 %v2710
    %2744 = vmatpush.bf16.msra.mxu0 %v2709
    %2745 = vmatpush.bf16.msra.mxu0 %v2708
    %2746 = vmatpush.bf16.msra.mxu0 %v2707
    %2747 = vmatmul.bf16.gmra.mxu0 %v2638
    %v2748 = vpop.f32.mrf.mxu0
    %v2749 = vadd.f32 %v2641, %v2748
    %v2750 = vpop.f32.mrf.mxu0
    %v2751 = vadd.f32 %v2641, %v2750
    %2752 = vdwg.mxu0
    %2753 = vmatpush.bf16.msra.mxu0 %v2722
    %2754 = vmatpush.bf16.msra.mxu0 %v2721
    %2755 = vmatpush.bf16.msra.mxu0 %v2720
    %2756 = vmatpush.bf16.msra.mxu0 %v2719
    %2757 = vmatpush.bf16.msra.mxu0 %v2718
    %2758 = vmatpush.bf16.msra.mxu0 %v2717
    %2759 = vmatpush.bf16.msra.mxu0 %v2716
    %2760 = vmatpush.bf16.msra.mxu0 %v2715
    %2761 = vmatmul.bf16.gmra.mxu0 %v2639
    %v2762 = vpop.f32.mrf.mxu0
    %v2763 = vadd.f32 %v2749, %v2762
    %v2764 = vpop.f32.mrf.mxu0
    %v2765 = vadd.f32 %v2751, %v2764
    %2766 = vdwg.mxu0
    %v2767 = vadd.f32 %v2486, %v2763
    %v2768 = vadd.f32 %v2487, %v2765
    %2769 = vadd.xlane.f32.xlu0 %v2767
    %v2770 = vpop.xlane.xlu0 %2769
    %2771 = vadd.xlane.f32.xlu0 %v2768
    %v2772 = vpop.xlane.xlu0 %2771
    %v2773 = vmul.f32 %v2770, %v384
    %v2774 = vmul.f32 %v2772, %v384
    %v2775 = vsub.f32 %v2767, %v2773
    %v2776 = vsub.f32 %v2768, %v2774
    %v2777 = vmul.f32 %v2775, %v2775
    %v2778 = vmul.f32 %v2776, %v2776
    %2779 = vadd.xlane.f32.xlu0 %v2777
    %v2780 = vpop.xlane.xlu0 %2779
    %2781 = vadd.xlane.f32.xlu0 %v2778
    %v2782 = vpop.xlane.xlu0 %2781
    %v2783 = vmul.f32 %v2780, %v384
    %v2784 = vmul.f32 %v2782, %v384
    %v2785 = vadd.f32 %v2783, 1e-12
    %v2786 = vadd.f32 %v2784, 1e-12
    %v2787 = vrsqrt.pop %v2785
    %v2788 = vmul.f32 %v2787, %v2785
    %v2789 = vmul.f32 %v2788, %v2787
    %v2790 = vmul.f32 0.5, %v2789
    %v2791 = vsub.f32 1.5, %v2790
    %v2792 = vmul.f32 %v2787, %v2791
    %vm2793 = vweird.f32 %v2785
    %vm2794 = vweird.f32 %v2787
    %vm2795 = vmor %vm2793, %vm2794
    %v2796 = vsel %vm2795, %v2787, %v2792
    %v2797 = vrsqrt.pop %v2786
    %v2798 = vmul.f32 %v2797, %v2786
    %v2799 = vmul.f32 %v2798, %v2797
    %v2800 = vmul.f32 0.5, %v2799
    %v2801 = vsub.f32 1.5, %v2800
    %v2802 = vmul.f32 %v2797, %v2801
    %vm2803 = vweird.f32 %v2786
    %vm2804 = vweird.f32 %v2797
    %vm2805 = vmor %vm2803, %vm2804
    %v2806 = vsel %vm2805, %v2797, %v2802
    %v2807 = vmul.f32 %v2775, %v2796
    %v2808 = vmul.f32 %v2776, %v2806
    %v2810 = vperm.slane %v1770, 0
    %v2812 = vmul.f32 %v2807, %v2810
    %v2813 = vmul.f32 %v2808, %v2810
    %v2815 = vperm.slane %v1772, 0
    %v2817 = vadd.f32 %v2812, %v2815
    %v2818 = vadd.f32 %v2813, %v2815
    %v2819 = vpack.c.bf16 %v2817, %v2817
    %v2820 = vpack.c.bf16 %v2818, %v2818
    %v2821 = vld [vmem:[#allocation19] sm:$0xf]
    %v2822 = vld [vmem:[#allocation19 + $0x4] sm:$0xf]
    %v2823 = vld [vmem:[#allocation19 + $0x8] sm:$0xf]
    %v2824 = vld [vmem:[#allocation19 + $0xc] sm:$0xf]
    %v2825 = vld [vmem:[#allocation19 + $0x10] sm:$0xf]
    %v2826 = vld [vmem:[#allocation19 + $0x14] sm:$0xf]
    %v2827 = vld [vmem:[#allocation19 + $0x18] sm:$0xf]
    %v2828 = vld [vmem:[#allocation19 + $0x1c] sm:$0xf]
    %v2829 = vld [vmem:[#allocation19 + $0x20] sm:$0xf]
    %v2830 = vld [vmem:[#allocation19 + $0x24] sm:$0xf]
    %v2831 = vld [vmem:[#allocation19 + $0x28] sm:$0xf]
    %v2832 = vld [vmem:[#allocation19 + $0x2c] sm:$0xf]
    %v2833 = vld [vmem:[#allocation19 + $0x30] sm:$0xf]
    %v2834 = vld [vmem:[#allocation19 + $0x34] sm:$0xf]
    %v2835 = vld [vmem:[#allocation19 + $0x38] sm:$0xf]
    %v2836 = vld [vmem:[#allocation19 + $0x3c] sm:$0xf]
    %v2837 = vld [vmem:[#allocation20] sm:$0x1]
    %v2839 = vperm.slane %v2837, 0
    %v2843 = vunpack.c.l.b16 %v2819
    %v2844 = vunpack.c.l.b16 %v2820
    %v2845 = vrot.slane %v2844, 7
    %vm2846 = vcmask 1041409
    %v2847 = vsel %vm2846, %v2845, %v2843
    %v2848 = vpack.c.b16 %v2847, %v2847
    %v2866 = vunpack.c.l.b16 %v2821
    %v2867 = vunpack.c.l.b16 %v2822
    %v2868 = vunpack.c.l.b16 %v2823
    %v2869 = vunpack.c.l.b16 %v2824
    %v2870 = vunpack.c.l.b16 %v2825
    %v2871 = vunpack.c.l.b16 %v2826
    %v2872 = vunpack.c.l.b16 %v2827
    %v2873 = vunpack.c.l.b16 %v2828
    %v2874 = vunpack.c.l.b16 %v2829
    %v2875 = vunpack.c.l.b16 %v2830
    %v2876 = vunpack.c.l.b16 %v2831
    %v2877 = vunpack.c.l.b16 %v2832
    %v2878 = vunpack.c.l.b16 %v2833
    %v2879 = vunpack.c.l.b16 %v2834
    %v2880 = vunpack.c.l.b16 %v2835
    %v2881 = vunpack.c.l.b16 %v2836
    %v2882 = vpack.c.b16 %v2867, %v2866
    %v2883 = vpack.c.b16 %v2869, %v2868
    %v2884 = vpack.c.b16 %v2871, %v2870
    %v2885 = vpack.c.b16 %v2873, %v2872
    %v2886 = vpack.c.b16 %v2875, %v2874
    %v2887 = vpack.c.b16 %v2877, %v2876
    %v2888 = vpack.c.b16 %v2879, %v2878
    %v2889 = vpack.c.b16 %v2881, %v2880
    %2898 = vmatpush.bf16.msra.mxu0 %v2889
    %2899 = vmatpush.bf16.msra.mxu0 %v2888
    %2900 = vmatpush.bf16.msra.mxu0 %v2887
    %2901 = vmatpush.bf16.msra.mxu0 %v2886
    %2902 = vmatpush.bf16.msra.mxu0 %v2885
    %2903 = vmatpush.bf16.msra.mxu0 %v2884
    %2904 = vmatpush.bf16.msra.mxu0 %v2883
    %2905 = vmatpush.bf16.msra.mxu0 %v2882
    %2906 = vmatmul.bf16.gmra.mxu0 %v2848
    %v2907 = vpop.f32.mrf.mxu0
    %v2908 = vadd.f32 %v2839, %v2907
    %v2909 = vpop.f32.mrf.mxu0
    %2910 = vdwg.mxu0
    %vm2911 = vcmp.gt.f32.partialorder %v2908, 0.0
    %v2912 = vmul.f32 %v2908, 0.2
    %v2913 = vsel %vm2911, %v2908, %v2912
    %v2914 = vpack.c.bf16 %v2913, %v2913
    %v2915 = vld [vmem:[#allocation22] sm:$0xf]
    %v2916 = vld [vmem:[#allocation22 + $0x4] sm:$0xf]
    %v2917 = vld [vmem:[#allocation22 + $0x8] sm:$0xf]
    %v2918 = vld [vmem:[#allocation22 + $0xc] sm:$0xf]
    %v2919 = vld [vmem:[#allocation22 + $0x10] sm:$0xf]
    %v2920 = vld [vmem:[#allocation22 + $0x14] sm:$0xf]
    %v2921 = vld [vmem:[#allocation22 + $0x18] sm:$0xf]
    %v2922 = vld [vmem:[#allocation22 + $0x1c] sm:$0xf]
    %v2923 = vld [vmem:[#allocation22 + $0x20] sm:$0xf]
    %v2924 = vld [vmem:[#allocation22 + $0x24] sm:$0xf]
    %v2925 = vld [vmem:[#allocation22 + $0x28] sm:$0xf]
    %v2926 = vld [vmem:[#allocation22 + $0x2c] sm:$0xf]
    %v2927 = vld [vmem:[#allocation22 + $0x30] sm:$0xf]
    %v2928 = vld [vmem:[#allocation22 + $0x34] sm:$0xf]
    %v2929 = vld [vmem:[#allocation22 + $0x38] sm:$0xf]
    %v2930 = vld [vmem:[#allocation22 + $0x3c] sm:$0xf]
    %v2931 = vld [vmem:[#allocation23] sm:$0x1]
    %v2933 = vperm.slane %v2931, 0
    %v2951 = vunpack.c.l.b16 %v2915
    %v2952 = vunpack.c.l.b16 %v2916
    %v2953 = vunpack.c.l.b16 %v2917
    %v2954 = vunpack.c.l.b16 %v2918
    %v2955 = vunpack.c.l.b16 %v2919
    %v2956 = vunpack.c.l.b16 %v2920
    %v2957 = vunpack.c.l.b16 %v2921
    %v2958 = vunpack.c.l.b16 %v2922
    %v2959 = vunpack.c.l.b16 %v2923
    %v2960 = vunpack.c.l.b16 %v2924
    %v2961 = vunpack.c.l.b16 %v2925
    %v2962 = vunpack.c.l.b16 %v2926
    %v2963 = vunpack.c.l.b16 %v2927
    %v2964 = vunpack.c.l.b16 %v2928
    %v2965 = vunpack.c.l.b16 %v2929
    %v2966 = vunpack.c.l.b16 %v2930
    %v2967 = vpack.c.b16 %v2952, %v2951
    %v2968 = vpack.c.b16 %v2954, %v2953
    %v2969 = vpack.c.b16 %v2956, %v2955
    %v2970 = vpack.c.b16 %v2958, %v2957
    %v2971 = vpack.c.b16 %v2960, %v2959
    %v2972 = vpack.c.b16 %v2962, %v2961
    %v2973 = vpack.c.b16 %v2964, %v2963
    %v2974 = vpack.c.b16 %v2966, %v2965
    %2983 = vmatpush.bf16.msra.mxu0 %v2974
    %2984 = vmatpush.bf16.msra.mxu0 %v2973
    %2985 = vmatpush.bf16.msra.mxu0 %v2972
    %2986 = vmatpush.bf16.msra.mxu0 %v2971
    %2987 = vmatpush.bf16.msra.mxu0 %v2970
    %2988 = vmatpush.bf16.msra.mxu0 %v2969
    %2989 = vmatpush.bf16.msra.mxu0 %v2968
    %2990 = vmatpush.bf16.msra.mxu0 %v2967
    %2991 = vmatmul.bf16.gmra.mxu0 %v2914
    %v2992 = vpop.f32.mrf.mxu0
    %v2993 = vadd.f32 %v2933, %v2992
    %v2994 = vpop.f32.mrf.mxu0
    %2995 = vdwg.mxu0
    %vm2996 = vcmp.gt.f32.partialorder %v2993, 0.0
    %v2997 = vmul.f32 %v2993, 0.2
    %v2998 = vsel %vm2996, %v2993, %v2997
    %v2999 = vpack.c.bf16 %v2998, %v2998
    %v3000 = vld [vmem:[#allocation25] sm:$0xf]
    %v3001 = vld [vmem:[#allocation25 + $0x4] sm:$0xf]
    %v3002 = vld [vmem:[#allocation25 + $0x8] sm:$0xf]
    %v3003 = vld [vmem:[#allocation25 + $0xc] sm:$0xf]
    %v3004 = vld [vmem:[#allocation25 + $0x10] sm:$0xf]
    %v3005 = vld [vmem:[#allocation25 + $0x14] sm:$0xf]
    %v3006 = vld [vmem:[#allocation25 + $0x18] sm:$0xf]
    %v3007 = vld [vmem:[#allocation25 + $0x1c] sm:$0xf]
    %v3008 = vld [vmem:[#allocation25 + $0x20] sm:$0xf]
    %v3009 = vld [vmem:[#allocation25 + $0x24] sm:$0xf]
    %v3010 = vld [vmem:[#allocation25 + $0x28] sm:$0xf]
    %v3011 = vld [vmem:[#allocation25 + $0x2c] sm:$0xf]
    %v3012 = vld [vmem:[#allocation25 + $0x30] sm:$0xf]
    %v3013 = vld [vmem:[#allocation25 + $0x34] sm:$0xf]
    %v3014 = vld [vmem:[#allocation25 + $0x38] sm:$0xf]
    %v3015 = vld [vmem:[#allocation25 + $0x3c] sm:$0xf]
    %v3016 = vld [vmem:[#allocation26] sm:$0x1]
    %v3018 = vperm.slane %v3016, 0
    %v3036 = vunpack.c.l.b16 %v3000
    %v3037 = vunpack.c.l.b16 %v3001
    %v3038 = vunpack.c.l.b16 %v3002
    %v3039 = vunpack.c.l.b16 %v3003
    %v3040 = vunpack.c.l.b16 %v3004
    %v3041 = vunpack.c.l.b16 %v3005
    %v3042 = vunpack.c.l.b16 %v3006
    %v3043 = vunpack.c.l.b16 %v3007
    %v3044 = vunpack.c.l.b16 %v3008
    %v3045 = vunpack.c.l.b16 %v3009
    %v3046 = vunpack.c.l.b16 %v3010
    %v3047 = vunpack.c.l.b16 %v3011
    %v3048 = vunpack.c.l.b16 %v3012
    %v3049 = vunpack.c.l.b16 %v3013
    %v3050 = vunpack.c.l.b16 %v3014
    %v3051 = vunpack.c.l.b16 %v3015
    %v3052 = vpack.c.b16 %v3037, %v3036
    %v3053 = vpack.c.b16 %v3039, %v3038
    %v3054 = vpack.c.b16 %v3041, %v3040
    %v3055 = vpack.c.b16 %v3043, %v3042
    %v3056 = vpack.c.b16 %v3045, %v3044
    %v3057 = vpack.c.b16 %v3047, %v3046
    %v3058 = vpack.c.b16 %v3049, %v3048
    %v3059 = vpack.c.b16 %v3051, %v3050
    %3068 = vmatpush.bf16.msra.mxu0 %v3059
    %3069 = vmatpush.bf16.msra.mxu0 %v3058
    %3070 = vmatpush.bf16.msra.mxu0 %v3057
    %3071 = vmatpush.bf16.msra.mxu0 %v3056
    %3072 = vmatpush.bf16.msra.mxu0 %v3055
    %3073 = vmatpush.bf16.msra.mxu0 %v3054
    %3074 = vmatpush.bf16.msra.mxu0 %v3053
    %3075 = vmatpush.bf16.msra.mxu0 %v3052
    %3076 = vmatmul.bf16.gmra.mxu0 %v2999
    %v3077 = vpop.f32.mrf.mxu0
    %v3078 = vadd.f32 %v3018, %v3077
    %v3079 = vpop.f32.mrf.mxu0
    %3080 = vdwg.mxu0
    %v3081 = vxor.u32 %v3078, 2147483648
    %v3082 = vmul.f32 %v3081, 1.442695
    %v3083 = vpow.pop %v3082
    %v3084 = vadd.f32 %v3083, 1.0
    %v3085 = vrcp.pop %v3084
    %v3086 = vmul.f32 %v3084, %v3085
    %v3087 = vsub.f32 1.0, %v3086
    %v3088 = vmul.f32 %v3085, %v3087
    %v3089 = vadd.f32 %v3085, %v3088
    %vm3090 = vweird.f32 %v3084
    %vm3091 = vweird.f32 %v3085
    %vm3092 = vmor %vm3090, %vm3091
    %v3093 = vsel %vm3092, %v3085, %v3089
    %v3094 = vand.u32 2147483647, %v3084
    %vm3095 = vcmp.eq.f32.partialorder %v3094, 8.507059e+37
    %v3096 = vand.u32 %v3084, 2147483648
    %v3097 = vor.u32 1.1754944e-38, %v3096
    %v3098 = vsel %vm3095, %v3097, %v3093
    %v3099 = vmul.f32 1.0, %v3098
    %3100 = vst [vmem:[#allocation28] sm:$0x3] %v3099
    // Predicated region
    $region162: #{bert_finetuner_forward.1} parent=1 // pred_check
      _
    $region163: #{bert_finetuner_forward.1} parent=1 // pred_check_branch
      %3102 = sbr.rel (0) target = $region165
    $region164: #{bert_finetuner_forward.1} parent=1 // pred_region
      %3104 = vsyncadd [#allocation4], 0
      %s3106 = sshll.u32 [#allocation28], 4
      %s3107 = int_to_ptr.vmem [resolvable:$true] %s3106
      %s3108 = sshll.u32 %s24, 4
      %s3109 = int_to_ptr.hbm [resolvable:$true] %s3108
      %3111 = dma.vmem_to_hbm [thread:$0]  %s3107, 32, %s3109, [#allocation4]
    $region165: #{bert_finetuner_forward.1} parent=1 // pred_fallthru
      _
    // Predicated region
    $region166: #{bert_finetuner_forward.1} parent=1 // pred_check
      _
    $region167: #{bert_finetuner_forward.1} parent=1 // pred_check_branch
      %3113 = sbr.rel (0) target = $region169
    $region168: #{bert_finetuner_forward.1} parent=1 // pred_region
      %3115 = dma.done [#allocation4], 32
    $region169: #{bert_finetuner_forward.1} parent=1 // pred_fallthru
      _
    %3116 = vsyncpa [#allocation3], 1
    %3117 = vsyncpa [#allocation6], 1
    %3118 = vsyncpa [#allocation9], 1
    %3119 = vsyncpa [#allocation12], 1
    %3120 = vsyncpa [#allocation15], 1
    %3121 = vsyncpa [#allocation18], 1
    %3122 = vsyncpa [#allocation21], 1
    %3123 = vsyncpa [#allocation24], 1
    %3124 = vsyncpa [#allocation27], 1
    %3125 = vsyncpa [#allocation4], 1

</llo_original>
